<compile_context>
chip_gen: v7x
topology: tpu7x:2x2x1
jax: 0.10.0
libtpu: 0.0.40
codegen_flags: <defaults>
</compile_context>

<pallas_src>
import functools

import jax
import jax.numpy as jnp
from jax.experimental import pallas as pl
from jax.experimental.pallas import tpu as pltpu


# ----------------------------------------------------------------------------
# Kernel 1: direct conv (tap-wise matmul over NHWC input) + per-image BN partials
# ----------------------------------------------------------------------------
def _conv_stats_kernel(x_ref, w_ref, y_ref, mu_ref, m2_ref, *,
                       k, stride, ho, wo, cin, cout):
    # x_ref : [1, Hp, Wp, Cin]   padded NHWC image for this batch element
    # w_ref : [K*K, Cin, Cout]   per-tap weight matrices (resident)
    # y_ref : [1, Cout, Ho*Wo]   lane-dense conv output
    # mu_ref/m2_ref : [1, 1, Cout]  per-image mean / centered sum-of-squares
    rows = ho * wo
    acc = jnp.zeros((rows, cout), dtype=jnp.float32)
    for t in range(k * k):                      # static unroll over the taps
        ki, kj = t // k, t % k
        if stride == 1:
            x_tap = x_ref[0, ki:ki + ho, kj:kj + wo, :]
        else:
            # TODO(synk): stride>1 path (strided pl.ds loads) is untested on HW.
            x_tap = x_ref[0, pl.ds(ki, ho, stride=stride),
                          pl.ds(kj, wo, stride=stride), :]
        x_tap = x_tap.reshape(rows, cin)
        acc = acc + jnp.dot(x_tap, w_ref[t],
                            preferred_element_type=jnp.float32)

    # Lane-dense store: [Cout, Ho*Wo] (makes the final NCHW output a free reshape).
    y_ref[...] = jnp.transpose(acc, (1, 0)).reshape(1, cout, rows)

    # Per-image BN partials: chunk mean + centered sum of squares (stable).
    mu = acc.sum(axis=0, keepdims=True) * (1.0 / rows)       # [1, Cout]
    d = acc - mu
    m2 = (d * d).sum(axis=0, keepdims=True)                  # [1, Cout]
    mu_ref[...] = mu.reshape(1, 1, cout)
    m2_ref[...] = m2.reshape(1, 1, cout)


# ----------------------------------------------------------------------------
# Kernel 2: fused BatchNorm (precomputed scale/shift) + ReLU, elementwise,
#           operating on the lane-dense [N, Cout, Ho*Wo] layout, in place.
# ----------------------------------------------------------------------------
def _bn_relu_kernel(y_ref, scale_ref, shift_ref, o_ref):
    o_ref[...] = jnp.maximum(y_ref[...] * scale_ref[...] + shift_ref[...], 0.0)


def conv_module_forward(x, weight, bias, gamma, beta, *, stride=1, eps=1e-5):
    """Forward pass of ConvModule.

    x:      [N, Cin, H, W]      (NCHW, like PyTorch)
    weight: [Cout, Cin, K, K]   (OIHW, like PyTorch)
    bias:   [Cout]              (accepted for interface parity; cancels under BN)
    gamma, beta: [Cout]         BatchNorm affine params
    Returns [N, Cout, Ho, Wo]   (NCHW)
    """
    del bias  # conv bias cancels exactly under train-mode BatchNorm.

    n, cin, h, w = x.shape
    cout, _, k, _ = weight.shape
    p = k // 2
    s = stride
    ho = (h + 2 * p - k) // s + 1
    wo = (w + 2 * p - k) // s + 1
    rows = ho * wo
    hp, wp = h + 2 * p, w + 2 * p

    # Single cheap layout pass: NCHW -> NHWC + spatial zero-padding (fused by XLA).
    x_pad = jnp.pad(jnp.transpose(x, (0, 2, 3, 1)).astype(jnp.float32),
                    ((0, 0), (p, p), (p, p), (0, 0)))
    # Per-tap weight matrices: w_taps[ki*K+kj, ci, co] = weight[co, ci, ki, kj].
    w_taps = jnp.transpose(weight, (2, 3, 1, 0)).reshape(k * k, cin, cout)
    w_taps = w_taps.astype(jnp.float32)

    cparams = pltpu.CompilerParams(dimension_semantics=("parallel",),
                                   vmem_limit_bytes=32 * 1024 * 1024)

    kernel1 = functools.partial(_conv_stats_kernel, k=k, stride=s,
                                ho=ho, wo=wo, cin=cin, cout=cout)

    # TODO(synk): for large images, tile Ho inside each batch step with a
    # manually DMA'd haloed input slab instead of loading the full padded image.
    conv_nc, mu_c, m2_c = pl.pallas_call(
        kernel1,
        out_shape=(
            jax.ShapeDtypeStruct((n, cout, rows), jnp.float32),
            jax.ShapeDtypeStruct((n, 1, cout), jnp.float32),
            jax.ShapeDtypeStruct((n, 1, cout), jnp.float32),
        ),
        grid_spec=pltpu.PrefetchScalarGridSpec(
            num_scalar_prefetch=0,
            grid=(n,),
            in_specs=[
                pl.BlockSpec((1, hp, wp, cin), lambda i: (i, 0, 0, 0)),
                pl.BlockSpec((k * k, cin, cout), lambda i: (0, 0, 0)),
            ],
            out_specs=[
                pl.BlockSpec((1, cout, rows), lambda i: (i, 0, 0)),
                pl.BlockSpec((1, 1, cout), lambda i: (i, 0, 0)),
                pl.BlockSpec((1, 1, cout), lambda i: (i, 0, 0)),
            ],
        ),
        compiler_params=cparams,
    )(x_pad, w_taps)

    # Combine per-image partials (Chan's parallel variance) -> BN scale/shift.
    mu_c = mu_c.reshape(n, cout)
    m2_c = m2_c.reshape(n, cout)
    mean = jnp.mean(mu_c, axis=0)                                  # equal chunk sizes
    m2 = m2_c.sum(axis=0) + rows * jnp.sum((mu_c - mean) ** 2, axis=0)
    var = jnp.maximum(m2 / (n * rows), 0.0)        # biased variance (PyTorch BN fwd)
    inv_std = jax.lax.rsqrt(var + eps)
    g32 = gamma.astype(jnp.float32)
    scale = (g32 * inv_std).reshape(1, cout, 1)
    shift = (beta.astype(jnp.float32) - mean * g32 * inv_std).reshape(1, cout, 1)

    out_nc = pl.pallas_call(
        _bn_relu_kernel,
        out_shape=jax.ShapeDtypeStruct((n, cout, rows), jnp.float32),
        grid_spec=pltpu.PrefetchScalarGridSpec(
            num_scalar_prefetch=0,
            grid=(n,),
            in_specs=[
                pl.BlockSpec((1, cout, rows), lambda i: (i, 0, 0)),
                pl.BlockSpec((1, cout, 1), lambda i: (0, 0, 0)),
                pl.BlockSpec((1, cout, 1), lambda i: (0, 0, 0)),
            ],
            out_specs=pl.BlockSpec((1, cout, rows), lambda i: (i, 0, 0)),
        ),
        input_output_aliases={0: 0},   # update the conv intermediate in place
        compiler_params=cparams,
    )(conv_nc, scale, shift)

    # [N, Cout, Ho*Wo] -> [N, Cout, Ho, Wo]: already NCHW order, free reshape.
    return out_nc.reshape(n, cout, ho, wo)


if __name__ == "__main__":
    N, CIN, COUT, K, S, H, W = 2, 4, 8, 3, 1, 16, 16
    EPS = 1e-5

    key = jax.random.PRNGKey(0)
    kx, kw, kb, kg, kbeta = jax.random.split(key, 5)
    x = jax.random.normal(kx, (N, CIN, H, W), dtype=jnp.float32)
    weight = jax.random.normal(kw, (COUT, CIN, K, K), dtype=jnp.float32) * 0.1
    bias = jax.random.normal(kb, (COUT,), dtype=jnp.float32) * 0.1
    gamma = 1.0 + 0.1 * jax.random.normal(kg, (COUT,), dtype=jnp.float32)
    beta = 0.1 * jax.random.normal(kbeta, (COUT,), dtype=jnp.float32)

    fwd = jax.jit(functools.partial(conv_module_forward, stride=S, eps=EPS))
    out = fwd(x, weight, bias, gamma, beta)
    out = jax.block_until_ready(out)

    # Pure-JAX reference (same train-mode BN semantics, WITH conv bias — it
    # cancels under BN, which the comparison verifies).
    ref = jax.lax.conv_general_dilated(
        x, weight, window_strides=(S, S),
        padding=[(K // 2, K // 2), (K // 2, K // 2)],
        dimension_numbers=("NCHW", "OIHW", "NCHW")) + bias.reshape(1, -1, 1, 1)
    mu = ref.mean(axis=(0, 2, 3), keepdims=True)
    var = ref.var(axis=(0, 2, 3), keepdims=True)
    ref = (ref - mu) / jnp.sqrt(var + EPS)
    ref = ref * gamma.reshape(1, -1, 1, 1) + beta.reshape(1, -1, 1, 1)
    ref = jnp.maximum(ref, 0.0)

    assert out.shape == (N, COUT, H, W)
    assert jnp.max(jnp.abs(out - ref)) < 1e-3, "mismatch vs reference"
    print("KERNEL_OK")
</pallas_src>

<mosaic_0001>
module attributes {stable_mosaic.version = 11 : i64} {
  func.func @_conv_stats_kernel(%arg0: i32, %arg1: memref<1x18x18x4xf32, #tpu.memory_space<vmem>>, %arg2: memref<9x4x8xf32, #tpu.memory_space<vmem>>, %arg3: memref<1x8x256xf32, #tpu.memory_space<vmem>>, %arg4: memref<1x1x8xf32, #tpu.memory_space<vmem>>, %arg5: memref<1x1x8xf32, #tpu.memory_space<vmem>>) attributes {dimension_semantics = [#tpu.dimension_semantics<parallel>], iteration_bounds = array<i64: 2>, scalar_prefetch = 0 : i64, scratch_operands = 0 : i64, tpu.core_type = #tpu.core_type<tc>, window_params = [{transform_indices = @transform_0, window_bounds = array<i64: 1, 18, 18, 4>}, {pipeline_mode = #tpu.pipeline_mode<synchronous>, transform_indices = @transform_1, window_bounds = array<i64: 9, 4, 8>}, {transform_indices = @transform_2, window_bounds = array<i64: 1, 8, 256>}, {transform_indices = @transform_3, window_bounds = array<i64: 1, 1, 8>}, {transform_indices = @transform_4, window_bounds = array<i64: 1, 1, 8>}]} {
    %cst = arith.constant 0.000000e+00 : f32
    %0 = vector.broadcast %cst : f32 to vector<256x8xf32>
    %c0 = arith.constant 0 : index
    %c0_0 = arith.constant 0 : index
    %c0_1 = arith.constant 0 : index
    %c0_2 = arith.constant 0 : index
    %1 = vector.load %arg1[%c0, %c0_0, %c0_1, %c0_2] : memref<1x18x18x4xf32, #tpu.memory_space<vmem>>, vector<1x16x16x4xf32>
    %2 = vector.shape_cast %1 : vector<1x16x16x4xf32> to vector<16x16x4xf32>
    %3 = vector.shape_cast %2 : vector<16x16x4xf32> to vector<256x4xf32>
    %c0_3 = arith.constant 0 : index
    %c0_4 = arith.constant 0 : index
    %c0_5 = arith.constant 0 : index
    %4 = vector.load %arg2[%c0_3, %c0_4, %c0_5] : memref<9x4x8xf32, #tpu.memory_space<vmem>>, vector<1x4x8xf32>
    %5 = vector.shape_cast %4 : vector<1x4x8xf32> to vector<4x8xf32>
    %cst_6 = arith.constant dense<0.000000e+00> : vector<256x8xf32>
    %6 = tpu.matmul %3, %5, %cst_6 {dimension_numbers = #tpu.dot_dimension_numbers<[1], [0], [0], [1], [0, 0, 1, 1], [], []>} : vector<256x4xf32>, vector<4x8xf32>, vector<256x8xf32> -> vector<256x8xf32>
    %7 = arith.addf %0, %6 : vector<256x8xf32>
    %c0_7 = arith.constant 0 : index
    %c0_8 = arith.constant 0 : index
    %c1 = arith.constant 1 : index
    %c0_9 = arith.constant 0 : index
    %8 = vector.load %arg1[%c0_7, %c0_8, %c1, %c0_9] : memref<1x18x18x4xf32, #tpu.memory_space<vmem>>, vector<1x16x16x4xf32>
    %9 = vector.shape_cast %8 : vector<1x16x16x4xf32> to vector<16x16x4xf32>
    %10 = vector.shape_cast %9 : vector<16x16x4xf32> to vector<256x4xf32>
    %c1_10 = arith.constant 1 : index
    %c0_11 = arith.constant 0 : index
    %c0_12 = arith.constant 0 : index
    %11 = vector.load %arg2[%c1_10, %c0_11, %c0_12] : memref<9x4x8xf32, #tpu.memory_space<vmem>>, vector<1x4x8xf32>
    %12 = vector.shape_cast %11 : vector<1x4x8xf32> to vector<4x8xf32>
    %cst_13 = arith.constant dense<0.000000e+00> : vector<256x8xf32>
    %13 = tpu.matmul %10, %12, %cst_13 {dimension_numbers = #tpu.dot_dimension_numbers<[1], [0], [0], [1], [0, 0, 1, 1], [], []>} : vector<256x4xf32>, vector<4x8xf32>, vector<256x8xf32> -> vector<256x8xf32>
    %14 = arith.addf %7, %13 : vector<256x8xf32>
    %c0_14 = arith.constant 0 : index
    %c0_15 = arith.constant 0 : index
    %c2 = arith.constant 2 : index
    %c0_16 = arith.constant 0 : index
    %15 = vector.load %arg1[%c0_14, %c0_15, %c2, %c0_16] : memref<1x18x18x4xf32, #tpu.memory_space<vmem>>, vector<1x16x16x4xf32>
    %16 = vector.shape_cast %15 : vector<1x16x16x4xf32> to vector<16x16x4xf32>
    %17 = vector.shape_cast %16 : vector<16x16x4xf32> to vector<256x4xf32>
    %c2_17 = arith.constant 2 : index
    %c0_18 = arith.constant 0 : index
    %c0_19 = arith.constant 0 : index
    %18 = vector.load %arg2[%c2_17, %c0_18, %c0_19] : memref<9x4x8xf32, #tpu.memory_space<vmem>>, vector<1x4x8xf32>
    %19 = vector.shape_cast %18 : vector<1x4x8xf32> to vector<4x8xf32>
    %cst_20 = arith.constant dense<0.000000e+00> : vector<256x8xf32>
    %20 = tpu.matmul %17, %19, %cst_20 {dimension_numbers = #tpu.dot_dimension_numbers<[1], [0], [0], [1], [0, 0, 1, 1], [], []>} : vector<256x4xf32>, vector<4x8xf32>, vector<256x8xf32> -> vector<256x8xf32>
    %21 = arith.addf %14, %20 : vector<256x8xf32>
    %c0_21 = arith.constant 0 : index
    %c1_22 = arith.constant 1 : index
    %c0_23 = arith.constant 0 : index
    %c0_24 = arith.constant 0 : index
    %22 = vector.load %arg1[%c0_21, %c1_22, %c0_23, %c0_24] : memref<1x18x18x4xf32, #tpu.memory_space<vmem>>, vector<1x16x16x4xf32>
    %23 = vector.shape_cast %22 : vector<1x16x16x4xf32> to vector<16x16x4xf32>
    %24 = vector.shape_cast %23 : vector<16x16x4xf32> to vector<256x4xf32>
    %c3 = arith.constant 3 : index
    %c0_25 = arith.constant 0 : index
    %c0_26 = arith.constant 0 : index
    %25 = vector.load %arg2[%c3, %c0_25, %c0_26] : memref<9x4x8xf32, #tpu.memory_space<vmem>>, vector<1x4x8xf32>
    %26 = vector.shape_cast %25 : vector<1x4x8xf32> to vector<4x8xf32>
    %cst_27 = arith.constant dense<0.000000e+00> : vector<256x8xf32>
    %27 = tpu.matmul %24, %26, %cst_27 {dimension_numbers = #tpu.dot_dimension_numbers<[1], [0], [0], [1], [0, 0, 1, 1], [], []>} : vector<256x4xf32>, vector<4x8xf32>, vector<256x8xf32> -> vector<256x8xf32>
    %28 = arith.addf %21, %27 : vector<256x8xf32>
    %c0_28 = arith.constant 0 : index
    %c1_29 = arith.constant 1 : index
    %c1_30 = arith.constant 1 : index
    %c0_31 = arith.constant 0 : index
    %29 = vector.load %arg1[%c0_28, %c1_29, %c1_30, %c0_31] : memref<1x18x18x4xf32, #tpu.memory_space<vmem>>, vector<1x16x16x4xf32>
    %30 = vector.shape_cast %29 : vector<1x16x16x4xf32> to vector<16x16x4xf32>
    %31 = vector.shape_cast %30 : vector<16x16x4xf32> to vector<256x4xf32>
    %c4 = arith.constant 4 : index
    %c0_32 = arith.constant 0 : index
    %c0_33 = arith.constant 0 : index
    %32 = vector.load %arg2[%c4, %c0_32, %c0_33] : memref<9x4x8xf32, #tpu.memory_space<vmem>>, vector<1x4x8xf32>
    %33 = vector.shape_cast %32 : vector<1x4x8xf32> to vector<4x8xf32>
    %cst_34 = arith.constant dense<0.000000e+00> : vector<256x8xf32>
    %34 = tpu.matmul %31, %33, %cst_34 {dimension_numbers = #tpu.dot_dimension_numbers<[1], [0], [0], [1], [0, 0, 1, 1], [], []>} : vector<256x4xf32>, vector<4x8xf32>, vector<256x8xf32> -> vector<256x8xf32>
    %35 = arith.addf %28, %34 : vector<256x8xf32>
    %c0_35 = arith.constant 0 : index
    %c1_36 = arith.constant 1 : index
    %c2_37 = arith.constant 2 : index
    %c0_38 = arith.constant 0 : index
    %36 = vector.load %arg1[%c0_35, %c1_36, %c2_37, %c0_38] : memref<1x18x18x4xf32, #tpu.memory_space<vmem>>, vector<1x16x16x4xf32>
    %37 = vector.shape_cast %36 : vector<1x16x16x4xf32> to vector<16x16x4xf32>
    %38 = vector.shape_cast %37 : vector<16x16x4xf32> to vector<256x4xf32>
    %c5 = arith.constant 5 : index
    %c0_39 = arith.constant 0 : index
    %c0_40 = arith.constant 0 : index
    %39 = vector.load %arg2[%c5, %c0_39, %c0_40] : memref<9x4x8xf32, #tpu.memory_space<vmem>>, vector<1x4x8xf32>
    %40 = vector.shape_cast %39 : vector<1x4x8xf32> to vector<4x8xf32>
    %cst_41 = arith.constant dense<0.000000e+00> : vector<256x8xf32>
    %41 = tpu.matmul %38, %40, %cst_41 {dimension_numbers = #tpu.dot_dimension_numbers<[1], [0], [0], [1], [0, 0, 1, 1], [], []>} : vector<256x4xf32>, vector<4x8xf32>, vector<256x8xf32> -> vector<256x8xf32>
    %42 = arith.addf %35, %41 : vector<256x8xf32>
    %c0_42 = arith.constant 0 : index
    %c2_43 = arith.constant 2 : index
    %c0_44 = arith.constant 0 : index
    %c0_45 = arith.constant 0 : index
    %43 = vector.load %arg1[%c0_42, %c2_43, %c0_44, %c0_45] : memref<1x18x18x4xf32, #tpu.memory_space<vmem>>, vector<1x16x16x4xf32>
    %44 = vector.shape_cast %43 : vector<1x16x16x4xf32> to vector<16x16x4xf32>
    %45 = vector.shape_cast %44 : vector<16x16x4xf32> to vector<256x4xf32>
    %c6 = arith.constant 6 : index
    %c0_46 = arith.constant 0 : index
    %c0_47 = arith.constant 0 : index
    %46 = vector.load %arg2[%c6, %c0_46, %c0_47] : memref<9x4x8xf32, #tpu.memory_space<vmem>>, vector<1x4x8xf32>
    %47 = vector.shape_cast %46 : vector<1x4x8xf32> to vector<4x8xf32>
    %cst_48 = arith.constant dense<0.000000e+00> : vector<256x8xf32>
    %48 = tpu.matmul %45, %47, %cst_48 {dimension_numbers = #tpu.dot_dimension_numbers<[1], [0], [0], [1], [0, 0, 1, 1], [], []>} : vector<256x4xf32>, vector<4x8xf32>, vector<256x8xf32> -> vector<256x8xf32>
    %49 = arith.addf %42, %48 : vector<256x8xf32>
    %c0_49 = arith.constant 0 : index
    %c2_50 = arith.constant 2 : index
    %c1_51 = arith.constant 1 : index
    %c0_52 = arith.constant 0 : index
    %50 = vector.load %arg1[%c0_49, %c2_50, %c1_51, %c0_52] : memref<1x18x18x4xf32, #tpu.memory_space<vmem>>, vector<1x16x16x4xf32>
    %51 = vector.shape_cast %50 : vector<1x16x16x4xf32> to vector<16x16x4xf32>
    %52 = vector.shape_cast %51 : vector<16x16x4xf32> to vector<256x4xf32>
    %c7 = arith.constant 7 : index
    %c0_53 = arith.constant 0 : index
    %c0_54 = arith.constant 0 : index
    %53 = vector.load %arg2[%c7, %c0_53, %c0_54] : memref<9x4x8xf32, #tpu.memory_space<vmem>>, vector<1x4x8xf32>
    %54 = vector.shape_cast %53 : vector<1x4x8xf32> to vector<4x8xf32>
    %cst_55 = arith.constant dense<0.000000e+00> : vector<256x8xf32>
    %55 = tpu.matmul %52, %54, %cst_55 {dimension_numbers = #tpu.dot_dimension_numbers<[1], [0], [0], [1], [0, 0, 1, 1], [], []>} : vector<256x4xf32>, vector<4x8xf32>, vector<256x8xf32> -> vector<256x8xf32>
    %56 = arith.addf %49, %55 : vector<256x8xf32>
    %c0_56 = arith.constant 0 : index
    %c2_57 = arith.constant 2 : index
    %c2_58 = arith.constant 2 : index
    %c0_59 = arith.constant 0 : index
    %57 = vector.load %arg1[%c0_56, %c2_57, %c2_58, %c0_59] : memref<1x18x18x4xf32, #tpu.memory_space<vmem>>, vector<1x16x16x4xf32>
    %58 = vector.shape_cast %57 : vector<1x16x16x4xf32> to vector<16x16x4xf32>
    %59 = vector.shape_cast %58 : vector<16x16x4xf32> to vector<256x4xf32>
    %c8 = arith.constant 8 : index
    %c0_60 = arith.constant 0 : index
    %c0_61 = arith.constant 0 : index
    %60 = vector.load %arg2[%c8, %c0_60, %c0_61] : memref<9x4x8xf32, #tpu.memory_space<vmem>>, vector<1x4x8xf32>
    %61 = vector.shape_cast %60 : vector<1x4x8xf32> to vector<4x8xf32>
    %cst_62 = arith.constant dense<0.000000e+00> : vector<256x8xf32>
    %62 = tpu.matmul %59, %61, %cst_62 {dimension_numbers = #tpu.dot_dimension_numbers<[1], [0], [0], [1], [0, 0, 1, 1], [], []>} : vector<256x4xf32>, vector<4x8xf32>, vector<256x8xf32> -> vector<256x8xf32>
    %63 = arith.addf %56, %62 : vector<256x8xf32>
    %64 = tpu.transpose %63, [1, 0] : vector<256x8xf32> -> vector<8x256xf32>
    %65 = vector.shape_cast %64 : vector<8x256xf32> to vector<1x8x256xf32>
    %c0_63 = arith.constant 0 : index
    %c0_64 = arith.constant 0 : index
    %c0_65 = arith.constant 0 : index
    %66 = vector.load %arg3[%c0_63, %c0_64, %c0_65] : memref<1x8x256xf32, #tpu.memory_space<vmem>>, vector<1x8x256xf32>
    tpu.vector_store %arg3[%c0_63, %c0_64, %c0_65], %65 {strides = array<i32>} : memref<1x8x256xf32, #tpu.memory_space<vmem>>, vector<1x8x256xf32>,
    %cst_66 = arith.constant dense<0.000000e+00> : vector<8xf32>
    %67 = vector.multi_reduction <add>, %63, %cst_66 [0] : vector<256x8xf32> to vector<8xf32>
    %68 = vector.shape_cast %67 : vector<8xf32> to vector<1x8xf32>
    %cst_67 = arith.constant 3.906250e-03 : f32
    %69 = vector.broadcast %cst_67 : f32 to vector<1x8xf32>
    %70 = arith.mulf %68, %69 : vector<1x8xf32>
    %71 = vector.broadcast %70 : vector<1x8xf32> to vector<256x8xf32>
    %72 = arith.subf %63, %71 : vector<256x8xf32>
    %73 = arith.mulf %72, %72 : vector<256x8xf32>
    %cst_68 = arith.constant dense<0.000000e+00> : vector<8xf32>
    %74 = vector.multi_reduction <add>, %73, %cst_68 [0] : vector<256x8xf32> to vector<8xf32>
    %75 = vector.shape_cast %74 : vector<8xf32> to vector<1x8xf32>
    %76 = vector.shape_cast %70 : vector<1x8xf32> to vector<1x1x8xf32>
    %c0_69 = arith.constant 0 : index
    %c0_70 = arith.constant 0 : index
    %c0_71 = arith.constant 0 : index
    %77 = vector.load %arg4[%c0_69, %c0_70, %c0_71] : memref<1x1x8xf32, #tpu.memory_space<vmem>>, vector<1x1x8xf32>
    tpu.vector_store %arg4[%c0_69, %c0_70, %c0_71], %76 {strides = array<i32>} : memref<1x1x8xf32, #tpu.memory_space<vmem>>, vector<1x1x8xf32>,
    %78 = vector.shape_cast %75 : vector<1x8xf32> to vector<1x1x8xf32>
    %c0_72 = arith.constant 0 : index
    %c0_73 = arith.constant 0 : index
    %c0_74 = arith.constant 0 : index
    %79 = vector.load %arg5[%c0_72, %c0_73, %c0_74] : memref<1x1x8xf32, #tpu.memory_space<vmem>>, vector<1x1x8xf32>
    tpu.vector_store %arg5[%c0_72, %c0_73, %c0_74], %78 {strides = array<i32>} : memref<1x1x8xf32, #tpu.memory_space<vmem>>, vector<1x1x8xf32>,
    return
  }
  func.func @transform_0(%arg0: i32) -> (i32, i32, i32, i32) {
    %c0_i32 = arith.constant 0 : i32
    %c0_i32_0 = arith.constant 0 : i32
    %c0_i32_1 = arith.constant 0 : i32
    %c0_i32_2 = arith.constant 0 : i32
    return %arg0, %c0_i32, %c0_i32_0, %c0_i32_1 : i32, i32, i32, i32
  }
  func.func @transform_1(%arg0: i32) -> (i32, i32, i32) {
    %c0_i32 = arith.constant 0 : i32
    %c0_i32_0 = arith.constant 0 : i32
    %c0_i32_1 = arith.constant 0 : i32
    %c0_i32_2 = arith.constant 0 : i32
    return %c0_i32, %c0_i32_0, %c0_i32_1 : i32, i32, i32
  }
  func.func @transform_2(%arg0: i32) -> (i32, i32, i32) {
    %c0_i32 = arith.constant 0 : i32
    %c0_i32_0 = arith.constant 0 : i32
    %c0_i32_1 = arith.constant 0 : i32
    return %arg0, %c0_i32, %c0_i32_0 : i32, i32, i32
  }
  func.func @transform_3(%arg0: i32) -> (i32, i32, i32) {
    %c0_i32 = arith.constant 0 : i32
    %c0_i32_0 = arith.constant 0 : i32
    %c0_i32_1 = arith.constant 0 : i32
    return %arg0, %c0_i32, %c0_i32_0 : i32, i32, i32
  }
  func.func @transform_4(%arg0: i32) -> (i32, i32, i32) {
    %c0_i32 = arith.constant 0 : i32
    %c0_i32_0 = arith.constant 0 : i32
    %c0_i32_1 = arith.constant 0 : i32
    return %arg0, %c0_i32, %c0_i32_0 : i32, i32, i32
  }
}

module attributes {stable_mosaic.version = 11 : i64} {
  func.func @_bn_relu_kernel(%arg0: i32, %arg1: memref<1x8x256xf32, #tpu.memory_space<vmem>>, %arg2: memref<1x8x1xf32, #tpu.memory_space<vmem>>, %arg3: memref<1x8x1xf32, #tpu.memory_space<vmem>>, %arg4: memref<1x8x256xf32, #tpu.memory_space<vmem>>) attributes {dimension_semantics = [#tpu.dimension_semantics<parallel>], iteration_bounds = array<i64: 2>, scalar_prefetch = 0 : i64, scratch_operands = 0 : i64, tpu.core_type = #tpu.core_type<tc>, window_params = [{transform_indices = @transform_0, window_bounds = array<i64: 1, 8, 256>}, {pipeline_mode = #tpu.pipeline_mode<synchronous>, transform_indices = @transform_1, window_bounds = array<i64: 1, 8, 1>}, {pipeline_mode = #tpu.pipeline_mode<synchronous>, transform_indices = @transform_2, window_bounds = array<i64: 1, 8, 1>}, {transform_indices = @transform_3, window_bounds = array<i64: 1, 8, 256>}]} {
    %c0 = arith.constant 0 : index
    %c0_0 = arith.constant 0 : index
    %c0_1 = arith.constant 0 : index
    %0 = vector.load %arg1[%c0, %c0_0, %c0_1] : memref<1x8x256xf32, #tpu.memory_space<vmem>>, vector<1x8x256xf32>
    %c0_2 = arith.constant 0 : index
    %c0_3 = arith.constant 0 : index
    %c0_4 = arith.constant 0 : index
    %1 = vector.load %arg2[%c0_2, %c0_3, %c0_4] : memref<1x8x1xf32, #tpu.memory_space<vmem>>, vector<1x8x1xf32>
    %2 = vector.broadcast %1 : vector<1x8x1xf32> to vector<1x8x256xf32>
    %3 = arith.mulf %0, %2 : vector<1x8x256xf32>
    %c0_5 = arith.constant 0 : index
    %c0_6 = arith.constant 0 : index
    %c0_7 = arith.constant 0 : index
    %4 = vector.load %arg3[%c0_5, %c0_6, %c0_7] : memref<1x8x1xf32, #tpu.memory_space<vmem>>, vector<1x8x1xf32>
    %5 = vector.broadcast %4 : vector<1x8x1xf32> to vector<1x8x256xf32>
    %6 = arith.addf %3, %5 : vector<1x8x256xf32>
    %cst = arith.constant 0.000000e+00 : f32
    %7 = vector.broadcast %cst : f32 to vector<1x8x256xf32>
    %8 = arith.maximumf %6, %7 : vector<1x8x256xf32>
    %c0_8 = arith.constant 0 : index
    %c0_9 = arith.constant 0 : index
    %c0_10 = arith.constant 0 : index
    %9 = vector.load %arg4[%c0_8, %c0_9, %c0_10] : memref<1x8x256xf32, #tpu.memory_space<vmem>>, vector<1x8x256xf32>
    tpu.vector_store %arg4[%c0_8, %c0_9, %c0_10], %8 {strides = array<i32>} : memref<1x8x256xf32, #tpu.memory_space<vmem>>, vector<1x8x256xf32>,
    return
  }
  func.func @transform_0(%arg0: i32) -> (i32, i32, i32) {
    %c0_i32 = arith.constant 0 : i32
    %c0_i32_0 = arith.constant 0 : i32
    %c0_i32_1 = arith.constant 0 : i32
    return %arg0, %c0_i32, %c0_i32_0 : i32, i32, i32
  }
  func.func @transform_1(%arg0: i32) -> (i32, i32, i32) {
    %c0_i32 = arith.constant 0 : i32
    %c0_i32_0 = arith.constant 0 : i32
    %c0_i32_1 = arith.constant 0 : i32
    %c0_i32_2 = arith.constant 0 : i32
    return %c0_i32, %c0_i32_0, %c0_i32_1 : i32, i32, i32
  }
  func.func @transform_2(%arg0: i32) -> (i32, i32, i32) {
    %c0_i32 = arith.constant 0 : i32
    %c0_i32_0 = arith.constant 0 : i32
    %c0_i32_1 = arith.constant 0 : i32
    %c0_i32_2 = arith.constant 0 : i32
    return %c0_i32, %c0_i32_0, %c0_i32_1 : i32, i32, i32
  }
  func.func @transform_3(%arg0: i32) -> (i32, i32, i32) {
    %c0_i32 = arith.constant 0 : i32
    %c0_i32_0 = arith.constant 0 : i32
    %c0_i32_1 = arith.constant 0 : i32
    return %arg0, %c0_i32, %c0_i32_0 : i32, i32, i32
  }
}

</mosaic_0001>

<llo_original>
// kernel: conv_module_forward.3
$region0: #{conv_module_forward.3}
  #allocation0 [shape = 'u32[]', space=smem, size = 0x4, offset = 0x4, fixed_abs, tag = 'smem constant byte address 0x4 - core index']
  #allocation1 [shape = 'u32[144,128]{1,0:T(1,128)}', space=vmem, size = 0x12000, scoped, tag = 'internal scratch']
  %s0 = inlined_call_operand.vmem [shape: f32[2,8,256], index: 0, kind: input, shape index: {}, may-alias: {0,3}]
  %s1 = inlined_call_operand.vmem [shape: f32[1,8,1], index: 1, kind: input, shape index: {}]
  %s2 = inlined_call_operand.vmem [shape: f32[1,8,1], index: 2, kind: input, shape index: {}]
  %s3 = inlined_call_operand.vmem [shape: f32[2,8,256], index: 3, kind: output, shape index: {}, may-alias: {0,3}]
  %s4 = sld [smem:[#allocation0]]
  $region45: #{conv_module_forward.3} parent=0
    _
  %s6 = ssub.s32 1, %s4
  %s7 = scalar_select 0, %s6, %s4
  loop: start=0, step=1, limit=4
  $region2: #{conv_module_forward.3} parent=0 // loop_pre_header
    _
  $region3: #{conv_module_forward.3} parent=0 // loop_header
    %s9 = sphi 0, %s13
    %p10 = scmp.ge.s32.totalorder %s9, 4
    %s19 = sphi 0, %s21
    %s22 = sphi 0, %s19
    %s23 = sphi 0, %s22
    %s39 = sphi 0, %s23
    %s43 = sphi 0, %s43
    %s45 = sphi 0, %s43
    %s46 = sphi 0, %s45
    %s60 = sphi 0, %s46
    %s64 = sphi 0, %s64
    %s66 = sphi 0, %s64
    %s67 = sphi 0, %s66
    %s81 = sphi 0, %s67
    %s87 = sphi 0, %s89
    %s90 = sphi 0, %s87
    %s91 = sphi 0, %s90
    %s107 = sphi 0, %s91
  $region4: #{conv_module_forward.3} parent=0 // loop_header_branch
    %12 = sbr.rel (%p10) target = $region8
  $region5: #{conv_module_forward.3} parent=0 // loop_body
    %s14 = ssub.s32 %s9, 1
    %s15 = ssub.s32 %s9, 2
    %s16 = sadd.s32 %s9, 1
    %s17 = ssub.s32 %s9, %s16
    %p18 = scmp.eq.s32.totalorder %s17, 0
    %s20 = sadd.s32 %s19, 1
    %s21 = scalar_select %p18, %s19, %s20
    %p24 = pneg %p18
    %p25 = scmp.eq.s32.totalorder %s9, 1
    %p26 = por %p24, %p25
    %p27 = scmp.ne.s32.totalorder %s19, %s22
    %p28 = scmp.eq.s32.totalorder %s9, 0
    %p29 = por %p27, %p28
    %p30 = scmp.ne.s32.totalorder %s19, %s22
    %p31 = scmp.eq.s32.totalorder %s14, 1
    %p32 = por %p30, %p31
    %p33 = scmp.ne.s32.totalorder %s22, %s23
    %p34 = scmp.eq.s32.totalorder %s14, 0
    %p35 = por %p33, %p34
    %p36 = scmp.ne.s32.totalorder %s22, %s23
    %p37 = scmp.eq.s32.totalorder %s15, 1
    %p38 = por %p36, %p37
    %p40 = scmp.ne.s32.totalorder %s23, %s39
    %p41 = scmp.eq.s32.totalorder %s15, 0
    %p42 = por %p40, %p41
    %s44 = sadd.s32 %s43, 1
    %p47 = scmp.eq.s32.totalorder %s9, 1
    %p48 = scmp.ne.s32.totalorder %s43, %s45
    %p49 = scmp.eq.s32.totalorder %s9, 0
    %p50 = por %p48, %p49
    %p51 = scmp.ne.s32.totalorder %s43, %s45
    %p52 = scmp.eq.s32.totalorder %s14, 1
    %p53 = por %p51, %p52
    %p54 = scmp.ne.s32.totalorder %s45, %s46
    %p55 = scmp.eq.s32.totalorder %s14, 0
    %p56 = por %p54, %p55
    %p57 = scmp.ne.s32.totalorder %s45, %s46
    %p58 = scmp.eq.s32.totalorder %s15, 1
    %p59 = por %p57, %p58
    %p61 = scmp.ne.s32.totalorder %s46, %s60
    %p62 = scmp.eq.s32.totalorder %s15, 0
    %p63 = por %p61, %p62
    %s65 = sadd.s32 %s64, 1
    %p68 = scmp.eq.s32.totalorder %s9, 1
    %p69 = scmp.ne.s32.totalorder %s64, %s66
    %p70 = scmp.eq.s32.totalorder %s9, 0
    %p71 = por %p69, %p70
    %p72 = scmp.ne.s32.totalorder %s64, %s66
    %p73 = scmp.eq.s32.totalorder %s14, 1
    %p74 = por %p72, %p73
    %p75 = scmp.ne.s32.totalorder %s66, %s67
    %p76 = scmp.eq.s32.totalorder %s14, 0
    %p77 = por %p75, %p76
    %p78 = scmp.ne.s32.totalorder %s66, %s67
    %p79 = scmp.eq.s32.totalorder %s15, 1
    %p80 = por %p78, %p79
    %p82 = scmp.ne.s32.totalorder %s67, %s81
    %p83 = scmp.eq.s32.totalorder %s15, 0
    %p84 = por %p82, %p83
    %s85 = ssub.s32 %s9, %s16
    %p86 = scmp.eq.s32.totalorder %s85, 0
    %s88 = sadd.s32 %s87, 1
    %s89 = scalar_select %p86, %s87, %s88
    %p92 = pneg %p86
    %p93 = scmp.eq.s32.totalorder %s9, 1
    %p94 = por %p92, %p93
    %p95 = scmp.ne.s32.totalorder %s87, %s90
    %p96 = scmp.eq.s32.totalorder %s9, 0
    %p97 = por %p95, %p96
    %p98 = scmp.ne.s32.totalorder %s87, %s90
    %p99 = scmp.eq.s32.totalorder %s14, 1
    %p100 = por %p98, %p99
    %p101 = scmp.ne.s32.totalorder %s90, %s91
    %p102 = scmp.eq.s32.totalorder %s14, 0
    %p103 = por %p101, %p102
    %p104 = scmp.ne.s32.totalorder %s90, %s91
    %p105 = scmp.eq.s32.totalorder %s15, 1
    %p106 = por %p104, %p105
    %p108 = scmp.ne.s32.totalorder %s91, %s107
    %p109 = scmp.eq.s32.totalorder %s15, 0
    %p110 = por %p108, %p109
    %p111 = scmp.le.s32.totalorder 1, %s9
    %p112 = scmp.lt.s32.totalorder %s9, 3
    %p113 = pnand %p111, %p112
    %p114 = pneg %p113
    // Predicated region
    $region9: #{conv_module_forward.3} parent=5 // pred_check
      _
    $region10: #{conv_module_forward.3} parent=5 // pred_check_branch
      %116 = sbr.rel (%p113) target = $region12
    $region11: #{conv_module_forward.3} parent=5 // pred_region
      %s117 = ssub.s32 %s9, 1
      // Predicated region
      $region13: #{conv_module_forward.3} parent=11 // pred_check
        %p118 = pneg %p56
      $region14: #{conv_module_forward.3} parent=11 // pred_check_branch
        %120 = sbr.rel (%p118) target = $region16
      $region15: #{conv_module_forward.3} parent=11 // pred_region
        _
      $region16: #{conv_module_forward.3} parent=11 // pred_fallthru
        _
      // Predicated region
      $region17: #{conv_module_forward.3} parent=11 // pred_check
        %p121 = pneg %p77
      $region18: #{conv_module_forward.3} parent=11 // pred_check_branch
        %123 = sbr.rel (%p121) target = $region20
      $region19: #{conv_module_forward.3} parent=11 // pred_region
        _
      $region20: #{conv_module_forward.3} parent=11 // pred_fallthru
        _
    $region12: #{conv_module_forward.3} parent=5 // pred_fallthru
      _
    %p124 = scmp.lt.s32.totalorder %s9, 2
    // Predicated region
    $region21: #{conv_module_forward.3} parent=5 // pred_check
      %p125 = pneg %p124
    $region22: #{conv_module_forward.3} parent=5 // pred_check_branch
      %127 = sbr.rel (%p125) target = $region24
    $region23: #{conv_module_forward.3} parent=5 // pred_region
      // Predicated region
      $region25: #{conv_module_forward.3} parent=23 // pred_check
        %p128 = pneg %p29
      $region26: #{conv_module_forward.3} parent=23 // pred_check_branch
        %130 = sbr.rel (%p128) target = $region28
      $region27: #{conv_module_forward.3} parent=23 // pred_region
        %p131 = scmp.lt.s32.totalorder %s9, 1
        %s132 = scalar_select %p131, %s9, 1
        %s133 = smul.addr %s132, 2
        %s134 = smul.addr %s133, 8
        %s135 = scalar_lea.vmem %s0, %s134
      $region28: #{conv_module_forward.3} parent=23 // pred_fallthru
        _
    $region24: #{conv_module_forward.3} parent=5 // pred_fallthru
      _
    %p136 = scmp.le.s32.totalorder 1, %s9
    %p137 = scmp.lt.s32.totalorder %s9, 3
    %p138 = pnand %p136, %p137
    %p139 = pneg %p138
    // Predicated region
    $region29: #{conv_module_forward.3} parent=5 // pred_check
      _
    $region30: #{conv_module_forward.3} parent=5 // pred_check_branch
      %141 = sbr.rel (%p138) target = $region32
    $region31: #{conv_module_forward.3} parent=5 // pred_region
      %s142 = ssub.s32 %s9, 1
      %p143 = scmp.lt.s32.totalorder %s14, 1
      %s144 = scalar_select %p143, %s14, 1
      %s145 = smul.addr %s144, 2
      %s146 = smul.addr %s145, 8
      %s147 = scalar_lea.vmem %s0, %s146
      %p148 = pneg %p35
      %p149 = pneg %p32
      %p150 = pneg %p56
      %p151 = pneg %p53
      %p152 = pneg %p77
      %p153 = pneg %p74
      %p154 = pneg %p103
      %p155 = pneg %p100
      %p156 = scmp.lt.s32.totalorder %s14, 1
      %s157 = scalar_select %p156, %s14, 1
      %s158 = smul.addr %s157, 2
      %s159 = smul.addr %s158, 8
      %s160 = scalar_lea.vmem %s3, %s159
      %p161 = scmp.lt.s32.totalorder %s14, 1
      %s162 = scalar_select %p161, %s14, 1
      %s163 = smul.addr %s162, 2
      %s164 = smul.addr %s163, 8
      %s165 = scalar_lea.vmem %s0, %s164
      %p166 = scmp.lt.s32.totalorder %s14, 1
      %s167 = scalar_select %p166, %s14, 1
      %s168 = smul.addr %s167, 2
      %s169 = smul.addr %s168, 8
      %s170 = scalar_lea.vmem %s3, %s169
      %v171 = vld [vmem:[%s165] sm:$0xff]
      %v172 = vld [vmem:[%s165 + $0x8] sm:$0xff]
      %v173 = vld [vmem:[%s1] sm:$0xff]
      %175 = vset.pattern.permute.xlu0 0
      %176 = vperm.xlu0 %175, %v173
      %v177 = vpop.permute.xlu0 %176
      %v179 = vmul.f32 %v171, %v177
      %v180 = vmul.f32 %v172, %v177
      %v181 = vld [vmem:[%s2] sm:$0xff]
      %183 = vset.pattern.permute.xlu0 0
      %184 = vperm.xlu0 %183, %v181
      %v185 = vpop.permute.xlu0 %184
      %v187 = vadd.f32 %v179, %v185
      %v188 = vadd.f32 %v180, %v185
      %v189 = vmax.f32 %v187, 0.0
      %v190 = vmax.f32 %v188, 0.0
      %191 = vst [vmem:[%s170] sm:$0xff] %v189
      %192 = vst [vmem:[%s170 + $0x8] sm:$0xff] %v190
      %p193 = scmp.lt.s32.totalorder %s14, 1
      %s194 = scalar_select %p193, %s14, 1
      %s195 = smul.addr %s194, 2
      %s196 = smul.addr %s195, 8
      %s197 = scalar_lea.vmem %s3, %s196
      // Predicated region
      $region33: #{conv_module_forward.3} parent=31 // pred_check
        %p198 = pneg %p100
      $region34: #{conv_module_forward.3} parent=31 // pred_check_branch
        %200 = sbr.rel (%p198) target = $region36
      $region35: #{conv_module_forward.3} parent=31 // pred_region
        _
      $region36: #{conv_module_forward.3} parent=31 // pred_fallthru
        _
    $region32: #{conv_module_forward.3} parent=5 // pred_fallthru
      _
    %p201 = scmp.le.s32.totalorder 2, %s9
    // Predicated region
    $region37: #{conv_module_forward.3} parent=5 // pred_check
      %p202 = pneg %p201
    $region38: #{conv_module_forward.3} parent=5 // pred_check_branch
      %204 = sbr.rel (%p202) target = $region40
    $region39: #{conv_module_forward.3} parent=5 // pred_region
      %s205 = ssub.s32 %s9, 2
      // Predicated region
      $region41: #{conv_module_forward.3} parent=39 // pred_check
        %p206 = pneg %p106
      $region42: #{conv_module_forward.3} parent=39 // pred_check_branch
        %208 = sbr.rel (%p206) target = $region44
      $region43: #{conv_module_forward.3} parent=39 // pred_region
        %p209 = scmp.lt.s32.totalorder %s15, 1
        %s210 = scalar_select %p209, %s15, 1
        %s211 = smul.addr %s210, 2
        %s212 = smul.addr %s211, 8
        %s213 = scalar_lea.vmem %s3, %s212
      $region44: #{conv_module_forward.3} parent=39 // pred_fallthru
        _
    $region40: #{conv_module_forward.3} parent=5 // pred_fallthru
      _
  $region6: #{conv_module_forward.3} parent=0 // loop_footer
    %s13 = sadd.s32 1, %s9
  $region7: #{conv_module_forward.3} parent=0 // loop_footer_branch
    %8 = sbr.rel target = $region3
  $region8: #{conv_module_forward.3} parent=0 // loop_exit
    _

// kernel: conv_module_forward.2
$region0: #{conv_module_forward.2}
  #allocation0 [shape = 'u32[]', space=smem, size = 0x4, offset = 0x4, fixed_abs, tag = 'smem constant byte address 0x4 - core index']
  #allocation1 [shape = 'u32[144,128]{1,0:T(1,128)}', space=vmem, size = 0x12000, scoped, tag = 'internal scratch']
  %s0 = inlined_call_operand.vmem [shape: f32[2,18,18,4], index: 0, kind: input, shape index: {}]
  %s1 = inlined_call_operand.vmem [shape: f32[9,4,8], index: 1, kind: input, shape index: {}]
  %s2 = inlined_call_operand.vmem [shape: f32[2,8,256], index: 2, kind: output, shape index: {0}]
  %s3 = inlined_call_operand.vmem [shape: f32[2,1,8], index: 3, kind: output, shape index: {1}]
  %s4 = inlined_call_operand.vmem [shape: f32[2,1,8], index: 4, kind: output, shape index: {2}]
  %5 = xla_tuple %s2, %s3, %s4
  %s6 = sld [smem:[#allocation0]]
  $region57: #{conv_module_forward.2} parent=0
    _
  %s8 = ssub.s32 1, %s6
  %s9 = scalar_select 0, %s8, %s6
  loop: start=0, step=1, limit=4
  $region2: #{conv_module_forward.2} parent=0 // loop_pre_header
    _
  $region3: #{conv_module_forward.2} parent=0 // loop_header
    %s11 = sphi 0, %s15
    %p12 = scmp.ge.s32.totalorder %s11, 4
    %s21 = sphi 0, %s23
    %s24 = sphi 0, %s21
    %s25 = sphi 0, %s24
    %s41 = sphi 0, %s25
    %s45 = sphi 0, %s45
    %s47 = sphi 0, %s45
    %s48 = sphi 0, %s47
    %s62 = sphi 0, %s48
    %s68 = sphi 0, %s70
    %s71 = sphi 0, %s68
    %s72 = sphi 0, %s71
    %s88 = sphi 0, %s72
    %s94 = sphi 0, %s96
    %s97 = sphi 0, %s94
    %s98 = sphi 0, %s97
    %s114 = sphi 0, %s98
    %s120 = sphi 0, %s122
    %s123 = sphi 0, %s120
    %s124 = sphi 0, %s123
    %s140 = sphi 0, %s124
  $region4: #{conv_module_forward.2} parent=0 // loop_header_branch
    %14 = sbr.rel (%p12) target = $region8
  $region5: #{conv_module_forward.2} parent=0 // loop_body
    %s16 = ssub.s32 %s11, 1
    %s17 = ssub.s32 %s11, 2
    %s18 = sadd.s32 %s11, 1
    %s19 = ssub.s32 %s11, %s18
    %p20 = scmp.eq.s32.totalorder %s19, 0
    %s22 = sadd.s32 %s21, 1
    %s23 = scalar_select %p20, %s21, %s22
    %p26 = pneg %p20
    %p27 = scmp.eq.s32.totalorder %s11, 1
    %p28 = por %p26, %p27
    %p29 = scmp.ne.s32.totalorder %s21, %s24
    %p30 = scmp.eq.s32.totalorder %s11, 0
    %p31 = por %p29, %p30
    %p32 = scmp.ne.s32.totalorder %s21, %s24
    %p33 = scmp.eq.s32.totalorder %s16, 1
    %p34 = por %p32, %p33
    %p35 = scmp.ne.s32.totalorder %s24, %s25
    %p36 = scmp.eq.s32.totalorder %s16, 0
    %p37 = por %p35, %p36
    %p38 = scmp.ne.s32.totalorder %s24, %s25
    %p39 = scmp.eq.s32.totalorder %s17, 1
    %p40 = por %p38, %p39
    %p42 = scmp.ne.s32.totalorder %s25, %s41
    %p43 = scmp.eq.s32.totalorder %s17, 0
    %p44 = por %p42, %p43
    %s46 = sadd.s32 %s45, 1
    %p49 = scmp.eq.s32.totalorder %s11, 1
    %p50 = scmp.ne.s32.totalorder %s45, %s47
    %p51 = scmp.eq.s32.totalorder %s11, 0
    %p52 = por %p50, %p51
    %p53 = scmp.ne.s32.totalorder %s45, %s47
    %p54 = scmp.eq.s32.totalorder %s16, 1
    %p55 = por %p53, %p54
    %p56 = scmp.ne.s32.totalorder %s47, %s48
    %p57 = scmp.eq.s32.totalorder %s16, 0
    %p58 = por %p56, %p57
    %p59 = scmp.ne.s32.totalorder %s47, %s48
    %p60 = scmp.eq.s32.totalorder %s17, 1
    %p61 = por %p59, %p60
    %p63 = scmp.ne.s32.totalorder %s48, %s62
    %p64 = scmp.eq.s32.totalorder %s17, 0
    %p65 = por %p63, %p64
    %s66 = ssub.s32 %s11, %s18
    %p67 = scmp.eq.s32.totalorder %s66, 0
    %s69 = sadd.s32 %s68, 1
    %s70 = scalar_select %p67, %s68, %s69
    %p73 = pneg %p67
    %p74 = scmp.eq.s32.totalorder %s11, 1
    %p75 = por %p73, %p74
    %p76 = scmp.ne.s32.totalorder %s68, %s71
    %p77 = scmp.eq.s32.totalorder %s11, 0
    %p78 = por %p76, %p77
    %p79 = scmp.ne.s32.totalorder %s68, %s71
    %p80 = scmp.eq.s32.totalorder %s16, 1
    %p81 = por %p79, %p80
    %p82 = scmp.ne.s32.totalorder %s71, %s72
    %p83 = scmp.eq.s32.totalorder %s16, 0
    %p84 = por %p82, %p83
    %p85 = scmp.ne.s32.totalorder %s71, %s72
    %p86 = scmp.eq.s32.totalorder %s17, 1
    %p87 = por %p85, %p86
    %p89 = scmp.ne.s32.totalorder %s72, %s88
    %p90 = scmp.eq.s32.totalorder %s17, 0
    %p91 = por %p89, %p90
    %s92 = ssub.s32 %s11, %s18
    %p93 = scmp.eq.s32.totalorder %s92, 0
    %s95 = sadd.s32 %s94, 1
    %s96 = scalar_select %p93, %s94, %s95
    %p99 = pneg %p93
    %p100 = scmp.eq.s32.totalorder %s11, 1
    %p101 = por %p99, %p100
    %p102 = scmp.ne.s32.totalorder %s94, %s97
    %p103 = scmp.eq.s32.totalorder %s11, 0
    %p104 = por %p102, %p103
    %p105 = scmp.ne.s32.totalorder %s94, %s97
    %p106 = scmp.eq.s32.totalorder %s16, 1
    %p107 = por %p105, %p106
    %p108 = scmp.ne.s32.totalorder %s97, %s98
    %p109 = scmp.eq.s32.totalorder %s16, 0
    %p110 = por %p108, %p109
    %p111 = scmp.ne.s32.totalorder %s97, %s98
    %p112 = scmp.eq.s32.totalorder %s17, 1
    %p113 = por %p111, %p112
    %p115 = scmp.ne.s32.totalorder %s98, %s114
    %p116 = scmp.eq.s32.totalorder %s17, 0
    %p117 = por %p115, %p116
    %s118 = ssub.s32 %s11, %s18
    %p119 = scmp.eq.s32.totalorder %s118, 0
    %s121 = sadd.s32 %s120, 1
    %s122 = scalar_select %p119, %s120, %s121
    %p125 = pneg %p119
    %p126 = scmp.eq.s32.totalorder %s11, 1
    %p127 = por %p125, %p126
    %p128 = scmp.ne.s32.totalorder %s120, %s123
    %p129 = scmp.eq.s32.totalorder %s11, 0
    %p130 = por %p128, %p129
    %p131 = scmp.ne.s32.totalorder %s120, %s123
    %p132 = scmp.eq.s32.totalorder %s16, 1
    %p133 = por %p131, %p132
    %p134 = scmp.ne.s32.totalorder %s123, %s124
    %p135 = scmp.eq.s32.totalorder %s16, 0
    %p136 = por %p134, %p135
    %p137 = scmp.ne.s32.totalorder %s123, %s124
    %p138 = scmp.eq.s32.totalorder %s17, 1
    %p139 = por %p137, %p138
    %p141 = scmp.ne.s32.totalorder %s124, %s140
    %p142 = scmp.eq.s32.totalorder %s17, 0
    %p143 = por %p141, %p142
    %p144 = scmp.le.s32.totalorder 1, %s11
    %p145 = scmp.lt.s32.totalorder %s11, 3
    %p146 = pnand %p144, %p145
    %p147 = pneg %p146
    // Predicated region
    $region9: #{conv_module_forward.2} parent=5 // pred_check
      _
    $region10: #{conv_module_forward.2} parent=5 // pred_check_branch
      %149 = sbr.rel (%p146) target = $region12
    $region11: #{conv_module_forward.2} parent=5 // pred_region
      %s150 = ssub.s32 %s11, 1
      // Predicated region
      $region13: #{conv_module_forward.2} parent=11 // pred_check
        %p151 = pneg %p58
      $region14: #{conv_module_forward.2} parent=11 // pred_check_branch
        %153 = sbr.rel (%p151) target = $region16
      $region15: #{conv_module_forward.2} parent=11 // pred_region
        _
      $region16: #{conv_module_forward.2} parent=11 // pred_fallthru
        _
    $region12: #{conv_module_forward.2} parent=5 // pred_fallthru
      _
    %p154 = scmp.lt.s32.totalorder %s11, 2
    // Predicated region
    $region17: #{conv_module_forward.2} parent=5 // pred_check
      %p155 = pneg %p154
    $region18: #{conv_module_forward.2} parent=5 // pred_check_branch
      %157 = sbr.rel (%p155) target = $region20
    $region19: #{conv_module_forward.2} parent=5 // pred_region
      // Predicated region
      $region21: #{conv_module_forward.2} parent=19 // pred_check
        %p158 = pneg %p31
      $region22: #{conv_module_forward.2} parent=19 // pred_check_branch
        %160 = sbr.rel (%p158) target = $region24
      $region23: #{conv_module_forward.2} parent=19 // pred_region
        %p161 = scmp.lt.s32.totalorder %s11, 1
        %s162 = scalar_select %p161, %s11, 1
        %s163 = smul.addr %s162, 54
        %s164 = smul.addr %s163, 8
        %s165 = scalar_lea.vmem %s0, %s164
      $region24: #{conv_module_forward.2} parent=19 // pred_fallthru
        _
    $region20: #{conv_module_forward.2} parent=5 // pred_fallthru
      _
    %p166 = scmp.le.s32.totalorder 1, %s11
    %p167 = scmp.lt.s32.totalorder %s11, 3
    %p168 = pnand %p166, %p167
    %p169 = pneg %p168
    // Predicated region
    $region25: #{conv_module_forward.2} parent=5 // pred_check
      _
    $region26: #{conv_module_forward.2} parent=5 // pred_check_branch
      %171 = sbr.rel (%p168) target = $region28
    $region27: #{conv_module_forward.2} parent=5 // pred_region
      %s172 = ssub.s32 %s11, 1
      %p173 = scmp.lt.s32.totalorder %s16, 1
      %s174 = scalar_select %p173, %s16, 1
      %s175 = smul.addr %s174, 54
      %s176 = smul.addr %s175, 8
      %s177 = scalar_lea.vmem %s0, %s176
      %p178 = pneg %p37
      %p179 = pneg %p34
      %p180 = pneg %p58
      %p181 = pneg %p55
      %p182 = pneg %p84
      %p183 = pneg %p81
      %p184 = scmp.lt.s32.totalorder %s16, 1
      %s185 = scalar_select %p184, %s16, 1
      %s186 = smul.addr %s185, 2
      %s187 = smul.addr %s186, 8
      %s188 = scalar_lea.vmem %s2, %s187
      %p189 = pneg %p110
      %p190 = pneg %p107
      %p191 = scmp.lt.s32.totalorder %s16, 1
      %s192 = scalar_select %p191, %s16, 1
      %s193 = scalar_lea.vmem %s3, %s192
      %p194 = pneg %p136
      %p195 = pneg %p133
      %p196 = scmp.lt.s32.totalorder %s16, 1
      %s197 = scalar_select %p196, %s16, 1
      %s198 = scalar_lea.vmem %s4, %s197
      %p199 = scmp.lt.s32.totalorder %s16, 1
      %s200 = scalar_select %p199, %s16, 1
      %s201 = smul.addr %s200, 54
      %s202 = smul.addr %s201, 8
      %s203 = scalar_lea.vmem %s0, %s202
      %p204 = scmp.lt.s32.totalorder %s16, 1
      %s205 = scalar_select %p204, %s16, 1
      %s206 = smul.addr %s205, 2
      %s207 = smul.addr %s206, 8
      %s208 = scalar_lea.vmem %s2, %s207
      %p209 = scmp.lt.s32.totalorder %s16, 1
      %s210 = scalar_select %p209, %s16, 1
      %s211 = scalar_lea.vmem %s3, %s210
      %p212 = scmp.lt.s32.totalorder %s16, 1
      %s213 = scalar_select %p212, %s16, 1
      %s214 = scalar_lea.vmem %s4, %s213
      %v215 = vld [vmem:[%s203] sm:$0xff]
      %v216 = vld [vmem:[%s203 + $0x8] sm:$0xff]
      %v217 = vld [vmem:[%s203 + $0x18] sm:$0xff]
      %v218 = vld [vmem:[%s203 + $0x20] sm:$0xff]
      %v219 = vld [vmem:[%s203 + $0x30] sm:$0xff]
      %v220 = vld [vmem:[%s203 + $0x38] sm:$0xff]
      %v221 = vld [vmem:[%s203 + $0x48] sm:$0xff]
      %v222 = vld [vmem:[%s203 + $0x50] sm:$0xff]
      %v223 = vld [vmem:[%s203 + $0x60] sm:$0xff]
      %v224 = vld [vmem:[%s203 + $0x68] sm:$0xff]
      %v225 = vld [vmem:[%s203 + $0x78] sm:$0xff]
      %v226 = vld [vmem:[%s203 + $0x80] sm:$0xff]
      %v227 = vld [vmem:[%s203 + $0x90] sm:$0xff]
      %v228 = vld [vmem:[%s203 + $0x98] sm:$0xff]
      %v229 = vld [vmem:[%s203 + $0xa8] sm:$0xff]
      %v230 = vld [vmem:[%s203 + $0xb0] sm:$0xff]
      %v231 = vld [vmem:[%s203 + $0xc0] sm:$0xff]
      %v232 = vld [vmem:[%s203 + $0xc8] sm:$0xff]
      %v233 = vld [vmem:[%s203 + $0xd8] sm:$0xff]
      %v234 = vld [vmem:[%s203 + $0xe0] sm:$0xff]
      %v235 = vld [vmem:[%s203 + $0xf0] sm:$0xff]
      %v236 = vld [vmem:[%s203 + $0xf8] sm:$0xff]
      %v237 = vld [vmem:[%s203 + $0x108] sm:$0xff]
      %v238 = vld [vmem:[%s203 + $0x110] sm:$0xff]
      %v239 = vld [vmem:[%s203 + $0x120] sm:$0xff]
      %v240 = vld [vmem:[%s203 + $0x128] sm:$0xff]
      %v241 = vld [vmem:[%s203 + $0x138] sm:$0xff]
      %v242 = vld [vmem:[%s203 + $0x140] sm:$0xff]
      %v243 = vld [vmem:[%s203 + $0x150] sm:$0xff]
      %v244 = vld [vmem:[%s203 + $0x158] sm:$0xff]
      %v245 = vld [vmem:[%s203 + $0x168] sm:$0xff]
      %v246 = vld [vmem:[%s203 + $0x170] sm:$0xff]
      %v247 = vld [vmem:[%s1] sm:$0xf]
      %v248 = vld [vmem:[%s203 + $0x1] sm:$0xff]
      %v249 = vld [vmem:[%s203 + $0x9] sm:$0xff]
      %v250 = vld [vmem:[%s203 + $0x19] sm:$0xff]
      %v251 = vld [vmem:[%s203 + $0x21] sm:$0xff]
      %v252 = vld [vmem:[%s203 + $0x31] sm:$0xff]
      %v253 = vld [vmem:[%s203 + $0x39] sm:$0xff]
      %v254 = vld [vmem:[%s203 + $0x49] sm:$0xff]
      %v255 = vld [vmem:[%s203 + $0x51] sm:$0xff]
      %v256 = vld [vmem:[%s203 + $0x61] sm:$0xff]
      %v257 = vld [vmem:[%s203 + $0x69] sm:$0xff]
      %v258 = vld [vmem:[%s203 + $0x79] sm:$0xff]
      %v259 = vld [vmem:[%s203 + $0x81] sm:$0xff]
      %v260 = vld [vmem:[%s203 + $0x91] sm:$0xff]
      %v261 = vld [vmem:[%s203 + $0x99] sm:$0xff]
      %v262 = vld [vmem:[%s203 + $0xa9] sm:$0xff]
      %v263 = vld [vmem:[%s203 + $0xb1] sm:$0xff]
      %v264 = vld [vmem:[%s203 + $0xc1] sm:$0xff]
      %v265 = vld [vmem:[%s203 + $0xc9] sm:$0xff]
      %v266 = vld [vmem:[%s203 + $0xd9] sm:$0xff]
      %v267 = vld [vmem:[%s203 + $0xe1] sm:$0xff]
      %v268 = vld [vmem:[%s203 + $0xf1] sm:$0xff]
      %v269 = vld [vmem:[%s203 + $0xf9] sm:$0xff]
      %v270 = vld [vmem:[%s203 + $0x109] sm:$0xff]
      %v271 = vld [vmem:[%s203 + $0x111] sm:$0xff]
      %v272 = vld [vmem:[%s203 + $0x121] sm:$0xff]
      %v273 = vld [vmem:[%s203 + $0x129] sm:$0xff]
      %v274 = vld [vmem:[%s203 + $0x139] sm:$0xff]
      %v275 = vld [vmem:[%s203 + $0x141] sm:$0xff]
      %v276 = vld [vmem:[%s203 + $0x151] sm:$0xff]
      %v277 = vld [vmem:[%s203 + $0x159] sm:$0xff]
      %v278 = vld [vmem:[%s203 + $0x169] sm:$0xff]
      %v279 = vld [vmem:[%s203 + $0x171] sm:$0xff]
      %s280 = scalar_lea.vmem %s1, 4
      %v281 = vld [vmem:[%s280] sm:$0xf]
      %vm282 = vcmask 31744
      %v284 = vsel %vm282, %v248, 0
      %v287 = vsel %vm282, %v249, 0
      %v290 = vsel %vm282, %v250, 0
      %v293 = vsel %vm282, %v251, 0
      %v296 = vsel %vm282, %v252, 0
      %v299 = vsel %vm282, %v253, 0
      %v302 = vsel %vm282, %v254, 0
      %v305 = vsel %vm282, %v255, 0
      %v308 = vsel %vm282, %v256, 0
      %v311 = vsel %vm282, %v257, 0
      %v314 = vsel %vm282, %v258, 0
      %v317 = vsel %vm282, %v259, 0
      %v320 = vsel %vm282, %v260, 0
      %v323 = vsel %vm282, %v261, 0
      %v326 = vsel %vm282, %v262, 0
      %v329 = vsel %vm282, %v263, 0
      %v332 = vsel %vm282, %v264, 0
      %v335 = vsel %vm282, %v265, 0
      %v338 = vsel %vm282, %v266, 0
      %v341 = vsel %vm282, %v267, 0
      %v344 = vsel %vm282, %v268, 0
      %v347 = vsel %vm282, %v269, 0
      %v350 = vsel %vm282, %v270, 0
      %v353 = vsel %vm282, %v271, 0
      %v356 = vsel %vm282, %v272, 0
      %v359 = vsel %vm282, %v273, 0
      %v362 = vsel %vm282, %v274, 0
      %v365 = vsel %vm282, %v275, 0
      %v368 = vsel %vm282, %v276, 0
      %v371 = vsel %vm282, %v277, 0
      %v374 = vsel %vm282, %v278, 0
      %v377 = vsel %vm282, %v279, 0
      %vm379 = vcmask 1043456
      %v381 = vsel %vm379, %v281, 0
      %383 = vmatprep.subr.mxu0 0.0
      %384 = vmatpush1.msra.mxu0 %v381
      %385 = vmatprep.subr.mxu0 0.0
      %386 = vmatpush1.msra.mxu0 0.0
      %387 = vmatprep.subr.mxu0 0.0
      %388 = vmatpush1.msra.mxu0 0.0
      %389 = vmatprep.subr.mxu0 0.0
      %390 = vmatpush1.msra.mxu0 0.0
      %391 = vmatprep.subr.mxu0 0.0
      %392 = vmatpush1.msra.mxu0 0.0
      %393 = vmatprep.subr.mxu0 0.0
      %394 = vmatpush1.msra.mxu0 0.0
      %395 = vmatprep.subr.mxu0 0.0
      %396 = vmatpush1.msra.mxu0 0.0
      %397 = vmatprep.subr.mxu0 0.0
      %398 = vmatpush1.msra.mxu0 0.0
      %399 = vmatprep.subr.mxu0 0.0
      %400 = vmatpush1.msra.mxu0 0.0
      %401 = vmatprep.subr.mxu0 0.0
      %402 = vmatpush1.msra.mxu0 0.0
      %403 = vmatprep.subr.mxu0 0.0
      %404 = vmatpush1.msra.mxu0 0.0
      %405 = vmatprep.subr.mxu0 0.0
      %406 = vmatpush1.msra.mxu0 0.0
      %407 = vmatprep.subr.mxu0 0.0
      %408 = vmatpush1.msra.mxu0 0.0
      %409 = vmatprep.subr.mxu0 0.0
      %410 = vmatpush1.msra.mxu0 0.0
      %411 = vmatprep.subr.mxu0 0.0
      %412 = vmatpush1.msra.mxu0 0.0
      %413 = vmatprep.subr.mxu0 0.0
      %414 = vmatpush1.msra.mxu0 0.0
      %415 = vmatprep.subr.mxu0 0.0
      %416 = vmatpush1.msra.mxu0 0.0
      %417 = vmatprep.subr.mxu0 0.0
      %418 = vmatpush1.msra.mxu0 0.0
      %419 = vmatprep.subr.mxu0 0.0
      %420 = vmatpush1.msra.mxu0 0.0
      %421 = vmatprep.subr.mxu0 0.0
      %422 = vmatpush1.msra.mxu0 0.0
      %423 = vmatprep.subr.mxu0 0.0
      %424 = vmatpush1.msra.mxu0 0.0
      %425 = vmatprep.subr.mxu0 0.0
      %426 = vmatpush1.msra.mxu0 0.0
      %427 = vmatprep.subr.mxu0 0.0
      %428 = vmatpush1.msra.mxu0 0.0
      %429 = vmatprep.subr.mxu0 0.0
      %430 = vmatpush1.msra.mxu0 0.0
      %431 = vmatprep.subr.mxu0 0.0
      %432 = vmatpush1.msra.mxu0 0.0
      %433 = vmatprep.subr.mxu0 0.0
      %434 = vmatpush1.msra.mxu0 0.0
      %435 = vmatprep.subr.mxu0 0.0
      %436 = vmatpush1.msra.mxu0 0.0
      %437 = vmatprep.subr.mxu0 0.0
      %438 = vmatpush1.msra.mxu0 0.0
      %439 = vmatprep.subr.mxu0 0.0
      %440 = vmatpush1.msra.mxu0 0.0
      %441 = vmatprep.subr.mxu0 0.0
      %442 = vmatpush1.msra.mxu0 0.0
      %443 = vmatprep.subr.mxu0 0.0
      %444 = vmatpush1.msra.mxu0 0.0
      %445 = vmatprep.subr.mxu0 0.0
      %446 = vmatpush1.msra.mxu0 0.0
      %447 = vmatprep.mubr.f32.mxu0 0.0
      %448 = vmatmul.mubr.f32.gmra.mrb[0].mxu0 %v284
      %v449 = vpop.f32.mrb[0].mxu0
      %v450 = vadd.f32 0.0, %v449
      %v451 = vpop.f32.mrb[0].mxu0
      %452 = vmatprep.mubr.f32.mxu0 0.0
      %453 = vmatmul.mubr.f32.gmra.mrb[0].mxu0 %v287
      %v454 = vpop.f32.mrb[0].mxu0
      %v455 = vadd.f32 0.0, %v454
      %v456 = vpop.f32.mrb[0].mxu0
      %457 = vmatprep.mubr.f32.mxu0 0.0
      %458 = vmatmul.mubr.f32.gmra.mrb[0].mxu0 %v290
      %v459 = vpop.f32.mrb[0].mxu0
      %v460 = vadd.f32 0.0, %v459
      %v461 = vpop.f32.mrb[0].mxu0
      %462 = vmatprep.mubr.f32.mxu0 0.0
      %463 = vmatmul.mubr.f32.gmra.mrb[0].mxu0 %v293
      %v464 = vpop.f32.mrb[0].mxu0
      %v465 = vadd.f32 0.0, %v464
      %v466 = vpop.f32.mrb[0].mxu0
      %467 = vmatprep.mubr.f32.mxu0 0.0
      %468 = vmatmul.mubr.f32.gmra.mrb[0].mxu0 %v296
      %v469 = vpop.f32.mrb[0].mxu0
      %v470 = vadd.f32 0.0, %v469
      %v471 = vpop.f32.mrb[0].mxu0
      %472 = vmatprep.mubr.f32.mxu0 0.0
      %473 = vmatmul.mubr.f32.gmra.mrb[0].mxu0 %v299
      %v474 = vpop.f32.mrb[0].mxu0
      %v475 = vadd.f32 0.0, %v474
      %v476 = vpop.f32.mrb[0].mxu0
      %477 = vmatprep.mubr.f32.mxu0 0.0
      %478 = vmatmul.mubr.f32.gmra.mrb[0].mxu0 %v302
      %v479 = vpop.f32.mrb[0].mxu0
      %v480 = vadd.f32 0.0, %v479
      %v481 = vpop.f32.mrb[0].mxu0
      %482 = vmatprep.mubr.f32.mxu0 0.0
      %483 = vmatmul.mubr.f32.gmra.mrb[0].mxu0 %v305
      %v484 = vpop.f32.mrb[0].mxu0
      %v485 = vadd.f32 0.0, %v484
      %v486 = vpop.f32.mrb[0].mxu0
      %487 = vmatprep.mubr.f32.mxu0 0.0
      %488 = vmatmul.mubr.f32.gmra.mrb[0].mxu0 %v308
      %v489 = vpop.f32.mrb[0].mxu0
      %v490 = vadd.f32 0.0, %v489
      %v491 = vpop.f32.mrb[0].mxu0
      %492 = vmatprep.mubr.f32.mxu0 0.0
      %493 = vmatmul.mubr.f32.gmra.mrb[0].mxu0 %v311
      %v494 = vpop.f32.mrb[0].mxu0
      %v495 = vadd.f32 0.0, %v494
      %v496 = vpop.f32.mrb[0].mxu0
      %497 = vmatprep.mubr.f32.mxu0 0.0
      %498 = vmatmul.mubr.f32.gmra.mrb[0].mxu0 %v314
      %v499 = vpop.f32.mrb[0].mxu0
      %v500 = vadd.f32 0.0, %v499
      %v501 = vpop.f32.mrb[0].mxu0
      %502 = vmatprep.mubr.f32.mxu0 0.0
      %503 = vmatmul.mubr.f32.gmra.mrb[0].mxu0 %v317
      %v504 = vpop.f32.mrb[0].mxu0
      %v505 = vadd.f32 0.0, %v504
      %v506 = vpop.f32.mrb[0].mxu0
      %507 = vmatprep.mubr.f32.mxu0 0.0
      %508 = vmatmul.mubr.f32.gmra.mrb[0].mxu0 %v320
      %v509 = vpop.f32.mrb[0].mxu0
      %v510 = vadd.f32 0.0, %v509
      %v511 = vpop.f32.mrb[0].mxu0
      %512 = vmatprep.mubr.f32.mxu0 0.0
      %513 = vmatmul.mubr.f32.gmra.mrb[0].mxu0 %v323
      %v514 = vpop.f32.mrb[0].mxu0
      %v515 = vadd.f32 0.0, %v514
      %v516 = vpop.f32.mrb[0].mxu0
      %517 = vmatprep.mubr.f32.mxu0 0.0
      %518 = vmatmul.mubr.f32.gmra.mrb[0].mxu0 %v326
      %v519 = vpop.f32.mrb[0].mxu0
      %v520 = vadd.f32 0.0, %v519
      %v521 = vpop.f32.mrb[0].mxu0
      %522 = vmatprep.mubr.f32.mxu0 0.0
      %523 = vmatmul.mubr.f32.gmra.mrb[0].mxu0 %v329
      %v524 = vpop.f32.mrb[0].mxu0
      %v525 = vadd.f32 0.0, %v524
      %v526 = vpop.f32.mrb[0].mxu0
      %527 = vmatprep.mubr.f32.mxu0 0.0
      %528 = vmatmul.mubr.f32.gmra.mrb[0].mxu0 %v332
      %v529 = vpop.f32.mrb[0].mxu0
      %v530 = vadd.f32 0.0, %v529
      %v531 = vpop.f32.mrb[0].mxu0
      %532 = vmatprep.mubr.f32.mxu0 0.0
      %533 = vmatmul.mubr.f32.gmra.mrb[0].mxu0 %v335
      %v534 = vpop.f32.mrb[0].mxu0
      %v535 = vadd.f32 0.0, %v534
      %v536 = vpop.f32.mrb[0].mxu0
      %537 = vmatprep.mubr.f32.mxu0 0.0
      %538 = vmatmul.mubr.f32.gmra.mrb[0].mxu0 %v338
      %v539 = vpop.f32.mrb[0].mxu0
      %v540 = vadd.f32 0.0, %v539
      %v541 = vpop.f32.mrb[0].mxu0
      %542 = vmatprep.mubr.f32.mxu0 0.0
      %543 = vmatmul.mubr.f32.gmra.mrb[0].mxu0 %v341
      %v544 = vpop.f32.mrb[0].mxu0
      %v545 = vadd.f32 0.0, %v544
      %v546 = vpop.f32.mrb[0].mxu0
      %547 = vmatprep.mubr.f32.mxu0 0.0
      %548 = vmatmul.mubr.f32.gmra.mrb[0].mxu0 %v344
      %v549 = vpop.f32.mrb[0].mxu0
      %v550 = vadd.f32 0.0, %v549
      %v551 = vpop.f32.mrb[0].mxu0
      %552 = vmatprep.mubr.f32.mxu0 0.0
      %553 = vmatmul.mubr.f32.gmra.mrb[0].mxu0 %v347
      %v554 = vpop.f32.mrb[0].mxu0
      %v555 = vadd.f32 0.0, %v554
      %v556 = vpop.f32.mrb[0].mxu0
      %557 = vmatprep.mubr.f32.mxu0 0.0
      %558 = vmatmul.mubr.f32.gmra.mrb[0].mxu0 %v350
      %v559 = vpop.f32.mrb[0].mxu0
      %v560 = vadd.f32 0.0, %v559
      %v561 = vpop.f32.mrb[0].mxu0
      %562 = vmatprep.mubr.f32.mxu0 0.0
      %563 = vmatmul.mubr.f32.gmra.mrb[0].mxu0 %v353
      %v564 = vpop.f32.mrb[0].mxu0
      %v565 = vadd.f32 0.0, %v564
      %v566 = vpop.f32.mrb[0].mxu0
      %567 = vmatprep.mubr.f32.mxu0 0.0
      %568 = vmatmul.mubr.f32.gmra.mrb[0].mxu0 %v356
      %v569 = vpop.f32.mrb[0].mxu0
      %v570 = vadd.f32 0.0, %v569
      %v571 = vpop.f32.mrb[0].mxu0
      %572 = vmatprep.mubr.f32.mxu0 0.0
      %573 = vmatmul.mubr.f32.gmra.mrb[0].mxu0 %v359
      %v574 = vpop.f32.mrb[0].mxu0
      %v575 = vadd.f32 0.0, %v574
      %v576 = vpop.f32.mrb[0].mxu0
      %577 = vmatprep.mubr.f32.mxu0 0.0
      %578 = vmatmul.mubr.f32.gmra.mrb[0].mxu0 %v362
      %v579 = vpop.f32.mrb[0].mxu0
      %v580 = vadd.f32 0.0, %v579
      %v581 = vpop.f32.mrb[0].mxu0
      %582 = vmatprep.mubr.f32.mxu0 0.0
      %583 = vmatmul.mubr.f32.gmra.mrb[0].mxu0 %v365
      %v584 = vpop.f32.mrb[0].mxu0
      %v585 = vadd.f32 0.0, %v584
      %v586 = vpop.f32.mrb[0].mxu0
      %587 = vmatprep.mubr.f32.mxu0 0.0
      %588 = vmatmul.mubr.f32.gmra.mrb[0].mxu0 %v368
      %v589 = vpop.f32.mrb[0].mxu0
      %v590 = vadd.f32 0.0, %v589
      %v591 = vpop.f32.mrb[0].mxu0
      %592 = vmatprep.mubr.f32.mxu0 0.0
      %593 = vmatmul.mubr.f32.gmra.mrb[0].mxu0 %v371
      %v594 = vpop.f32.mrb[0].mxu0
      %v595 = vadd.f32 0.0, %v594
      %v596 = vpop.f32.mrb[0].mxu0
      %597 = vmatprep.mubr.f32.mxu0 0.0
      %598 = vmatmul.mubr.f32.gmra.mrb[0].mxu0 %v374
      %v599 = vpop.f32.mrb[0].mxu0
      %v600 = vadd.f32 0.0, %v599
      %v601 = vpop.f32.mrb[0].mxu0
      %602 = vmatprep.mubr.f32.mxu0 0.0
      %603 = vmatmul.mubr.f32.gmra.mrb[0].mxu0 %v377
      %v604 = vpop.f32.mrb[0].mxu0
      %v605 = vadd.f32 0.0, %v604
      %v606 = vpop.f32.mrb[0].mxu0
      %607 = vdwg.mxu0
      %v609 = vsel %vm282, %v215, 0
      %v612 = vsel %vm282, %v216, 0
      %v615 = vsel %vm282, %v217, 0
      %v618 = vsel %vm282, %v218, 0
      %v621 = vsel %vm282, %v219, 0
      %v624 = vsel %vm282, %v220, 0
      %v627 = vsel %vm282, %v221, 0
      %v630 = vsel %vm282, %v222, 0
      %v633 = vsel %vm282, %v223, 0
      %v636 = vsel %vm282, %v224, 0
      %v639 = vsel %vm282, %v225, 0
      %v642 = vsel %vm282, %v226, 0
      %v645 = vsel %vm282, %v227, 0
      %v648 = vsel %vm282, %v228, 0
      %v651 = vsel %vm282, %v229, 0
      %v654 = vsel %vm282, %v230, 0
      %v657 = vsel %vm282, %v231, 0
      %v660 = vsel %vm282, %v232, 0
      %v663 = vsel %vm282, %v233, 0
      %v666 = vsel %vm282, %v234, 0
      %v669 = vsel %vm282, %v235, 0
      %v672 = vsel %vm282, %v236, 0
      %v675 = vsel %vm282, %v237, 0
      %v678 = vsel %vm282, %v238, 0
      %v681 = vsel %vm282, %v239, 0
      %v684 = vsel %vm282, %v240, 0
      %v687 = vsel %vm282, %v241, 0
      %v690 = vsel %vm282, %v242, 0
      %v693 = vsel %vm282, %v243, 0
      %v696 = vsel %vm282, %v244, 0
      %v699 = vsel %vm282, %v245, 0
      %v702 = vsel %vm282, %v246, 0
      %v705 = vsel %vm379, %v247, 0
      %707 = vmatprep.subr.mxu0 0.0
      %708 = vmatpush1.msra.mxu0 %v705
      %709 = vmatprep.subr.mxu0 0.0
      %710 = vmatpush1.msra.mxu0 0.0
      %711 = vmatprep.subr.mxu0 0.0
      %712 = vmatpush1.msra.mxu0 0.0
      %713 = vmatprep.subr.mxu0 0.0
      %714 = vmatpush1.msra.mxu0 0.0
      %715 = vmatprep.subr.mxu0 0.0
      %716 = vmatpush1.msra.mxu0 0.0
      %717 = vmatprep.subr.mxu0 0.0
      %718 = vmatpush1.msra.mxu0 0.0
      %719 = vmatprep.subr.mxu0 0.0
      %720 = vmatpush1.msra.mxu0 0.0
      %721 = vmatprep.subr.mxu0 0.0
      %722 = vmatpush1.msra.mxu0 0.0
      %723 = vmatprep.subr.mxu0 0.0
      %724 = vmatpush1.msra.mxu0 0.0
      %725 = vmatprep.subr.mxu0 0.0
      %726 = vmatpush1.msra.mxu0 0.0
      %727 = vmatprep.subr.mxu0 0.0
      %728 = vmatpush1.msra.mxu0 0.0
      %729 = vmatprep.subr.mxu0 0.0
      %730 = vmatpush1.msra.mxu0 0.0
      %731 = vmatprep.subr.mxu0 0.0
      %732 = vmatpush1.msra.mxu0 0.0
      %733 = vmatprep.subr.mxu0 0.0
      %734 = vmatpush1.msra.mxu0 0.0
      %735 = vmatprep.subr.mxu0 0.0
      %736 = vmatpush1.msra.mxu0 0.0
      %737 = vmatprep.subr.mxu0 0.0
      %738 = vmatpush1.msra.mxu0 0.0
      %739 = vmatprep.subr.mxu0 0.0
      %740 = vmatpush1.msra.mxu0 0.0
      %741 = vmatprep.subr.mxu0 0.0
      %742 = vmatpush1.msra.mxu0 0.0
      %743 = vmatprep.subr.mxu0 0.0
      %744 = vmatpush1.msra.mxu0 0.0
      %745 = vmatprep.subr.mxu0 0.0
      %746 = vmatpush1.msra.mxu0 0.0
      %747 = vmatprep.subr.mxu0 0.0
      %748 = vmatpush1.msra.mxu0 0.0
      %749 = vmatprep.subr.mxu0 0.0
      %750 = vmatpush1.msra.mxu0 0.0
      %751 = vmatprep.subr.mxu0 0.0
      %752 = vmatpush1.msra.mxu0 0.0
      %753 = vmatprep.subr.mxu0 0.0
      %754 = vmatpush1.msra.mxu0 0.0
      %755 = vmatprep.subr.mxu0 0.0
      %756 = vmatpush1.msra.mxu0 0.0
      %757 = vmatprep.subr.mxu0 0.0
      %758 = vmatpush1.msra.mxu0 0.0
      %759 = vmatprep.subr.mxu0 0.0
      %760 = vmatpush1.msra.mxu0 0.0
      %761 = vmatprep.subr.mxu0 0.0
      %762 = vmatpush1.msra.mxu0 0.0
      %763 = vmatprep.subr.mxu0 0.0
      %764 = vmatpush1.msra.mxu0 0.0
      %765 = vmatprep.subr.mxu0 0.0
      %766 = vmatpush1.msra.mxu0 0.0
      %767 = vmatprep.subr.mxu0 0.0
      %768 = vmatpush1.msra.mxu0 0.0
      %769 = vmatprep.subr.mxu0 0.0
      %770 = vmatpush1.msra.mxu0 0.0
      %771 = vmatprep.mubr.f32.mxu0 0.0
      %772 = vmatmul.mubr.f32.gmra.mrb[0].mxu0 %v609
      %v773 = vpop.f32.mrb[0].mxu0
      %v774 = vadd.f32 %v450, %v773
      %v775 = vpop.f32.mrb[0].mxu0
      %776 = vmatprep.mubr.f32.mxu0 0.0
      %777 = vmatmul.mubr.f32.gmra.mrb[0].mxu0 %v612
      %v778 = vpop.f32.mrb[0].mxu0
      %v779 = vadd.f32 %v455, %v778
      %v780 = vpop.f32.mrb[0].mxu0
      %781 = vmatprep.mubr.f32.mxu0 0.0
      %782 = vmatmul.mubr.f32.gmra.mrb[0].mxu0 %v615
      %v783 = vpop.f32.mrb[0].mxu0
      %v784 = vadd.f32 %v460, %v783
      %v785 = vpop.f32.mrb[0].mxu0
      %786 = vmatprep.mubr.f32.mxu0 0.0
      %787 = vmatmul.mubr.f32.gmra.mrb[0].mxu0 %v618
      %v788 = vpop.f32.mrb[0].mxu0
      %v789 = vadd.f32 %v465, %v788
      %v790 = vpop.f32.mrb[0].mxu0
      %791 = vmatprep.mubr.f32.mxu0 0.0
      %792 = vmatmul.mubr.f32.gmra.mrb[0].mxu0 %v621
      %v793 = vpop.f32.mrb[0].mxu0
      %v794 = vadd.f32 %v470, %v793
      %v795 = vpop.f32.mrb[0].mxu0
      %796 = vmatprep.mubr.f32.mxu0 0.0
      %797 = vmatmul.mubr.f32.gmra.mrb[0].mxu0 %v624
      %v798 = vpop.f32.mrb[0].mxu0
      %v799 = vadd.f32 %v475, %v798
      %v800 = vpop.f32.mrb[0].mxu0
      %801 = vmatprep.mubr.f32.mxu0 0.0
      %802 = vmatmul.mubr.f32.gmra.mrb[0].mxu0 %v627
      %v803 = vpop.f32.mrb[0].mxu0
      %v804 = vadd.f32 %v480, %v803
      %v805 = vpop.f32.mrb[0].mxu0
      %806 = vmatprep.mubr.f32.mxu0 0.0
      %807 = vmatmul.mubr.f32.gmra.mrb[0].mxu0 %v630
      %v808 = vpop.f32.mrb[0].mxu0
      %v809 = vadd.f32 %v485, %v808
      %v810 = vpop.f32.mrb[0].mxu0
      %811 = vmatprep.mubr.f32.mxu0 0.0
      %812 = vmatmul.mubr.f32.gmra.mrb[0].mxu0 %v633
      %v813 = vpop.f32.mrb[0].mxu0
      %v814 = vadd.f32 %v490, %v813
      %v815 = vpop.f32.mrb[0].mxu0
      %816 = vmatprep.mubr.f32.mxu0 0.0
      %817 = vmatmul.mubr.f32.gmra.mrb[0].mxu0 %v636
      %v818 = vpop.f32.mrb[0].mxu0
      %v819 = vadd.f32 %v495, %v818
      %v820 = vpop.f32.mrb[0].mxu0
      %821 = vmatprep.mubr.f32.mxu0 0.0
      %822 = vmatmul.mubr.f32.gmra.mrb[0].mxu0 %v639
      %v823 = vpop.f32.mrb[0].mxu0
      %v824 = vadd.f32 %v500, %v823
      %v825 = vpop.f32.mrb[0].mxu0
      %826 = vmatprep.mubr.f32.mxu0 0.0
      %827 = vmatmul.mubr.f32.gmra.mrb[0].mxu0 %v642
      %v828 = vpop.f32.mrb[0].mxu0
      %v829 = vadd.f32 %v505, %v828
      %v830 = vpop.f32.mrb[0].mxu0
      %831 = vmatprep.mubr.f32.mxu0 0.0
      %832 = vmatmul.mubr.f32.gmra.mrb[0].mxu0 %v645
      %v833 = vpop.f32.mrb[0].mxu0
      %v834 = vadd.f32 %v510, %v833
      %v835 = vpop.f32.mrb[0].mxu0
      %836 = vmatprep.mubr.f32.mxu0 0.0
      %837 = vmatmul.mubr.f32.gmra.mrb[0].mxu0 %v648
      %v838 = vpop.f32.mrb[0].mxu0
      %v839 = vadd.f32 %v515, %v838
      %v840 = vpop.f32.mrb[0].mxu0
      %841 = vmatprep.mubr.f32.mxu0 0.0
      %842 = vmatmul.mubr.f32.gmra.mrb[0].mxu0 %v651
      %v843 = vpop.f32.mrb[0].mxu0
      %v844 = vadd.f32 %v520, %v843
      %v845 = vpop.f32.mrb[0].mxu0
      %846 = vmatprep.mubr.f32.mxu0 0.0
      %847 = vmatmul.mubr.f32.gmra.mrb[0].mxu0 %v654
      %v848 = vpop.f32.mrb[0].mxu0
      %v849 = vadd.f32 %v525, %v848
      %v850 = vpop.f32.mrb[0].mxu0
      %851 = vmatprep.mubr.f32.mxu0 0.0
      %852 = vmatmul.mubr.f32.gmra.mrb[0].mxu0 %v657
      %v853 = vpop.f32.mrb[0].mxu0
      %v854 = vadd.f32 %v530, %v853
      %v855 = vpop.f32.mrb[0].mxu0
      %856 = vmatprep.mubr.f32.mxu0 0.0
      %857 = vmatmul.mubr.f32.gmra.mrb[0].mxu0 %v660
      %v858 = vpop.f32.mrb[0].mxu0
      %v859 = vadd.f32 %v535, %v858
      %v860 = vpop.f32.mrb[0].mxu0
      %861 = vmatprep.mubr.f32.mxu0 0.0
      %862 = vmatmul.mubr.f32.gmra.mrb[0].mxu0 %v663
      %v863 = vpop.f32.mrb[0].mxu0
      %v864 = vadd.f32 %v540, %v863
      %v865 = vpop.f32.mrb[0].mxu0
      %866 = vmatprep.mubr.f32.mxu0 0.0
      %867 = vmatmul.mubr.f32.gmra.mrb[0].mxu0 %v666
      %v868 = vpop.f32.mrb[0].mxu0
      %v869 = vadd.f32 %v545, %v868
      %v870 = vpop.f32.mrb[0].mxu0
      %871 = vmatprep.mubr.f32.mxu0 0.0
      %872 = vmatmul.mubr.f32.gmra.mrb[0].mxu0 %v669
      %v873 = vpop.f32.mrb[0].mxu0
      %v874 = vadd.f32 %v550, %v873
      %v875 = vpop.f32.mrb[0].mxu0
      %876 = vmatprep.mubr.f32.mxu0 0.0
      %877 = vmatmul.mubr.f32.gmra.mrb[0].mxu0 %v672
      %v878 = vpop.f32.mrb[0].mxu0
      %v879 = vadd.f32 %v555, %v878
      %v880 = vpop.f32.mrb[0].mxu0
      %881 = vmatprep.mubr.f32.mxu0 0.0
      %882 = vmatmul.mubr.f32.gmra.mrb[0].mxu0 %v675
      %v883 = vpop.f32.mrb[0].mxu0
      %v884 = vadd.f32 %v560, %v883
      %v885 = vpop.f32.mrb[0].mxu0
      %886 = vmatprep.mubr.f32.mxu0 0.0
      %887 = vmatmul.mubr.f32.gmra.mrb[0].mxu0 %v678
      %v888 = vpop.f32.mrb[0].mxu0
      %v889 = vadd.f32 %v565, %v888
      %v890 = vpop.f32.mrb[0].mxu0
      %891 = vmatprep.mubr.f32.mxu0 0.0
      %892 = vmatmul.mubr.f32.gmra.mrb[0].mxu0 %v681
      %v893 = vpop.f32.mrb[0].mxu0
      %v894 = vadd.f32 %v570, %v893
      %v895 = vpop.f32.mrb[0].mxu0
      %896 = vmatprep.mubr.f32.mxu0 0.0
      %897 = vmatmul.mubr.f32.gmra.mrb[0].mxu0 %v684
      %v898 = vpop.f32.mrb[0].mxu0
      %v899 = vadd.f32 %v575, %v898
      %v900 = vpop.f32.mrb[0].mxu0
      %901 = vmatprep.mubr.f32.mxu0 0.0
      %902 = vmatmul.mubr.f32.gmra.mrb[0].mxu0 %v687
      %v903 = vpop.f32.mrb[0].mxu0
      %v904 = vadd.f32 %v580, %v903
      %v905 = vpop.f32.mrb[0].mxu0
      %906 = vmatprep.mubr.f32.mxu0 0.0
      %907 = vmatmul.mubr.f32.gmra.mrb[0].mxu0 %v690
      %v908 = vpop.f32.mrb[0].mxu0
      %v909 = vadd.f32 %v585, %v908
      %v910 = vpop.f32.mrb[0].mxu0
      %911 = vmatprep.mubr.f32.mxu0 0.0
      %912 = vmatmul.mubr.f32.gmra.mrb[0].mxu0 %v693
      %v913 = vpop.f32.mrb[0].mxu0
      %v914 = vadd.f32 %v590, %v913
      %v915 = vpop.f32.mrb[0].mxu0
      %916 = vmatprep.mubr.f32.mxu0 0.0
      %917 = vmatmul.mubr.f32.gmra.mrb[0].mxu0 %v696
      %v918 = vpop.f32.mrb[0].mxu0
      %v919 = vadd.f32 %v595, %v918
      %v920 = vpop.f32.mrb[0].mxu0
      %921 = vmatprep.mubr.f32.mxu0 0.0
      %922 = vmatmul.mubr.f32.gmra.mrb[0].mxu0 %v699
      %v923 = vpop.f32.mrb[0].mxu0
      %v924 = vadd.f32 %v600, %v923
      %v925 = vpop.f32.mrb[0].mxu0
      %926 = vmatprep.mubr.f32.mxu0 0.0
      %927 = vmatmul.mubr.f32.gmra.mrb[0].mxu0 %v702
      %v928 = vpop.f32.mrb[0].mxu0
      %v929 = vadd.f32 %v605, %v928
      %v930 = vpop.f32.mrb[0].mxu0
      %931 = vdwg.mxu0
      %v932 = vld [vmem:[%s203 + $0x2] sm:$0xff]
      %v933 = vld [vmem:[%s203 + $0xa] sm:$0xff]
      %v934 = vld [vmem:[%s203 + $0x1a] sm:$0xff]
      %v935 = vld [vmem:[%s203 + $0x22] sm:$0xff]
      %v936 = vld [vmem:[%s203 + $0x32] sm:$0xff]
      %v937 = vld [vmem:[%s203 + $0x3a] sm:$0xff]
      %v938 = vld [vmem:[%s203 + $0x4a] sm:$0xff]
      %v939 = vld [vmem:[%s203 + $0x52] sm:$0xff]
      %v940 = vld [vmem:[%s203 + $0x62] sm:$0xff]
      %v941 = vld [vmem:[%s203 + $0x6a] sm:$0xff]
      %v942 = vld [vmem:[%s203 + $0x7a] sm:$0xff]
      %v943 = vld [vmem:[%s203 + $0x82] sm:$0xff]
      %v944 = vld [vmem:[%s203 + $0x92] sm:$0xff]
      %v945 = vld [vmem:[%s203 + $0x9a] sm:$0xff]
      %v946 = vld [vmem:[%s203 + $0xaa] sm:$0xff]
      %v947 = vld [vmem:[%s203 + $0xb2] sm:$0xff]
      %v948 = vld [vmem:[%s203 + $0xc2] sm:$0xff]
      %v949 = vld [vmem:[%s203 + $0xca] sm:$0xff]
      %v950 = vld [vmem:[%s203 + $0xda] sm:$0xff]
      %v951 = vld [vmem:[%s203 + $0xe2] sm:$0xff]
      %v952 = vld [vmem:[%s203 + $0xf2] sm:$0xff]
      %v953 = vld [vmem:[%s203 + $0xfa] sm:$0xff]
      %v954 = vld [vmem:[%s203 + $0x10a] sm:$0xff]
      %v955 = vld [vmem:[%s203 + $0x112] sm:$0xff]
      %v956 = vld [vmem:[%s203 + $0x122] sm:$0xff]
      %v957 = vld [vmem:[%s203 + $0x12a] sm:$0xff]
      %v958 = vld [vmem:[%s203 + $0x13a] sm:$0xff]
      %v959 = vld [vmem:[%s203 + $0x142] sm:$0xff]
      %v960 = vld [vmem:[%s203 + $0x152] sm:$0xff]
      %v961 = vld [vmem:[%s203 + $0x15a] sm:$0xff]
      %v962 = vld [vmem:[%s203 + $0x16a] sm:$0xff]
      %v963 = vld [vmem:[%s203 + $0x172] sm:$0xff]
      %s964 = scalar_lea.vmem %s1, 8
      %v965 = vld [vmem:[%s964] sm:$0xf]
      %v967 = vsel %vm282, %v932, 0
      %v970 = vsel %vm282, %v933, 0
      %v973 = vsel %vm282, %v934, 0
      %v976 = vsel %vm282, %v935, 0
      %v979 = vsel %vm282, %v936, 0
      %v982 = vsel %vm282, %v937, 0
      %v985 = vsel %vm282, %v938, 0
      %v988 = vsel %vm282, %v939, 0
      %v991 = vsel %vm282, %v940, 0
      %v994 = vsel %vm282, %v941, 0
      %v997 = vsel %vm282, %v942, 0
      %v1000 = vsel %vm282, %v943, 0
      %v1003 = vsel %vm282, %v944, 0
      %v1006 = vsel %vm282, %v945, 0
      %v1009 = vsel %vm282, %v946, 0
      %v1012 = vsel %vm282, %v947, 0
      %v1015 = vsel %vm282, %v948, 0
      %v1018 = vsel %vm282, %v949, 0
      %v1021 = vsel %vm282, %v950, 0
      %v1024 = vsel %vm282, %v951, 0
      %v1027 = vsel %vm282, %v952, 0
      %v1030 = vsel %vm282, %v953, 0
      %v1033 = vsel %vm282, %v954, 0
      %v1036 = vsel %vm282, %v955, 0
      %v1039 = vsel %vm282, %v956, 0
      %v1042 = vsel %vm282, %v957, 0
      %v1045 = vsel %vm282, %v958, 0
      %v1048 = vsel %vm282, %v959, 0
      %v1051 = vsel %vm282, %v960, 0
      %v1054 = vsel %vm282, %v961, 0
      %v1057 = vsel %vm282, %v962, 0
      %v1060 = vsel %vm282, %v963, 0
      %v1063 = vsel %vm379, %v965, 0
      %1065 = vmatprep.subr.mxu0 0.0
      %1066 = vmatpush1.msra.mxu0 %v1063
      %1067 = vmatprep.subr.mxu0 0.0
      %1068 = vmatpush1.msra.mxu0 0.0
      %1069 = vmatprep.subr.mxu0 0.0
      %1070 = vmatpush1.msra.mxu0 0.0
      %1071 = vmatprep.subr.mxu0 0.0
      %1072 = vmatpush1.msra.mxu0 0.0
      %1073 = vmatprep.subr.mxu0 0.0
      %1074 = vmatpush1.msra.mxu0 0.0
      %1075 = vmatprep.subr.mxu0 0.0
      %1076 = vmatpush1.msra.mxu0 0.0
      %1077 = vmatprep.subr.mxu0 0.0
      %1078 = vmatpush1.msra.mxu0 0.0
      %1079 = vmatprep.subr.mxu0 0.0
      %1080 = vmatpush1.msra.mxu0 0.0
      %1081 = vmatprep.subr.mxu0 0.0
      %1082 = vmatpush1.msra.mxu0 0.0
      %1083 = vmatprep.subr.mxu0 0.0
      %1084 = vmatpush1.msra.mxu0 0.0
      %1085 = vmatprep.subr.mxu0 0.0
      %1086 = vmatpush1.msra.mxu0 0.0
      %1087 = vmatprep.subr.mxu0 0.0
      %1088 = vmatpush1.msra.mxu0 0.0
      %1089 = vmatprep.subr.mxu0 0.0
      %1090 = vmatpush1.msra.mxu0 0.0
      %1091 = vmatprep.subr.mxu0 0.0
      %1092 = vmatpush1.msra.mxu0 0.0
      %1093 = vmatprep.subr.mxu0 0.0
      %1094 = vmatpush1.msra.mxu0 0.0
      %1095 = vmatprep.subr.mxu0 0.0
      %1096 = vmatpush1.msra.mxu0 0.0
      %1097 = vmatprep.subr.mxu0 0.0
      %1098 = vmatpush1.msra.mxu0 0.0
      %1099 = vmatprep.subr.mxu0 0.0
      %1100 = vmatpush1.msra.mxu0 0.0
      %1101 = vmatprep.subr.mxu0 0.0
      %1102 = vmatpush1.msra.mxu0 0.0
      %1103 = vmatprep.subr.mxu0 0.0
      %1104 = vmatpush1.msra.mxu0 0.0
      %1105 = vmatprep.subr.mxu0 0.0
      %1106 = vmatpush1.msra.mxu0 0.0
      %1107 = vmatprep.subr.mxu0 0.0
      %1108 = vmatpush1.msra.mxu0 0.0
      %1109 = vmatprep.subr.mxu0 0.0
      %1110 = vmatpush1.msra.mxu0 0.0
      %1111 = vmatprep.subr.mxu0 0.0
      %1112 = vmatpush1.msra.mxu0 0.0
      %1113 = vmatprep.subr.mxu0 0.0
      %1114 = vmatpush1.msra.mxu0 0.0
      %1115 = vmatprep.subr.mxu0 0.0
      %1116 = vmatpush1.msra.mxu0 0.0
      %1117 = vmatprep.subr.mxu0 0.0
      %1118 = vmatpush1.msra.mxu0 0.0
      %1119 = vmatprep.subr.mxu0 0.0
      %1120 = vmatpush1.msra.mxu0 0.0
      %1121 = vmatprep.subr.mxu0 0.0
      %1122 = vmatpush1.msra.mxu0 0.0
      %1123 = vmatprep.subr.mxu0 0.0
      %1124 = vmatpush1.msra.mxu0 0.0
      %1125 = vmatprep.subr.mxu0 0.0
      %1126 = vmatpush1.msra.mxu0 0.0
      %1127 = vmatprep.subr.mxu0 0.0
      %1128 = vmatpush1.msra.mxu0 0.0
      %1129 = vmatprep.mubr.f32.mxu0 0.0
      %1130 = vmatmul.mubr.f32.gmra.mrb[0].mxu0 %v967
      %v1131 = vpop.f32.mrb[0].mxu0
      %v1132 = vadd.f32 0.0, %v1131
      %v1133 = vpop.f32.mrb[0].mxu0
      %1134 = vmatprep.mubr.f32.mxu0 0.0
      %1135 = vmatmul.mubr.f32.gmra.mrb[0].mxu0 %v970
      %v1136 = vpop.f32.mrb[0].mxu0
      %v1137 = vadd.f32 0.0, %v1136
      %v1138 = vpop.f32.mrb[0].mxu0
      %1139 = vmatprep.mubr.f32.mxu0 0.0
      %1140 = vmatmul.mubr.f32.gmra.mrb[0].mxu0 %v973
      %v1141 = vpop.f32.mrb[0].mxu0
      %v1142 = vadd.f32 0.0, %v1141
      %v1143 = vpop.f32.mrb[0].mxu0
      %1144 = vmatprep.mubr.f32.mxu0 0.0
      %1145 = vmatmul.mubr.f32.gmra.mrb[0].mxu0 %v976
      %v1146 = vpop.f32.mrb[0].mxu0
      %v1147 = vadd.f32 0.0, %v1146
      %v1148 = vpop.f32.mrb[0].mxu0
      %1149 = vmatprep.mubr.f32.mxu0 0.0
      %1150 = vmatmul.mubr.f32.gmra.mrb[0].mxu0 %v979
      %v1151 = vpop.f32.mrb[0].mxu0
      %v1152 = vadd.f32 0.0, %v1151
      %v1153 = vpop.f32.mrb[0].mxu0
      %1154 = vmatprep.mubr.f32.mxu0 0.0
      %1155 = vmatmul.mubr.f32.gmra.mrb[0].mxu0 %v982
      %v1156 = vpop.f32.mrb[0].mxu0
      %v1157 = vadd.f32 0.0, %v1156
      %v1158 = vpop.f32.mrb[0].mxu0
      %1159 = vmatprep.mubr.f32.mxu0 0.0
      %1160 = vmatmul.mubr.f32.gmra.mrb[0].mxu0 %v985
      %v1161 = vpop.f32.mrb[0].mxu0
      %v1162 = vadd.f32 0.0, %v1161
      %v1163 = vpop.f32.mrb[0].mxu0
      %1164 = vmatprep.mubr.f32.mxu0 0.0
      %1165 = vmatmul.mubr.f32.gmra.mrb[0].mxu0 %v988
      %v1166 = vpop.f32.mrb[0].mxu0
      %v1167 = vadd.f32 0.0, %v1166
      %v1168 = vpop.f32.mrb[0].mxu0
      %1169 = vmatprep.mubr.f32.mxu0 0.0
      %1170 = vmatmul.mubr.f32.gmra.mrb[0].mxu0 %v991
      %v1171 = vpop.f32.mrb[0].mxu0
      %v1172 = vadd.f32 0.0, %v1171
      %v1173 = vpop.f32.mrb[0].mxu0
      %1174 = vmatprep.mubr.f32.mxu0 0.0
      %1175 = vmatmul.mubr.f32.gmra.mrb[0].mxu0 %v994
      %v1176 = vpop.f32.mrb[0].mxu0
      %v1177 = vadd.f32 0.0, %v1176
      %v1178 = vpop.f32.mrb[0].mxu0
      %1179 = vmatprep.mubr.f32.mxu0 0.0
      %1180 = vmatmul.mubr.f32.gmra.mrb[0].mxu0 %v997
      %v1181 = vpop.f32.mrb[0].mxu0
      %v1182 = vadd.f32 0.0, %v1181
      %v1183 = vpop.f32.mrb[0].mxu0
      %1184 = vmatprep.mubr.f32.mxu0 0.0
      %1185 = vmatmul.mubr.f32.gmra.mrb[0].mxu0 %v1000
      %v1186 = vpop.f32.mrb[0].mxu0
      %v1187 = vadd.f32 0.0, %v1186
      %v1188 = vpop.f32.mrb[0].mxu0
      %1189 = vmatprep.mubr.f32.mxu0 0.0
      %1190 = vmatmul.mubr.f32.gmra.mrb[0].mxu0 %v1003
      %v1191 = vpop.f32.mrb[0].mxu0
      %v1192 = vadd.f32 0.0, %v1191
      %v1193 = vpop.f32.mrb[0].mxu0
      %1194 = vmatprep.mubr.f32.mxu0 0.0
      %1195 = vmatmul.mubr.f32.gmra.mrb[0].mxu0 %v1006
      %v1196 = vpop.f32.mrb[0].mxu0
      %v1197 = vadd.f32 0.0, %v1196
      %v1198 = vpop.f32.mrb[0].mxu0
      %1199 = vmatprep.mubr.f32.mxu0 0.0
      %1200 = vmatmul.mubr.f32.gmra.mrb[0].mxu0 %v1009
      %v1201 = vpop.f32.mrb[0].mxu0
      %v1202 = vadd.f32 0.0, %v1201
      %v1203 = vpop.f32.mrb[0].mxu0
      %1204 = vmatprep.mubr.f32.mxu0 0.0
      %1205 = vmatmul.mubr.f32.gmra.mrb[0].mxu0 %v1012
      %v1206 = vpop.f32.mrb[0].mxu0
      %v1207 = vadd.f32 0.0, %v1206
      %v1208 = vpop.f32.mrb[0].mxu0
      %1209 = vmatprep.mubr.f32.mxu0 0.0
      %1210 = vmatmul.mubr.f32.gmra.mrb[0].mxu0 %v1015
      %v1211 = vpop.f32.mrb[0].mxu0
      %v1212 = vadd.f32 0.0, %v1211
      %v1213 = vpop.f32.mrb[0].mxu0
      %1214 = vmatprep.mubr.f32.mxu0 0.0
      %1215 = vmatmul.mubr.f32.gmra.mrb[0].mxu0 %v1018
      %v1216 = vpop.f32.mrb[0].mxu0
      %v1217 = vadd.f32 0.0, %v1216
      %v1218 = vpop.f32.mrb[0].mxu0
      %1219 = vmatprep.mubr.f32.mxu0 0.0
      %1220 = vmatmul.mubr.f32.gmra.mrb[0].mxu0 %v1021
      %v1221 = vpop.f32.mrb[0].mxu0
      %v1222 = vadd.f32 0.0, %v1221
      %v1223 = vpop.f32.mrb[0].mxu0
      %1224 = vmatprep.mubr.f32.mxu0 0.0
      %1225 = vmatmul.mubr.f32.gmra.mrb[0].mxu0 %v1024
      %v1226 = vpop.f32.mrb[0].mxu0
      %v1227 = vadd.f32 0.0, %v1226
      %v1228 = vpop.f32.mrb[0].mxu0
      %1229 = vmatprep.mubr.f32.mxu0 0.0
      %1230 = vmatmul.mubr.f32.gmra.mrb[0].mxu0 %v1027
      %v1231 = vpop.f32.mrb[0].mxu0
      %v1232 = vadd.f32 0.0, %v1231
      %v1233 = vpop.f32.mrb[0].mxu0
      %1234 = vmatprep.mubr.f32.mxu0 0.0
      %1235 = vmatmul.mubr.f32.gmra.mrb[0].mxu0 %v1030
      %v1236 = vpop.f32.mrb[0].mxu0
      %v1237 = vadd.f32 0.0, %v1236
      %v1238 = vpop.f32.mrb[0].mxu0
      %1239 = vmatprep.mubr.f32.mxu0 0.0
      %1240 = vmatmul.mubr.f32.gmra.mrb[0].mxu0 %v1033
      %v1241 = vpop.f32.mrb[0].mxu0
      %v1242 = vadd.f32 0.0, %v1241
      %v1243 = vpop.f32.mrb[0].mxu0
      %1244 = vmatprep.mubr.f32.mxu0 0.0
      %1245 = vmatmul.mubr.f32.gmra.mrb[0].mxu0 %v1036
      %v1246 = vpop.f32.mrb[0].mxu0
      %v1247 = vadd.f32 0.0, %v1246
      %v1248 = vpop.f32.mrb[0].mxu0
      %1249 = vmatprep.mubr.f32.mxu0 0.0
      %1250 = vmatmul.mubr.f32.gmra.mrb[0].mxu0 %v1039
      %v1251 = vpop.f32.mrb[0].mxu0
      %v1252 = vadd.f32 0.0, %v1251
      %v1253 = vpop.f32.mrb[0].mxu0
      %1254 = vmatprep.mubr.f32.mxu0 0.0
      %1255 = vmatmul.mubr.f32.gmra.mrb[0].mxu0 %v1042
      %v1256 = vpop.f32.mrb[0].mxu0
      %v1257 = vadd.f32 0.0, %v1256
      %v1258 = vpop.f32.mrb[0].mxu0
      %1259 = vmatprep.mubr.f32.mxu0 0.0
      %1260 = vmatmul.mubr.f32.gmra.mrb[0].mxu0 %v1045
      %v1261 = vpop.f32.mrb[0].mxu0
      %v1262 = vadd.f32 0.0, %v1261
      %v1263 = vpop.f32.mrb[0].mxu0
      %1264 = vmatprep.mubr.f32.mxu0 0.0
      %1265 = vmatmul.mubr.f32.gmra.mrb[0].mxu0 %v1048
      %v1266 = vpop.f32.mrb[0].mxu0
      %v1267 = vadd.f32 0.0, %v1266
      %v1268 = vpop.f32.mrb[0].mxu0
      %1269 = vmatprep.mubr.f32.mxu0 0.0
      %1270 = vmatmul.mubr.f32.gmra.mrb[0].mxu0 %v1051
      %v1271 = vpop.f32.mrb[0].mxu0
      %v1272 = vadd.f32 0.0, %v1271
      %v1273 = vpop.f32.mrb[0].mxu0
      %1274 = vmatprep.mubr.f32.mxu0 0.0
      %1275 = vmatmul.mubr.f32.gmra.mrb[0].mxu0 %v1054
      %v1276 = vpop.f32.mrb[0].mxu0
      %v1277 = vadd.f32 0.0, %v1276
      %v1278 = vpop.f32.mrb[0].mxu0
      %1279 = vmatprep.mubr.f32.mxu0 0.0
      %1280 = vmatmul.mubr.f32.gmra.mrb[0].mxu0 %v1057
      %v1281 = vpop.f32.mrb[0].mxu0
      %v1282 = vadd.f32 0.0, %v1281
      %v1283 = vpop.f32.mrb[0].mxu0
      %1284 = vmatprep.mubr.f32.mxu0 0.0
      %1285 = vmatmul.mubr.f32.gmra.mrb[0].mxu0 %v1060
      %v1286 = vpop.f32.mrb[0].mxu0
      %v1287 = vadd.f32 0.0, %v1286
      %v1288 = vpop.f32.mrb[0].mxu0
      %1289 = vdwg.mxu0
      %v1290 = vadd.f32 %v774, %v1132
      %v1291 = vadd.f32 %v779, %v1137
      %v1292 = vadd.f32 %v784, %v1142
      %v1293 = vadd.f32 %v789, %v1147
      %v1294 = vadd.f32 %v794, %v1152
      %v1295 = vadd.f32 %v799, %v1157
      %v1296 = vadd.f32 %v804, %v1162
      %v1297 = vadd.f32 %v809, %v1167
      %v1298 = vadd.f32 %v814, %v1172
      %v1299 = vadd.f32 %v819, %v1177
      %v1300 = vadd.f32 %v824, %v1182
      %v1301 = vadd.f32 %v829, %v1187
      %v1302 = vadd.f32 %v834, %v1192
      %v1303 = vadd.f32 %v839, %v1197
      %v1304 = vadd.f32 %v844, %v1202
      %v1305 = vadd.f32 %v849, %v1207
      %v1306 = vadd.f32 %v854, %v1212
      %v1307 = vadd.f32 %v859, %v1217
      %v1308 = vadd.f32 %v864, %v1222
      %v1309 = vadd.f32 %v869, %v1227
      %v1310 = vadd.f32 %v874, %v1232
      %v1311 = vadd.f32 %v879, %v1237
      %v1312 = vadd.f32 %v884, %v1242
      %v1313 = vadd.f32 %v889, %v1247
      %v1314 = vadd.f32 %v894, %v1252
      %v1315 = vadd.f32 %v899, %v1257
      %v1316 = vadd.f32 %v904, %v1262
      %v1317 = vadd.f32 %v909, %v1267
      %v1318 = vadd.f32 %v914, %v1272
      %v1319 = vadd.f32 %v919, %v1277
      %v1320 = vadd.f32 %v924, %v1282
      %v1321 = vadd.f32 %v929, %v1287
      %s1322 = scalar_lea.vmem %s203, 24
      %v1323 = vld [vmem:[%s1322] sm:$0xff]
      %v1324 = vld [vmem:[%s1322 + $0x8] sm:$0xff]
      %v1325 = vld [vmem:[%s1322 + $0x18] sm:$0xff]
      %v1326 = vld [vmem:[%s1322 + $0x20] sm:$0xff]
      %v1327 = vld [vmem:[%s1322 + $0x30] sm:$0xff]
      %v1328 = vld [vmem:[%s1322 + $0x38] sm:$0xff]
      %v1329 = vld [vmem:[%s1322 + $0x48] sm:$0xff]
      %v1330 = vld [vmem:[%s1322 + $0x50] sm:$0xff]
      %v1331 = vld [vmem:[%s1322 + $0x60] sm:$0xff]
      %v1332 = vld [vmem:[%s1322 + $0x68] sm:$0xff]
      %v1333 = vld [vmem:[%s1322 + $0x78] sm:$0xff]
      %v1334 = vld [vmem:[%s1322 + $0x80] sm:$0xff]
      %v1335 = vld [vmem:[%s1322 + $0x90] sm:$0xff]
      %v1336 = vld [vmem:[%s1322 + $0x98] sm:$0xff]
      %v1337 = vld [vmem:[%s1322 + $0xa8] sm:$0xff]
      %v1338 = vld [vmem:[%s1322 + $0xb0] sm:$0xff]
      %v1339 = vld [vmem:[%s1322 + $0xc0] sm:$0xff]
      %v1340 = vld [vmem:[%s1322 + $0xc8] sm:$0xff]
      %v1341 = vld [vmem:[%s1322 + $0xd8] sm:$0xff]
      %v1342 = vld [vmem:[%s1322 + $0xe0] sm:$0xff]
      %v1343 = vld [vmem:[%s1322 + $0xf0] sm:$0xff]
      %v1344 = vld [vmem:[%s1322 + $0xf8] sm:$0xff]
      %v1345 = vld [vmem:[%s1322 + $0x108] sm:$0xff]
      %v1346 = vld [vmem:[%s1322 + $0x110] sm:$0xff]
      %v1347 = vld [vmem:[%s1322 + $0x120] sm:$0xff]
      %v1348 = vld [vmem:[%s1322 + $0x128] sm:$0xff]
      %v1349 = vld [vmem:[%s1322 + $0x138] sm:$0xff]
      %v1350 = vld [vmem:[%s1322 + $0x140] sm:$0xff]
      %v1351 = vld [vmem:[%s1322 + $0x150] sm:$0xff]
      %v1352 = vld [vmem:[%s1322 + $0x158] sm:$0xff]
      %v1353 = vld [vmem:[%s1322 + $0x168] sm:$0xff]
      %v1354 = vld [vmem:[%s1322 + $0x170] sm:$0xff]
      %s1355 = scalar_lea.vmem %s1, 12
      %v1356 = vld [vmem:[%s1355] sm:$0xf]
      %v1358 = vsel %vm282, %v1323, 0
      %v1361 = vsel %vm282, %v1324, 0
      %v1364 = vsel %vm282, %v1325, 0
      %v1367 = vsel %vm282, %v1326, 0
      %v1370 = vsel %vm282, %v1327, 0
      %v1373 = vsel %vm282, %v1328, 0
      %v1376 = vsel %vm282, %v1329, 0
      %v1379 = vsel %vm282, %v1330, 0
      %v1382 = vsel %vm282, %v1331, 0
      %v1385 = vsel %vm282, %v1332, 0
      %v1388 = vsel %vm282, %v1333, 0
      %v1391 = vsel %vm282, %v1334, 0
      %v1394 = vsel %vm282, %v1335, 0
      %v1397 = vsel %vm282, %v1336, 0
      %v1400 = vsel %vm282, %v1337, 0
      %v1403 = vsel %vm282, %v1338, 0
      %v1406 = vsel %vm282, %v1339, 0
      %v1409 = vsel %vm282, %v1340, 0
      %v1412 = vsel %vm282, %v1341, 0
      %v1415 = vsel %vm282, %v1342, 0
      %v1418 = vsel %vm282, %v1343, 0
      %v1421 = vsel %vm282, %v1344, 0
      %v1424 = vsel %vm282, %v1345, 0
      %v1427 = vsel %vm282, %v1346, 0
      %v1430 = vsel %vm282, %v1347, 0
      %v1433 = vsel %vm282, %v1348, 0
      %v1436 = vsel %vm282, %v1349, 0
      %v1439 = vsel %vm282, %v1350, 0
      %v1442 = vsel %vm282, %v1351, 0
      %v1445 = vsel %vm282, %v1352, 0
      %v1448 = vsel %vm282, %v1353, 0
      %v1451 = vsel %vm282, %v1354, 0
      %v1454 = vsel %vm379, %v1356, 0
      %1456 = vmatprep.subr.mxu0 0.0
      %1457 = vmatpush1.msra.mxu0 %v1454
      %1458 = vmatprep.subr.mxu0 0.0
      %1459 = vmatpush1.msra.mxu0 0.0
      %1460 = vmatprep.subr.mxu0 0.0
      %1461 = vmatpush1.msra.mxu0 0.0
      %1462 = vmatprep.subr.mxu0 0.0
      %1463 = vmatpush1.msra.mxu0 0.0
      %1464 = vmatprep.subr.mxu0 0.0
      %1465 = vmatpush1.msra.mxu0 0.0
      %1466 = vmatprep.subr.mxu0 0.0
      %1467 = vmatpush1.msra.mxu0 0.0
      %1468 = vmatprep.subr.mxu0 0.0
      %1469 = vmatpush1.msra.mxu0 0.0
      %1470 = vmatprep.subr.mxu0 0.0
      %1471 = vmatpush1.msra.mxu0 0.0
      %1472 = vmatprep.subr.mxu0 0.0
      %1473 = vmatpush1.msra.mxu0 0.0
      %1474 = vmatprep.subr.mxu0 0.0
      %1475 = vmatpush1.msra.mxu0 0.0
      %1476 = vmatprep.subr.mxu0 0.0
      %1477 = vmatpush1.msra.mxu0 0.0
      %1478 = vmatprep.subr.mxu0 0.0
      %1479 = vmatpush1.msra.mxu0 0.0
      %1480 = vmatprep.subr.mxu0 0.0
      %1481 = vmatpush1.msra.mxu0 0.0
      %1482 = vmatprep.subr.mxu0 0.0
      %1483 = vmatpush1.msra.mxu0 0.0
      %1484 = vmatprep.subr.mxu0 0.0
      %1485 = vmatpush1.msra.mxu0 0.0
      %1486 = vmatprep.subr.mxu0 0.0
      %1487 = vmatpush1.msra.mxu0 0.0
      %1488 = vmatprep.subr.mxu0 0.0
      %1489 = vmatpush1.msra.mxu0 0.0
      %1490 = vmatprep.subr.mxu0 0.0
      %1491 = vmatpush1.msra.mxu0 0.0
      %1492 = vmatprep.subr.mxu0 0.0
      %1493 = vmatpush1.msra.mxu0 0.0
      %1494 = vmatprep.subr.mxu0 0.0
      %1495 = vmatpush1.msra.mxu0 0.0
      %1496 = vmatprep.subr.mxu0 0.0
      %1497 = vmatpush1.msra.mxu0 0.0
      %1498 = vmatprep.subr.mxu0 0.0
      %1499 = vmatpush1.msra.mxu0 0.0
      %1500 = vmatprep.subr.mxu0 0.0
      %1501 = vmatpush1.msra.mxu0 0.0
      %1502 = vmatprep.subr.mxu0 0.0
      %1503 = vmatpush1.msra.mxu0 0.0
      %1504 = vmatprep.subr.mxu0 0.0
      %1505 = vmatpush1.msra.mxu0 0.0
      %1506 = vmatprep.subr.mxu0 0.0
      %1507 = vmatpush1.msra.mxu0 0.0
      %1508 = vmatprep.subr.mxu0 0.0
      %1509 = vmatpush1.msra.mxu0 0.0
      %1510 = vmatprep.subr.mxu0 0.0
      %1511 = vmatpush1.msra.mxu0 0.0
      %1512 = vmatprep.subr.mxu0 0.0
      %1513 = vmatpush1.msra.mxu0 0.0
      %1514 = vmatprep.subr.mxu0 0.0
      %1515 = vmatpush1.msra.mxu0 0.0
      %1516 = vmatprep.subr.mxu0 0.0
      %1517 = vmatpush1.msra.mxu0 0.0
      %1518 = vmatprep.subr.mxu0 0.0
      %1519 = vmatpush1.msra.mxu0 0.0
      %1520 = vmatprep.mubr.f32.mxu0 0.0
      %1521 = vmatmul.mubr.f32.gmra.mrb[0].mxu0 %v1358
      %v1522 = vpop.f32.mrb[0].mxu0
      %v1523 = vadd.f32 0.0, %v1522
      %v1524 = vpop.f32.mrb[0].mxu0
      %1525 = vmatprep.mubr.f32.mxu0 0.0
      %1526 = vmatmul.mubr.f32.gmra.mrb[0].mxu0 %v1361
      %v1527 = vpop.f32.mrb[0].mxu0
      %v1528 = vadd.f32 0.0, %v1527
      %v1529 = vpop.f32.mrb[0].mxu0
      %1530 = vmatprep.mubr.f32.mxu0 0.0
      %1531 = vmatmul.mubr.f32.gmra.mrb[0].mxu0 %v1364
      %v1532 = vpop.f32.mrb[0].mxu0
      %v1533 = vadd.f32 0.0, %v1532
      %v1534 = vpop.f32.mrb[0].mxu0
      %1535 = vmatprep.mubr.f32.mxu0 0.0
      %1536 = vmatmul.mubr.f32.gmra.mrb[0].mxu0 %v1367
      %v1537 = vpop.f32.mrb[0].mxu0
      %v1538 = vadd.f32 0.0, %v1537
      %v1539 = vpop.f32.mrb[0].mxu0
      %1540 = vmatprep.mubr.f32.mxu0 0.0
      %1541 = vmatmul.mubr.f32.gmra.mrb[0].mxu0 %v1370
      %v1542 = vpop.f32.mrb[0].mxu0
      %v1543 = vadd.f32 0.0, %v1542
      %v1544 = vpop.f32.mrb[0].mxu0
      %1545 = vmatprep.mubr.f32.mxu0 0.0
      %1546 = vmatmul.mubr.f32.gmra.mrb[0].mxu0 %v1373
      %v1547 = vpop.f32.mrb[0].mxu0
      %v1548 = vadd.f32 0.0, %v1547
      %v1549 = vpop.f32.mrb[0].mxu0
      %1550 = vmatprep.mubr.f32.mxu0 0.0
      %1551 = vmatmul.mubr.f32.gmra.mrb[0].mxu0 %v1376
      %v1552 = vpop.f32.mrb[0].mxu0
      %v1553 = vadd.f32 0.0, %v1552
      %v1554 = vpop.f32.mrb[0].mxu0
      %1555 = vmatprep.mubr.f32.mxu0 0.0
      %1556 = vmatmul.mubr.f32.gmra.mrb[0].mxu0 %v1379
      %v1557 = vpop.f32.mrb[0].mxu0
      %v1558 = vadd.f32 0.0, %v1557
      %v1559 = vpop.f32.mrb[0].mxu0
      %1560 = vmatprep.mubr.f32.mxu0 0.0
      %1561 = vmatmul.mubr.f32.gmra.mrb[0].mxu0 %v1382
      %v1562 = vpop.f32.mrb[0].mxu0
      %v1563 = vadd.f32 0.0, %v1562
      %v1564 = vpop.f32.mrb[0].mxu0
      %1565 = vmatprep.mubr.f32.mxu0 0.0
      %1566 = vmatmul.mubr.f32.gmra.mrb[0].mxu0 %v1385
      %v1567 = vpop.f32.mrb[0].mxu0
      %v1568 = vadd.f32 0.0, %v1567
      %v1569 = vpop.f32.mrb[0].mxu0
      %1570 = vmatprep.mubr.f32.mxu0 0.0
      %1571 = vmatmul.mubr.f32.gmra.mrb[0].mxu0 %v1388
      %v1572 = vpop.f32.mrb[0].mxu0
      %v1573 = vadd.f32 0.0, %v1572
      %v1574 = vpop.f32.mrb[0].mxu0
      %1575 = vmatprep.mubr.f32.mxu0 0.0
      %1576 = vmatmul.mubr.f32.gmra.mrb[0].mxu0 %v1391
      %v1577 = vpop.f32.mrb[0].mxu0
      %v1578 = vadd.f32 0.0, %v1577
      %v1579 = vpop.f32.mrb[0].mxu0
      %1580 = vmatprep.mubr.f32.mxu0 0.0
      %1581 = vmatmul.mubr.f32.gmra.mrb[0].mxu0 %v1394
      %v1582 = vpop.f32.mrb[0].mxu0
      %v1583 = vadd.f32 0.0, %v1582
      %v1584 = vpop.f32.mrb[0].mxu0
      %1585 = vmatprep.mubr.f32.mxu0 0.0
      %1586 = vmatmul.mubr.f32.gmra.mrb[0].mxu0 %v1397
      %v1587 = vpop.f32.mrb[0].mxu0
      %v1588 = vadd.f32 0.0, %v1587
      %v1589 = vpop.f32.mrb[0].mxu0
      %1590 = vmatprep.mubr.f32.mxu0 0.0
      %1591 = vmatmul.mubr.f32.gmra.mrb[0].mxu0 %v1400
      %v1592 = vpop.f32.mrb[0].mxu0
      %v1593 = vadd.f32 0.0, %v1592
      %v1594 = vpop.f32.mrb[0].mxu0
      %1595 = vmatprep.mubr.f32.mxu0 0.0
      %1596 = vmatmul.mubr.f32.gmra.mrb[0].mxu0 %v1403
      %v1597 = vpop.f32.mrb[0].mxu0
      %v1598 = vadd.f32 0.0, %v1597
      %v1599 = vpop.f32.mrb[0].mxu0
      %1600 = vmatprep.mubr.f32.mxu0 0.0
      %1601 = vmatmul.mubr.f32.gmra.mrb[0].mxu0 %v1406
      %v1602 = vpop.f32.mrb[0].mxu0
      %v1603 = vadd.f32 0.0, %v1602
      %v1604 = vpop.f32.mrb[0].mxu0
      %1605 = vmatprep.mubr.f32.mxu0 0.0
      %1606 = vmatmul.mubr.f32.gmra.mrb[0].mxu0 %v1409
      %v1607 = vpop.f32.mrb[0].mxu0
      %v1608 = vadd.f32 0.0, %v1607
      %v1609 = vpop.f32.mrb[0].mxu0
      %1610 = vmatprep.mubr.f32.mxu0 0.0
      %1611 = vmatmul.mubr.f32.gmra.mrb[0].mxu0 %v1412
      %v1612 = vpop.f32.mrb[0].mxu0
      %v1613 = vadd.f32 0.0, %v1612
      %v1614 = vpop.f32.mrb[0].mxu0
      %1615 = vmatprep.mubr.f32.mxu0 0.0
      %1616 = vmatmul.mubr.f32.gmra.mrb[0].mxu0 %v1415
      %v1617 = vpop.f32.mrb[0].mxu0
      %v1618 = vadd.f32 0.0, %v1617
      %v1619 = vpop.f32.mrb[0].mxu0
      %1620 = vmatprep.mubr.f32.mxu0 0.0
      %1621 = vmatmul.mubr.f32.gmra.mrb[0].mxu0 %v1418
      %v1622 = vpop.f32.mrb[0].mxu0
      %v1623 = vadd.f32 0.0, %v1622
      %v1624 = vpop.f32.mrb[0].mxu0
      %1625 = vmatprep.mubr.f32.mxu0 0.0
      %1626 = vmatmul.mubr.f32.gmra.mrb[0].mxu0 %v1421
      %v1627 = vpop.f32.mrb[0].mxu0
      %v1628 = vadd.f32 0.0, %v1627
      %v1629 = vpop.f32.mrb[0].mxu0
      %1630 = vmatprep.mubr.f32.mxu0 0.0
      %1631 = vmatmul.mubr.f32.gmra.mrb[0].mxu0 %v1424
      %v1632 = vpop.f32.mrb[0].mxu0
      %v1633 = vadd.f32 0.0, %v1632
      %v1634 = vpop.f32.mrb[0].mxu0
      %1635 = vmatprep.mubr.f32.mxu0 0.0
      %1636 = vmatmul.mubr.f32.gmra.mrb[0].mxu0 %v1427
      %v1637 = vpop.f32.mrb[0].mxu0
      %v1638 = vadd.f32 0.0, %v1637
      %v1639 = vpop.f32.mrb[0].mxu0
      %1640 = vmatprep.mubr.f32.mxu0 0.0
      %1641 = vmatmul.mubr.f32.gmra.mrb[0].mxu0 %v1430
      %v1642 = vpop.f32.mrb[0].mxu0
      %v1643 = vadd.f32 0.0, %v1642
      %v1644 = vpop.f32.mrb[0].mxu0
      %1645 = vmatprep.mubr.f32.mxu0 0.0
      %1646 = vmatmul.mubr.f32.gmra.mrb[0].mxu0 %v1433
      %v1647 = vpop.f32.mrb[0].mxu0
      %v1648 = vadd.f32 0.0, %v1647
      %v1649 = vpop.f32.mrb[0].mxu0
      %1650 = vmatprep.mubr.f32.mxu0 0.0
      %1651 = vmatmul.mubr.f32.gmra.mrb[0].mxu0 %v1436
      %v1652 = vpop.f32.mrb[0].mxu0
      %v1653 = vadd.f32 0.0, %v1652
      %v1654 = vpop.f32.mrb[0].mxu0
      %1655 = vmatprep.mubr.f32.mxu0 0.0
      %1656 = vmatmul.mubr.f32.gmra.mrb[0].mxu0 %v1439
      %v1657 = vpop.f32.mrb[0].mxu0
      %v1658 = vadd.f32 0.0, %v1657
      %v1659 = vpop.f32.mrb[0].mxu0
      %1660 = vmatprep.mubr.f32.mxu0 0.0
      %1661 = vmatmul.mubr.f32.gmra.mrb[0].mxu0 %v1442
      %v1662 = vpop.f32.mrb[0].mxu0
      %v1663 = vadd.f32 0.0, %v1662
      %v1664 = vpop.f32.mrb[0].mxu0
      %1665 = vmatprep.mubr.f32.mxu0 0.0
      %1666 = vmatmul.mubr.f32.gmra.mrb[0].mxu0 %v1445
      %v1667 = vpop.f32.mrb[0].mxu0
      %v1668 = vadd.f32 0.0, %v1667
      %v1669 = vpop.f32.mrb[0].mxu0
      %1670 = vmatprep.mubr.f32.mxu0 0.0
      %1671 = vmatmul.mubr.f32.gmra.mrb[0].mxu0 %v1448
      %v1672 = vpop.f32.mrb[0].mxu0
      %v1673 = vadd.f32 0.0, %v1672
      %v1674 = vpop.f32.mrb[0].mxu0
      %1675 = vmatprep.mubr.f32.mxu0 0.0
      %1676 = vmatmul.mubr.f32.gmra.mrb[0].mxu0 %v1451
      %v1677 = vpop.f32.mrb[0].mxu0
      %v1678 = vadd.f32 0.0, %v1677
      %v1679 = vpop.f32.mrb[0].mxu0
      %1680 = vdwg.mxu0
      %v1681 = vadd.f32 %v1290, %v1523
      %v1682 = vadd.f32 %v1291, %v1528
      %v1683 = vadd.f32 %v1292, %v1533
      %v1684 = vadd.f32 %v1293, %v1538
      %v1685 = vadd.f32 %v1294, %v1543
      %v1686 = vadd.f32 %v1295, %v1548
      %v1687 = vadd.f32 %v1296, %v1553
      %v1688 = vadd.f32 %v1297, %v1558
      %v1689 = vadd.f32 %v1298, %v1563
      %v1690 = vadd.f32 %v1299, %v1568
      %v1691 = vadd.f32 %v1300, %v1573
      %v1692 = vadd.f32 %v1301, %v1578
      %v1693 = vadd.f32 %v1302, %v1583
      %v1694 = vadd.f32 %v1303, %v1588
      %v1695 = vadd.f32 %v1304, %v1593
      %v1696 = vadd.f32 %v1305, %v1598
      %v1697 = vadd.f32 %v1306, %v1603
      %v1698 = vadd.f32 %v1307, %v1608
      %v1699 = vadd.f32 %v1308, %v1613
      %v1700 = vadd.f32 %v1309, %v1618
      %v1701 = vadd.f32 %v1310, %v1623
      %v1702 = vadd.f32 %v1311, %v1628
      %v1703 = vadd.f32 %v1312, %v1633
      %v1704 = vadd.f32 %v1313, %v1638
      %v1705 = vadd.f32 %v1314, %v1643
      %v1706 = vadd.f32 %v1315, %v1648
      %v1707 = vadd.f32 %v1316, %v1653
      %v1708 = vadd.f32 %v1317, %v1658
      %v1709 = vadd.f32 %v1318, %v1663
      %v1710 = vadd.f32 %v1319, %v1668
      %v1711 = vadd.f32 %v1320, %v1673
      %v1712 = vadd.f32 %v1321, %v1678
      %v1713 = vld [vmem:[%s1322 + $0x1] sm:$0xff]
      %v1714 = vld [vmem:[%s1322 + $0x9] sm:$0xff]
      %v1715 = vld [vmem:[%s1322 + $0x19] sm:$0xff]
      %v1716 = vld [vmem:[%s1322 + $0x21] sm:$0xff]
      %v1717 = vld [vmem:[%s1322 + $0x31] sm:$0xff]
      %v1718 = vld [vmem:[%s1322 + $0x39] sm:$0xff]
      %v1719 = vld [vmem:[%s1322 + $0x49] sm:$0xff]
      %v1720 = vld [vmem:[%s1322 + $0x51] sm:$0xff]
      %v1721 = vld [vmem:[%s1322 + $0x61] sm:$0xff]
      %v1722 = vld [vmem:[%s1322 + $0x69] sm:$0xff]
      %v1723 = vld [vmem:[%s1322 + $0x79] sm:$0xff]
      %v1724 = vld [vmem:[%s1322 + $0x81] sm:$0xff]
      %v1725 = vld [vmem:[%s1322 + $0x91] sm:$0xff]
      %v1726 = vld [vmem:[%s1322 + $0x99] sm:$0xff]
      %v1727 = vld [vmem:[%s1322 + $0xa9] sm:$0xff]
      %v1728 = vld [vmem:[%s1322 + $0xb1] sm:$0xff]
      %v1729 = vld [vmem:[%s1322 + $0xc1] sm:$0xff]
      %v1730 = vld [vmem:[%s1322 + $0xc9] sm:$0xff]
      %v1731 = vld [vmem:[%s1322 + $0xd9] sm:$0xff]
      %v1732 = vld [vmem:[%s1322 + $0xe1] sm:$0xff]
      %v1733 = vld [vmem:[%s1322 + $0xf1] sm:$0xff]
      %v1734 = vld [vmem:[%s1322 + $0xf9] sm:$0xff]
      %v1735 = vld [vmem:[%s1322 + $0x109] sm:$0xff]
      %v1736 = vld [vmem:[%s1322 + $0x111] sm:$0xff]
      %v1737 = vld [vmem:[%s1322 + $0x121] sm:$0xff]
      %v1738 = vld [vmem:[%s1322 + $0x129] sm:$0xff]
      %v1739 = vld [vmem:[%s1322 + $0x139] sm:$0xff]
      %v1740 = vld [vmem:[%s1322 + $0x141] sm:$0xff]
      %v1741 = vld [vmem:[%s1322 + $0x151] sm:$0xff]
      %v1742 = vld [vmem:[%s1322 + $0x159] sm:$0xff]
      %v1743 = vld [vmem:[%s1322 + $0x169] sm:$0xff]
      %v1744 = vld [vmem:[%s1322 + $0x171] sm:$0xff]
      %s1745 = scalar_lea.vmem %s1, 16
      %v1746 = vld [vmem:[%s1745] sm:$0xf]
      %v1748 = vsel %vm282, %v1713, 0
      %v1751 = vsel %vm282, %v1714, 0
      %v1754 = vsel %vm282, %v1715, 0
      %v1757 = vsel %vm282, %v1716, 0
      %v1760 = vsel %vm282, %v1717, 0
      %v1763 = vsel %vm282, %v1718, 0
      %v1766 = vsel %vm282, %v1719, 0
      %v1769 = vsel %vm282, %v1720, 0
      %v1772 = vsel %vm282, %v1721, 0
      %v1775 = vsel %vm282, %v1722, 0
      %v1778 = vsel %vm282, %v1723, 0
      %v1781 = vsel %vm282, %v1724, 0
      %v1784 = vsel %vm282, %v1725, 0
      %v1787 = vsel %vm282, %v1726, 0
      %v1790 = vsel %vm282, %v1727, 0
      %v1793 = vsel %vm282, %v1728, 0
      %v1796 = vsel %vm282, %v1729, 0
      %v1799 = vsel %vm282, %v1730, 0
      %v1802 = vsel %vm282, %v1731, 0
      %v1805 = vsel %vm282, %v1732, 0
      %v1808 = vsel %vm282, %v1733, 0
      %v1811 = vsel %vm282, %v1734, 0
      %v1814 = vsel %vm282, %v1735, 0
      %v1817 = vsel %vm282, %v1736, 0
      %v1820 = vsel %vm282, %v1737, 0
      %v1823 = vsel %vm282, %v1738, 0
      %v1826 = vsel %vm282, %v1739, 0
      %v1829 = vsel %vm282, %v1740, 0
      %v1832 = vsel %vm282, %v1741, 0
      %v1835 = vsel %vm282, %v1742, 0
      %v1838 = vsel %vm282, %v1743, 0
      %v1841 = vsel %vm282, %v1744, 0
      %v1844 = vsel %vm379, %v1746, 0
      %1846 = vmatprep.subr.mxu0 0.0
      %1847 = vmatpush1.msra.mxu0 %v1844
      %1848 = vmatprep.subr.mxu0 0.0
      %1849 = vmatpush1.msra.mxu0 0.0
      %1850 = vmatprep.subr.mxu0 0.0
      %1851 = vmatpush1.msra.mxu0 0.0
      %1852 = vmatprep.subr.mxu0 0.0
      %1853 = vmatpush1.msra.mxu0 0.0
      %1854 = vmatprep.subr.mxu0 0.0
      %1855 = vmatpush1.msra.mxu0 0.0
      %1856 = vmatprep.subr.mxu0 0.0
      %1857 = vmatpush1.msra.mxu0 0.0
      %1858 = vmatprep.subr.mxu0 0.0
      %1859 = vmatpush1.msra.mxu0 0.0
      %1860 = vmatprep.subr.mxu0 0.0
      %1861 = vmatpush1.msra.mxu0 0.0
      %1862 = vmatprep.subr.mxu0 0.0
      %1863 = vmatpush1.msra.mxu0 0.0
      %1864 = vmatprep.subr.mxu0 0.0
      %1865 = vmatpush1.msra.mxu0 0.0
      %1866 = vmatprep.subr.mxu0 0.0
      %1867 = vmatpush1.msra.mxu0 0.0
      %1868 = vmatprep.subr.mxu0 0.0
      %1869 = vmatpush1.msra.mxu0 0.0
      %1870 = vmatprep.subr.mxu0 0.0
      %1871 = vmatpush1.msra.mxu0 0.0
      %1872 = vmatprep.subr.mxu0 0.0
      %1873 = vmatpush1.msra.mxu0 0.0
      %1874 = vmatprep.subr.mxu0 0.0
      %1875 = vmatpush1.msra.mxu0 0.0
      %1876 = vmatprep.subr.mxu0 0.0
      %1877 = vmatpush1.msra.mxu0 0.0
      %1878 = vmatprep.subr.mxu0 0.0
      %1879 = vmatpush1.msra.mxu0 0.0
      %1880 = vmatprep.subr.mxu0 0.0
      %1881 = vmatpush1.msra.mxu0 0.0
      %1882 = vmatprep.subr.mxu0 0.0
      %1883 = vmatpush1.msra.mxu0 0.0
      %1884 = vmatprep.subr.mxu0 0.0
      %1885 = vmatpush1.msra.mxu0 0.0
      %1886 = vmatprep.subr.mxu0 0.0
      %1887 = vmatpush1.msra.mxu0 0.0
      %1888 = vmatprep.subr.mxu0 0.0
      %1889 = vmatpush1.msra.mxu0 0.0
      %1890 = vmatprep.subr.mxu0 0.0
      %1891 = vmatpush1.msra.mxu0 0.0
      %1892 = vmatprep.subr.mxu0 0.0
      %1893 = vmatpush1.msra.mxu0 0.0
      %1894 = vmatprep.subr.mxu0 0.0
      %1895 = vmatpush1.msra.mxu0 0.0
      %1896 = vmatprep.subr.mxu0 0.0
      %1897 = vmatpush1.msra.mxu0 0.0
      %1898 = vmatprep.subr.mxu0 0.0
      %1899 = vmatpush1.msra.mxu0 0.0
      %1900 = vmatprep.subr.mxu0 0.0
      %1901 = vmatpush1.msra.mxu0 0.0
      %1902 = vmatprep.subr.mxu0 0.0
      %1903 = vmatpush1.msra.mxu0 0.0
      %1904 = vmatprep.subr.mxu0 0.0
      %1905 = vmatpush1.msra.mxu0 0.0
      %1906 = vmatprep.subr.mxu0 0.0
      %1907 = vmatpush1.msra.mxu0 0.0
      %1908 = vmatprep.subr.mxu0 0.0
      %1909 = vmatpush1.msra.mxu0 0.0
      %1910 = vmatprep.mubr.f32.mxu0 0.0
      %1911 = vmatmul.mubr.f32.gmra.mrb[0].mxu0 %v1748
      %v1912 = vpop.f32.mrb[0].mxu0
      %v1913 = vadd.f32 0.0, %v1912
      %v1914 = vpop.f32.mrb[0].mxu0
      %1915 = vmatprep.mubr.f32.mxu0 0.0
      %1916 = vmatmul.mubr.f32.gmra.mrb[0].mxu0 %v1751
      %v1917 = vpop.f32.mrb[0].mxu0
      %v1918 = vadd.f32 0.0, %v1917
      %v1919 = vpop.f32.mrb[0].mxu0
      %1920 = vmatprep.mubr.f32.mxu0 0.0
      %1921 = vmatmul.mubr.f32.gmra.mrb[0].mxu0 %v1754
      %v1922 = vpop.f32.mrb[0].mxu0
      %v1923 = vadd.f32 0.0, %v1922
      %v1924 = vpop.f32.mrb[0].mxu0
      %1925 = vmatprep.mubr.f32.mxu0 0.0
      %1926 = vmatmul.mubr.f32.gmra.mrb[0].mxu0 %v1757
      %v1927 = vpop.f32.mrb[0].mxu0
      %v1928 = vadd.f32 0.0, %v1927
      %v1929 = vpop.f32.mrb[0].mxu0
      %1930 = vmatprep.mubr.f32.mxu0 0.0
      %1931 = vmatmul.mubr.f32.gmra.mrb[0].mxu0 %v1760
      %v1932 = vpop.f32.mrb[0].mxu0
      %v1933 = vadd.f32 0.0, %v1932
      %v1934 = vpop.f32.mrb[0].mxu0
      %1935 = vmatprep.mubr.f32.mxu0 0.0
      %1936 = vmatmul.mubr.f32.gmra.mrb[0].mxu0 %v1763
      %v1937 = vpop.f32.mrb[0].mxu0
      %v1938 = vadd.f32 0.0, %v1937
      %v1939 = vpop.f32.mrb[0].mxu0
      %1940 = vmatprep.mubr.f32.mxu0 0.0
      %1941 = vmatmul.mubr.f32.gmra.mrb[0].mxu0 %v1766
      %v1942 = vpop.f32.mrb[0].mxu0
      %v1943 = vadd.f32 0.0, %v1942
      %v1944 = vpop.f32.mrb[0].mxu0
      %1945 = vmatprep.mubr.f32.mxu0 0.0
      %1946 = vmatmul.mubr.f32.gmra.mrb[0].mxu0 %v1769
      %v1947 = vpop.f32.mrb[0].mxu0
      %v1948 = vadd.f32 0.0, %v1947
      %v1949 = vpop.f32.mrb[0].mxu0
      %1950 = vmatprep.mubr.f32.mxu0 0.0
      %1951 = vmatmul.mubr.f32.gmra.mrb[0].mxu0 %v1772
      %v1952 = vpop.f32.mrb[0].mxu0
      %v1953 = vadd.f32 0.0, %v1952
      %v1954 = vpop.f32.mrb[0].mxu0
      %1955 = vmatprep.mubr.f32.mxu0 0.0
      %1956 = vmatmul.mubr.f32.gmra.mrb[0].mxu0 %v1775
      %v1957 = vpop.f32.mrb[0].mxu0
      %v1958 = vadd.f32 0.0, %v1957
      %v1959 = vpop.f32.mrb[0].mxu0
      %1960 = vmatprep.mubr.f32.mxu0 0.0
      %1961 = vmatmul.mubr.f32.gmra.mrb[0].mxu0 %v1778
      %v1962 = vpop.f32.mrb[0].mxu0
      %v1963 = vadd.f32 0.0, %v1962
      %v1964 = vpop.f32.mrb[0].mxu0
      %1965 = vmatprep.mubr.f32.mxu0 0.0
      %1966 = vmatmul.mubr.f32.gmra.mrb[0].mxu0 %v1781
      %v1967 = vpop.f32.mrb[0].mxu0
      %v1968 = vadd.f32 0.0, %v1967
      %v1969 = vpop.f32.mrb[0].mxu0
      %1970 = vmatprep.mubr.f32.mxu0 0.0
      %1971 = vmatmul.mubr.f32.gmra.mrb[0].mxu0 %v1784
      %v1972 = vpop.f32.mrb[0].mxu0
      %v1973 = vadd.f32 0.0, %v1972
      %v1974 = vpop.f32.mrb[0].mxu0
      %1975 = vmatprep.mubr.f32.mxu0 0.0
      %1976 = vmatmul.mubr.f32.gmra.mrb[0].mxu0 %v1787
      %v1977 = vpop.f32.mrb[0].mxu0
      %v1978 = vadd.f32 0.0, %v1977
      %v1979 = vpop.f32.mrb[0].mxu0
      %1980 = vmatprep.mubr.f32.mxu0 0.0
      %1981 = vmatmul.mubr.f32.gmra.mrb[0].mxu0 %v1790
      %v1982 = vpop.f32.mrb[0].mxu0
      %v1983 = vadd.f32 0.0, %v1982
      %v1984 = vpop.f32.mrb[0].mxu0
      %1985 = vmatprep.mubr.f32.mxu0 0.0
      %1986 = vmatmul.mubr.f32.gmra.mrb[0].mxu0 %v1793
      %v1987 = vpop.f32.mrb[0].mxu0
      %v1988 = vadd.f32 0.0, %v1987
      %v1989 = vpop.f32.mrb[0].mxu0
      %1990 = vmatprep.mubr.f32.mxu0 0.0
      %1991 = vmatmul.mubr.f32.gmra.mrb[0].mxu0 %v1796
      %v1992 = vpop.f32.mrb[0].mxu0
      %v1993 = vadd.f32 0.0, %v1992
      %v1994 = vpop.f32.mrb[0].mxu0
      %1995 = vmatprep.mubr.f32.mxu0 0.0
      %1996 = vmatmul.mubr.f32.gmra.mrb[0].mxu0 %v1799
      %v1997 = vpop.f32.mrb[0].mxu0
      %v1998 = vadd.f32 0.0, %v1997
      %v1999 = vpop.f32.mrb[0].mxu0
      %2000 = vmatprep.mubr.f32.mxu0 0.0
      %2001 = vmatmul.mubr.f32.gmra.mrb[0].mxu0 %v1802
      %v2002 = vpop.f32.mrb[0].mxu0
      %v2003 = vadd.f32 0.0, %v2002
      %v2004 = vpop.f32.mrb[0].mxu0
      %2005 = vmatprep.mubr.f32.mxu0 0.0
      %2006 = vmatmul.mubr.f32.gmra.mrb[0].mxu0 %v1805
      %v2007 = vpop.f32.mrb[0].mxu0
      %v2008 = vadd.f32 0.0, %v2007
      %v2009 = vpop.f32.mrb[0].mxu0
      %2010 = vmatprep.mubr.f32.mxu0 0.0
      %2011 = vmatmul.mubr.f32.gmra.mrb[0].mxu0 %v1808
      %v2012 = vpop.f32.mrb[0].mxu0
      %v2013 = vadd.f32 0.0, %v2012
      %v2014 = vpop.f32.mrb[0].mxu0
      %2015 = vmatprep.mubr.f32.mxu0 0.0
      %2016 = vmatmul.mubr.f32.gmra.mrb[0].mxu0 %v1811
      %v2017 = vpop.f32.mrb[0].mxu0
      %v2018 = vadd.f32 0.0, %v2017
      %v2019 = vpop.f32.mrb[0].mxu0
      %2020 = vmatprep.mubr.f32.mxu0 0.0
      %2021 = vmatmul.mubr.f32.gmra.mrb[0].mxu0 %v1814
      %v2022 = vpop.f32.mrb[0].mxu0
      %v2023 = vadd.f32 0.0, %v2022
      %v2024 = vpop.f32.mrb[0].mxu0
      %2025 = vmatprep.mubr.f32.mxu0 0.0
      %2026 = vmatmul.mubr.f32.gmra.mrb[0].mxu0 %v1817
      %v2027 = vpop.f32.mrb[0].mxu0
      %v2028 = vadd.f32 0.0, %v2027
      %v2029 = vpop.f32.mrb[0].mxu0
      %2030 = vmatprep.mubr.f32.mxu0 0.0
      %2031 = vmatmul.mubr.f32.gmra.mrb[0].mxu0 %v1820
      %v2032 = vpop.f32.mrb[0].mxu0
      %v2033 = vadd.f32 0.0, %v2032
      %v2034 = vpop.f32.mrb[0].mxu0
      %2035 = vmatprep.mubr.f32.mxu0 0.0
      %2036 = vmatmul.mubr.f32.gmra.mrb[0].mxu0 %v1823
      %v2037 = vpop.f32.mrb[0].mxu0
      %v2038 = vadd.f32 0.0, %v2037
      %v2039 = vpop.f32.mrb[0].mxu0
      %2040 = vmatprep.mubr.f32.mxu0 0.0
      %2041 = vmatmul.mubr.f32.gmra.mrb[0].mxu0 %v1826
      %v2042 = vpop.f32.mrb[0].mxu0
      %v2043 = vadd.f32 0.0, %v2042
      %v2044 = vpop.f32.mrb[0].mxu0
      %2045 = vmatprep.mubr.f32.mxu0 0.0
      %2046 = vmatmul.mubr.f32.gmra.mrb[0].mxu0 %v1829
      %v2047 = vpop.f32.mrb[0].mxu0
      %v2048 = vadd.f32 0.0, %v2047
      %v2049 = vpop.f32.mrb[0].mxu0
      %2050 = vmatprep.mubr.f32.mxu0 0.0
      %2051 = vmatmul.mubr.f32.gmra.mrb[0].mxu0 %v1832
      %v2052 = vpop.f32.mrb[0].mxu0
      %v2053 = vadd.f32 0.0, %v2052
      %v2054 = vpop.f32.mrb[0].mxu0
      %2055 = vmatprep.mubr.f32.mxu0 0.0
      %2056 = vmatmul.mubr.f32.gmra.mrb[0].mxu0 %v1835
      %v2057 = vpop.f32.mrb[0].mxu0
      %v2058 = vadd.f32 0.0, %v2057
      %v2059 = vpop.f32.mrb[0].mxu0
      %2060 = vmatprep.mubr.f32.mxu0 0.0
      %2061 = vmatmul.mubr.f32.gmra.mrb[0].mxu0 %v1838
      %v2062 = vpop.f32.mrb[0].mxu0
      %v2063 = vadd.f32 0.0, %v2062
      %v2064 = vpop.f32.mrb[0].mxu0
      %2065 = vmatprep.mubr.f32.mxu0 0.0
      %2066 = vmatmul.mubr.f32.gmra.mrb[0].mxu0 %v1841
      %v2067 = vpop.f32.mrb[0].mxu0
      %v2068 = vadd.f32 0.0, %v2067
      %v2069 = vpop.f32.mrb[0].mxu0
      %2070 = vdwg.mxu0
      %v2071 = vadd.f32 %v1681, %v1913
      %v2072 = vadd.f32 %v1682, %v1918
      %v2073 = vadd.f32 %v1683, %v1923
      %v2074 = vadd.f32 %v1684, %v1928
      %v2075 = vadd.f32 %v1685, %v1933
      %v2076 = vadd.f32 %v1686, %v1938
      %v2077 = vadd.f32 %v1687, %v1943
      %v2078 = vadd.f32 %v1688, %v1948
      %v2079 = vadd.f32 %v1689, %v1953
      %v2080 = vadd.f32 %v1690, %v1958
      %v2081 = vadd.f32 %v1691, %v1963
      %v2082 = vadd.f32 %v1692, %v1968
      %v2083 = vadd.f32 %v1693, %v1973
      %v2084 = vadd.f32 %v1694, %v1978
      %v2085 = vadd.f32 %v1695, %v1983
      %v2086 = vadd.f32 %v1696, %v1988
      %v2087 = vadd.f32 %v1697, %v1993
      %v2088 = vadd.f32 %v1698, %v1998
      %v2089 = vadd.f32 %v1699, %v2003
      %v2090 = vadd.f32 %v1700, %v2008
      %v2091 = vadd.f32 %v1701, %v2013
      %v2092 = vadd.f32 %v1702, %v2018
      %v2093 = vadd.f32 %v1703, %v2023
      %v2094 = vadd.f32 %v1704, %v2028
      %v2095 = vadd.f32 %v1705, %v2033
      %v2096 = vadd.f32 %v1706, %v2038
      %v2097 = vadd.f32 %v1707, %v2043
      %v2098 = vadd.f32 %v1708, %v2048
      %v2099 = vadd.f32 %v1709, %v2053
      %v2100 = vadd.f32 %v1710, %v2058
      %v2101 = vadd.f32 %v1711, %v2063
      %v2102 = vadd.f32 %v1712, %v2068
      %v2103 = vld [vmem:[%s1322 + $0x2] sm:$0xff]
      %v2104 = vld [vmem:[%s1322 + $0xa] sm:$0xff]
      %v2105 = vld [vmem:[%s1322 + $0x1a] sm:$0xff]
      %v2106 = vld [vmem:[%s1322 + $0x22] sm:$0xff]
      %v2107 = vld [vmem:[%s1322 + $0x32] sm:$0xff]
      %v2108 = vld [vmem:[%s1322 + $0x3a] sm:$0xff]
      %v2109 = vld [vmem:[%s1322 + $0x4a] sm:$0xff]
      %v2110 = vld [vmem:[%s1322 + $0x52] sm:$0xff]
      %v2111 = vld [vmem:[%s1322 + $0x62] sm:$0xff]
      %v2112 = vld [vmem:[%s1322 + $0x6a] sm:$0xff]
      %v2113 = vld [vmem:[%s1322 + $0x7a] sm:$0xff]
      %v2114 = vld [vmem:[%s1322 + $0x82] sm:$0xff]
      %v2115 = vld [vmem:[%s1322 + $0x92] sm:$0xff]
      %v2116 = vld [vmem:[%s1322 + $0x9a] sm:$0xff]
      %v2117 = vld [vmem:[%s1322 + $0xaa] sm:$0xff]
      %v2118 = vld [vmem:[%s1322 + $0xb2] sm:$0xff]
      %v2119 = vld [vmem:[%s1322 + $0xc2] sm:$0xff]
      %v2120 = vld [vmem:[%s1322 + $0xca] sm:$0xff]
      %v2121 = vld [vmem:[%s1322 + $0xda] sm:$0xff]
      %v2122 = vld [vmem:[%s1322 + $0xe2] sm:$0xff]
      %v2123 = vld [vmem:[%s1322 + $0xf2] sm:$0xff]
      %v2124 = vld [vmem:[%s1322 + $0xfa] sm:$0xff]
      %v2125 = vld [vmem:[%s1322 + $0x10a] sm:$0xff]
      %v2126 = vld [vmem:[%s1322 + $0x112] sm:$0xff]
      %v2127 = vld [vmem:[%s1322 + $0x122] sm:$0xff]
      %v2128 = vld [vmem:[%s1322 + $0x12a] sm:$0xff]
      %v2129 = vld [vmem:[%s1322 + $0x13a] sm:$0xff]
      %v2130 = vld [vmem:[%s1322 + $0x142] sm:$0xff]
      %v2131 = vld [vmem:[%s1322 + $0x152] sm:$0xff]
      %v2132 = vld [vmem:[%s1322 + $0x15a] sm:$0xff]
      %v2133 = vld [vmem:[%s1322 + $0x16a] sm:$0xff]
      %v2134 = vld [vmem:[%s1322 + $0x172] sm:$0xff]
      %s2135 = scalar_lea.vmem %s1, 20
      %v2136 = vld [vmem:[%s2135] sm:$0xf]
      %v2138 = vsel %vm282, %v2103, 0
      %v2141 = vsel %vm282, %v2104, 0
      %v2144 = vsel %vm282, %v2105, 0
      %v2147 = vsel %vm282, %v2106, 0
      %v2150 = vsel %vm282, %v2107, 0
      %v2153 = vsel %vm282, %v2108, 0
      %v2156 = vsel %vm282, %v2109, 0
      %v2159 = vsel %vm282, %v2110, 0
      %v2162 = vsel %vm282, %v2111, 0
      %v2165 = vsel %vm282, %v2112, 0
      %v2168 = vsel %vm282, %v2113, 0
      %v2171 = vsel %vm282, %v2114, 0
      %v2174 = vsel %vm282, %v2115, 0
      %v2177 = vsel %vm282, %v2116, 0
      %v2180 = vsel %vm282, %v2117, 0
      %v2183 = vsel %vm282, %v2118, 0
      %v2186 = vsel %vm282, %v2119, 0
      %v2189 = vsel %vm282, %v2120, 0
      %v2192 = vsel %vm282, %v2121, 0
      %v2195 = vsel %vm282, %v2122, 0
      %v2198 = vsel %vm282, %v2123, 0
      %v2201 = vsel %vm282, %v2124, 0
      %v2204 = vsel %vm282, %v2125, 0
      %v2207 = vsel %vm282, %v2126, 0
      %v2210 = vsel %vm282, %v2127, 0
      %v2213 = vsel %vm282, %v2128, 0
      %v2216 = vsel %vm282, %v2129, 0
      %v2219 = vsel %vm282, %v2130, 0
      %v2222 = vsel %vm282, %v2131, 0
      %v2225 = vsel %vm282, %v2132, 0
      %v2228 = vsel %vm282, %v2133, 0
      %v2231 = vsel %vm282, %v2134, 0
      %v2234 = vsel %vm379, %v2136, 0
      %2236 = vmatprep.subr.mxu0 0.0
      %2237 = vmatpush1.msra.mxu0 %v2234
      %2238 = vmatprep.subr.mxu0 0.0
      %2239 = vmatpush1.msra.mxu0 0.0
      %2240 = vmatprep.subr.mxu0 0.0
      %2241 = vmatpush1.msra.mxu0 0.0
      %2242 = vmatprep.subr.mxu0 0.0
      %2243 = vmatpush1.msra.mxu0 0.0
      %2244 = vmatprep.subr.mxu0 0.0
      %2245 = vmatpush1.msra.mxu0 0.0
      %2246 = vmatprep.subr.mxu0 0.0
      %2247 = vmatpush1.msra.mxu0 0.0
      %2248 = vmatprep.subr.mxu0 0.0
      %2249 = vmatpush1.msra.mxu0 0.0
      %2250 = vmatprep.subr.mxu0 0.0
      %2251 = vmatpush1.msra.mxu0 0.0
      %2252 = vmatprep.subr.mxu0 0.0
      %2253 = vmatpush1.msra.mxu0 0.0
      %2254 = vmatprep.subr.mxu0 0.0
      %2255 = vmatpush1.msra.mxu0 0.0
      %2256 = vmatprep.subr.mxu0 0.0
      %2257 = vmatpush1.msra.mxu0 0.0
      %2258 = vmatprep.subr.mxu0 0.0
      %2259 = vmatpush1.msra.mxu0 0.0
      %2260 = vmatprep.subr.mxu0 0.0
      %2261 = vmatpush1.msra.mxu0 0.0
      %2262 = vmatprep.subr.mxu0 0.0
      %2263 = vmatpush1.msra.mxu0 0.0
      %2264 = vmatprep.subr.mxu0 0.0
      %2265 = vmatpush1.msra.mxu0 0.0
      %2266 = vmatprep.subr.mxu0 0.0
      %2267 = vmatpush1.msra.mxu0 0.0
      %2268 = vmatprep.subr.mxu0 0.0
      %2269 = vmatpush1.msra.mxu0 0.0
      %2270 = vmatprep.subr.mxu0 0.0
      %2271 = vmatpush1.msra.mxu0 0.0
      %2272 = vmatprep.subr.mxu0 0.0
      %2273 = vmatpush1.msra.mxu0 0.0
      %2274 = vmatprep.subr.mxu0 0.0
      %2275 = vmatpush1.msra.mxu0 0.0
      %2276 = vmatprep.subr.mxu0 0.0
      %2277 = vmatpush1.msra.mxu0 0.0
      %2278 = vmatprep.subr.mxu0 0.0
      %2279 = vmatpush1.msra.mxu0 0.0
      %2280 = vmatprep.subr.mxu0 0.0
      %2281 = vmatpush1.msra.mxu0 0.0
      %2282 = vmatprep.subr.mxu0 0.0
      %2283 = vmatpush1.msra.mxu0 0.0
      %2284 = vmatprep.subr.mxu0 0.0
      %2285 = vmatpush1.msra.mxu0 0.0
      %2286 = vmatprep.subr.mxu0 0.0
      %2287 = vmatpush1.msra.mxu0 0.0
      %2288 = vmatprep.subr.mxu0 0.0
      %2289 = vmatpush1.msra.mxu0 0.0
      %2290 = vmatprep.subr.mxu0 0.0
      %2291 = vmatpush1.msra.mxu0 0.0
      %2292 = vmatprep.subr.mxu0 0.0
      %2293 = vmatpush1.msra.mxu0 0.0
      %2294 = vmatprep.subr.mxu0 0.0
      %2295 = vmatpush1.msra.mxu0 0.0
      %2296 = vmatprep.subr.mxu0 0.0
      %2297 = vmatpush1.msra.mxu0 0.0
      %2298 = vmatprep.subr.mxu0 0.0
      %2299 = vmatpush1.msra.mxu0 0.0
      %2300 = vmatprep.mubr.f32.mxu0 0.0
      %2301 = vmatmul.mubr.f32.gmra.mrb[0].mxu0 %v2138
      %v2302 = vpop.f32.mrb[0].mxu0
      %v2303 = vadd.f32 0.0, %v2302
      %v2304 = vpop.f32.mrb[0].mxu0
      %2305 = vmatprep.mubr.f32.mxu0 0.0
      %2306 = vmatmul.mubr.f32.gmra.mrb[0].mxu0 %v2141
      %v2307 = vpop.f32.mrb[0].mxu0
      %v2308 = vadd.f32 0.0, %v2307
      %v2309 = vpop.f32.mrb[0].mxu0
      %2310 = vmatprep.mubr.f32.mxu0 0.0
      %2311 = vmatmul.mubr.f32.gmra.mrb[0].mxu0 %v2144
      %v2312 = vpop.f32.mrb[0].mxu0
      %v2313 = vadd.f32 0.0, %v2312
      %v2314 = vpop.f32.mrb[0].mxu0
      %2315 = vmatprep.mubr.f32.mxu0 0.0
      %2316 = vmatmul.mubr.f32.gmra.mrb[0].mxu0 %v2147
      %v2317 = vpop.f32.mrb[0].mxu0
      %v2318 = vadd.f32 0.0, %v2317
      %v2319 = vpop.f32.mrb[0].mxu0
      %2320 = vmatprep.mubr.f32.mxu0 0.0
      %2321 = vmatmul.mubr.f32.gmra.mrb[0].mxu0 %v2150
      %v2322 = vpop.f32.mrb[0].mxu0
      %v2323 = vadd.f32 0.0, %v2322
      %v2324 = vpop.f32.mrb[0].mxu0
      %2325 = vmatprep.mubr.f32.mxu0 0.0
      %2326 = vmatmul.mubr.f32.gmra.mrb[0].mxu0 %v2153
      %v2327 = vpop.f32.mrb[0].mxu0
      %v2328 = vadd.f32 0.0, %v2327
      %v2329 = vpop.f32.mrb[0].mxu0
      %2330 = vmatprep.mubr.f32.mxu0 0.0
      %2331 = vmatmul.mubr.f32.gmra.mrb[0].mxu0 %v2156
      %v2332 = vpop.f32.mrb[0].mxu0
      %v2333 = vadd.f32 0.0, %v2332
      %v2334 = vpop.f32.mrb[0].mxu0
      %2335 = vmatprep.mubr.f32.mxu0 0.0
      %2336 = vmatmul.mubr.f32.gmra.mrb[0].mxu0 %v2159
      %v2337 = vpop.f32.mrb[0].mxu0
      %v2338 = vadd.f32 0.0, %v2337
      %v2339 = vpop.f32.mrb[0].mxu0
      %2340 = vmatprep.mubr.f32.mxu0 0.0
      %2341 = vmatmul.mubr.f32.gmra.mrb[0].mxu0 %v2162
      %v2342 = vpop.f32.mrb[0].mxu0
      %v2343 = vadd.f32 0.0, %v2342
      %v2344 = vpop.f32.mrb[0].mxu0
      %2345 = vmatprep.mubr.f32.mxu0 0.0
      %2346 = vmatmul.mubr.f32.gmra.mrb[0].mxu0 %v2165
      %v2347 = vpop.f32.mrb[0].mxu0
      %v2348 = vadd.f32 0.0, %v2347
      %v2349 = vpop.f32.mrb[0].mxu0
      %2350 = vmatprep.mubr.f32.mxu0 0.0
      %2351 = vmatmul.mubr.f32.gmra.mrb[0].mxu0 %v2168
      %v2352 = vpop.f32.mrb[0].mxu0
      %v2353 = vadd.f32 0.0, %v2352
      %v2354 = vpop.f32.mrb[0].mxu0
      %2355 = vmatprep.mubr.f32.mxu0 0.0
      %2356 = vmatmul.mubr.f32.gmra.mrb[0].mxu0 %v2171
      %v2357 = vpop.f32.mrb[0].mxu0
      %v2358 = vadd.f32 0.0, %v2357
      %v2359 = vpop.f32.mrb[0].mxu0
      %2360 = vmatprep.mubr.f32.mxu0 0.0
      %2361 = vmatmul.mubr.f32.gmra.mrb[0].mxu0 %v2174
      %v2362 = vpop.f32.mrb[0].mxu0
      %v2363 = vadd.f32 0.0, %v2362
      %v2364 = vpop.f32.mrb[0].mxu0
      %2365 = vmatprep.mubr.f32.mxu0 0.0
      %2366 = vmatmul.mubr.f32.gmra.mrb[0].mxu0 %v2177
      %v2367 = vpop.f32.mrb[0].mxu0
      %v2368 = vadd.f32 0.0, %v2367
      %v2369 = vpop.f32.mrb[0].mxu0
      %2370 = vmatprep.mubr.f32.mxu0 0.0
      %2371 = vmatmul.mubr.f32.gmra.mrb[0].mxu0 %v2180
      %v2372 = vpop.f32.mrb[0].mxu0
      %v2373 = vadd.f32 0.0, %v2372
      %v2374 = vpop.f32.mrb[0].mxu0
      %2375 = vmatprep.mubr.f32.mxu0 0.0
      %2376 = vmatmul.mubr.f32.gmra.mrb[0].mxu0 %v2183
      %v2377 = vpop.f32.mrb[0].mxu0
      %v2378 = vadd.f32 0.0, %v2377
      %v2379 = vpop.f32.mrb[0].mxu0
      %2380 = vmatprep.mubr.f32.mxu0 0.0
      %2381 = vmatmul.mubr.f32.gmra.mrb[0].mxu0 %v2186
      %v2382 = vpop.f32.mrb[0].mxu0
      %v2383 = vadd.f32 0.0, %v2382
      %v2384 = vpop.f32.mrb[0].mxu0
      %2385 = vmatprep.mubr.f32.mxu0 0.0
      %2386 = vmatmul.mubr.f32.gmra.mrb[0].mxu0 %v2189
      %v2387 = vpop.f32.mrb[0].mxu0
      %v2388 = vadd.f32 0.0, %v2387
      %v2389 = vpop.f32.mrb[0].mxu0
      %2390 = vmatprep.mubr.f32.mxu0 0.0
      %2391 = vmatmul.mubr.f32.gmra.mrb[0].mxu0 %v2192
      %v2392 = vpop.f32.mrb[0].mxu0
      %v2393 = vadd.f32 0.0, %v2392
      %v2394 = vpop.f32.mrb[0].mxu0
      %2395 = vmatprep.mubr.f32.mxu0 0.0
      %2396 = vmatmul.mubr.f32.gmra.mrb[0].mxu0 %v2195
      %v2397 = vpop.f32.mrb[0].mxu0
      %v2398 = vadd.f32 0.0, %v2397
      %v2399 = vpop.f32.mrb[0].mxu0
      %2400 = vmatprep.mubr.f32.mxu0 0.0
      %2401 = vmatmul.mubr.f32.gmra.mrb[0].mxu0 %v2198
      %v2402 = vpop.f32.mrb[0].mxu0
      %v2403 = vadd.f32 0.0, %v2402
      %v2404 = vpop.f32.mrb[0].mxu0
      %2405 = vmatprep.mubr.f32.mxu0 0.0
      %2406 = vmatmul.mubr.f32.gmra.mrb[0].mxu0 %v2201
      %v2407 = vpop.f32.mrb[0].mxu0
      %v2408 = vadd.f32 0.0, %v2407
      %v2409 = vpop.f32.mrb[0].mxu0
      %2410 = vmatprep.mubr.f32.mxu0 0.0
      %2411 = vmatmul.mubr.f32.gmra.mrb[0].mxu0 %v2204
      %v2412 = vpop.f32.mrb[0].mxu0
      %v2413 = vadd.f32 0.0, %v2412
      %v2414 = vpop.f32.mrb[0].mxu0
      %2415 = vmatprep.mubr.f32.mxu0 0.0
      %2416 = vmatmul.mubr.f32.gmra.mrb[0].mxu0 %v2207
      %v2417 = vpop.f32.mrb[0].mxu0
      %v2418 = vadd.f32 0.0, %v2417
      %v2419 = vpop.f32.mrb[0].mxu0
      %2420 = vmatprep.mubr.f32.mxu0 0.0
      %2421 = vmatmul.mubr.f32.gmra.mrb[0].mxu0 %v2210
      %v2422 = vpop.f32.mrb[0].mxu0
      %v2423 = vadd.f32 0.0, %v2422
      %v2424 = vpop.f32.mrb[0].mxu0
      %2425 = vmatprep.mubr.f32.mxu0 0.0
      %2426 = vmatmul.mubr.f32.gmra.mrb[0].mxu0 %v2213
      %v2427 = vpop.f32.mrb[0].mxu0
      %v2428 = vadd.f32 0.0, %v2427
      %v2429 = vpop.f32.mrb[0].mxu0
      %2430 = vmatprep.mubr.f32.mxu0 0.0
      %2431 = vmatmul.mubr.f32.gmra.mrb[0].mxu0 %v2216
      %v2432 = vpop.f32.mrb[0].mxu0
      %v2433 = vadd.f32 0.0, %v2432
      %v2434 = vpop.f32.mrb[0].mxu0
      %2435 = vmatprep.mubr.f32.mxu0 0.0
      %2436 = vmatmul.mubr.f32.gmra.mrb[0].mxu0 %v2219
      %v2437 = vpop.f32.mrb[0].mxu0
      %v2438 = vadd.f32 0.0, %v2437
      %v2439 = vpop.f32.mrb[0].mxu0
      %2440 = vmatprep.mubr.f32.mxu0 0.0
      %2441 = vmatmul.mubr.f32.gmra.mrb[0].mxu0 %v2222
      %v2442 = vpop.f32.mrb[0].mxu0
      %v2443 = vadd.f32 0.0, %v2442
      %v2444 = vpop.f32.mrb[0].mxu0
      %2445 = vmatprep.mubr.f32.mxu0 0.0
      %2446 = vmatmul.mubr.f32.gmra.mrb[0].mxu0 %v2225
      %v2447 = vpop.f32.mrb[0].mxu0
      %v2448 = vadd.f32 0.0, %v2447
      %v2449 = vpop.f32.mrb[0].mxu0
      %2450 = vmatprep.mubr.f32.mxu0 0.0
      %2451 = vmatmul.mubr.f32.gmra.mrb[0].mxu0 %v2228
      %v2452 = vpop.f32.mrb[0].mxu0
      %v2453 = vadd.f32 0.0, %v2452
      %v2454 = vpop.f32.mrb[0].mxu0
      %2455 = vmatprep.mubr.f32.mxu0 0.0
      %2456 = vmatmul.mubr.f32.gmra.mrb[0].mxu0 %v2231
      %v2457 = vpop.f32.mrb[0].mxu0
      %v2458 = vadd.f32 0.0, %v2457
      %v2459 = vpop.f32.mrb[0].mxu0
      %2460 = vdwg.mxu0
      %v2461 = vadd.f32 %v2071, %v2303
      %v2462 = vadd.f32 %v2072, %v2308
      %v2463 = vadd.f32 %v2073, %v2313
      %v2464 = vadd.f32 %v2074, %v2318
      %v2465 = vadd.f32 %v2075, %v2323
      %v2466 = vadd.f32 %v2076, %v2328
      %v2467 = vadd.f32 %v2077, %v2333
      %v2468 = vadd.f32 %v2078, %v2338
      %v2469 = vadd.f32 %v2079, %v2343
      %v2470 = vadd.f32 %v2080, %v2348
      %v2471 = vadd.f32 %v2081, %v2353
      %v2472 = vadd.f32 %v2082, %v2358
      %v2473 = vadd.f32 %v2083, %v2363
      %v2474 = vadd.f32 %v2084, %v2368
      %v2475 = vadd.f32 %v2085, %v2373
      %v2476 = vadd.f32 %v2086, %v2378
      %v2477 = vadd.f32 %v2087, %v2383
      %v2478 = vadd.f32 %v2088, %v2388
      %v2479 = vadd.f32 %v2089, %v2393
      %v2480 = vadd.f32 %v2090, %v2398
      %v2481 = vadd.f32 %v2091, %v2403
      %v2482 = vadd.f32 %v2092, %v2408
      %v2483 = vadd.f32 %v2093, %v2413
      %v2484 = vadd.f32 %v2094, %v2418
      %v2485 = vadd.f32 %v2095, %v2423
      %v2486 = vadd.f32 %v2096, %v2428
      %v2487 = vadd.f32 %v2097, %v2433
      %v2488 = vadd.f32 %v2098, %v2438
      %v2489 = vadd.f32 %v2099, %v2443
      %v2490 = vadd.f32 %v2100, %v2448
      %v2491 = vadd.f32 %v2101, %v2453
      %v2492 = vadd.f32 %v2102, %v2458
      %s2493 = scalar_lea.vmem %s203, 48
      %v2494 = vld [vmem:[%s2493] sm:$0xff]
      %v2495 = vld [vmem:[%s2493 + $0x8] sm:$0xff]
      %v2496 = vld [vmem:[%s2493 + $0x18] sm:$0xff]
      %v2497 = vld [vmem:[%s2493 + $0x20] sm:$0xff]
      %v2498 = vld [vmem:[%s2493 + $0x30] sm:$0xff]
      %v2499 = vld [vmem:[%s2493 + $0x38] sm:$0xff]
      %v2500 = vld [vmem:[%s2493 + $0x48] sm:$0xff]
      %v2501 = vld [vmem:[%s2493 + $0x50] sm:$0xff]
      %v2502 = vld [vmem:[%s2493 + $0x60] sm:$0xff]
      %v2503 = vld [vmem:[%s2493 + $0x68] sm:$0xff]
      %v2504 = vld [vmem:[%s2493 + $0x78] sm:$0xff]
      %v2505 = vld [vmem:[%s2493 + $0x80] sm:$0xff]
      %v2506 = vld [vmem:[%s2493 + $0x90] sm:$0xff]
      %v2507 = vld [vmem:[%s2493 + $0x98] sm:$0xff]
      %v2508 = vld [vmem:[%s2493 + $0xa8] sm:$0xff]
      %v2509 = vld [vmem:[%s2493 + $0xb0] sm:$0xff]
      %v2510 = vld [vmem:[%s2493 + $0xc0] sm:$0xff]
      %v2511 = vld [vmem:[%s2493 + $0xc8] sm:$0xff]
      %v2512 = vld [vmem:[%s2493 + $0xd8] sm:$0xff]
      %v2513 = vld [vmem:[%s2493 + $0xe0] sm:$0xff]
      %v2514 = vld [vmem:[%s2493 + $0xf0] sm:$0xff]
      %v2515 = vld [vmem:[%s2493 + $0xf8] sm:$0xff]
      %v2516 = vld [vmem:[%s2493 + $0x108] sm:$0xff]
      %v2517 = vld [vmem:[%s2493 + $0x110] sm:$0xff]
      %v2518 = vld [vmem:[%s2493 + $0x120] sm:$0xff]
      %v2519 = vld [vmem:[%s2493 + $0x128] sm:$0xff]
      %v2520 = vld [vmem:[%s2493 + $0x138] sm:$0xff]
      %v2521 = vld [vmem:[%s2493 + $0x140] sm:$0xff]
      %v2522 = vld [vmem:[%s2493 + $0x150] sm:$0xff]
      %v2523 = vld [vmem:[%s2493 + $0x158] sm:$0xff]
      %v2524 = vld [vmem:[%s2493 + $0x168] sm:$0xff]
      %v2525 = vld [vmem:[%s2493 + $0x170] sm:$0xff]
      %s2526 = scalar_lea.vmem %s1, 24
      %v2527 = vld [vmem:[%s2526] sm:$0xf]
      %v2529 = vsel %vm282, %v2494, 0
      %v2532 = vsel %vm282, %v2495, 0
      %v2535 = vsel %vm282, %v2496, 0
      %v2538 = vsel %vm282, %v2497, 0
      %v2541 = vsel %vm282, %v2498, 0
      %v2544 = vsel %vm282, %v2499, 0
      %v2547 = vsel %vm282, %v2500, 0
      %v2550 = vsel %vm282, %v2501, 0
      %v2553 = vsel %vm282, %v2502, 0
      %v2556 = vsel %vm282, %v2503, 0
      %v2559 = vsel %vm282, %v2504, 0
      %v2562 = vsel %vm282, %v2505, 0
      %v2565 = vsel %vm282, %v2506, 0
      %v2568 = vsel %vm282, %v2507, 0
      %v2571 = vsel %vm282, %v2508, 0
      %v2574 = vsel %vm282, %v2509, 0
      %v2577 = vsel %vm282, %v2510, 0
      %v2580 = vsel %vm282, %v2511, 0
      %v2583 = vsel %vm282, %v2512, 0
      %v2586 = vsel %vm282, %v2513, 0
      %v2589 = vsel %vm282, %v2514, 0
      %v2592 = vsel %vm282, %v2515, 0
      %v2595 = vsel %vm282, %v2516, 0
      %v2598 = vsel %vm282, %v2517, 0
      %v2601 = vsel %vm282, %v2518, 0
      %v2604 = vsel %vm282, %v2519, 0
      %v2607 = vsel %vm282, %v2520, 0
      %v2610 = vsel %vm282, %v2521, 0
      %v2613 = vsel %vm282, %v2522, 0
      %v2616 = vsel %vm282, %v2523, 0
      %v2619 = vsel %vm282, %v2524, 0
      %v2622 = vsel %vm282, %v2525, 0
      %v2625 = vsel %vm379, %v2527, 0
      %2627 = vmatprep.subr.mxu0 0.0
      %2628 = vmatpush1.msra.mxu0 %v2625
      %2629 = vmatprep.subr.mxu0 0.0
      %2630 = vmatpush1.msra.mxu0 0.0
      %2631 = vmatprep.subr.mxu0 0.0
      %2632 = vmatpush1.msra.mxu0 0.0
      %2633 = vmatprep.subr.mxu0 0.0
      %2634 = vmatpush1.msra.mxu0 0.0
      %2635 = vmatprep.subr.mxu0 0.0
      %2636 = vmatpush1.msra.mxu0 0.0
      %2637 = vmatprep.subr.mxu0 0.0
      %2638 = vmatpush1.msra.mxu0 0.0
      %2639 = vmatprep.subr.mxu0 0.0
      %2640 = vmatpush1.msra.mxu0 0.0
      %2641 = vmatprep.subr.mxu0 0.0
      %2642 = vmatpush1.msra.mxu0 0.0
      %2643 = vmatprep.subr.mxu0 0.0
      %2644 = vmatpush1.msra.mxu0 0.0
      %2645 = vmatprep.subr.mxu0 0.0
      %2646 = vmatpush1.msra.mxu0 0.0
      %2647 = vmatprep.subr.mxu0 0.0
      %2648 = vmatpush1.msra.mxu0 0.0
      %2649 = vmatprep.subr.mxu0 0.0
      %2650 = vmatpush1.msra.mxu0 0.0
      %2651 = vmatprep.subr.mxu0 0.0
      %2652 = vmatpush1.msra.mxu0 0.0
      %2653 = vmatprep.subr.mxu0 0.0
      %2654 = vmatpush1.msra.mxu0 0.0
      %2655 = vmatprep.subr.mxu0 0.0
      %2656 = vmatpush1.msra.mxu0 0.0
      %2657 = vmatprep.subr.mxu0 0.0
      %2658 = vmatpush1.msra.mxu0 0.0
      %2659 = vmatprep.subr.mxu0 0.0
      %2660 = vmatpush1.msra.mxu0 0.0
      %2661 = vmatprep.subr.mxu0 0.0
      %2662 = vmatpush1.msra.mxu0 0.0
      %2663 = vmatprep.subr.mxu0 0.0
      %2664 = vmatpush1.msra.mxu0 0.0
      %2665 = vmatprep.subr.mxu0 0.0
      %2666 = vmatpush1.msra.mxu0 0.0
      %2667 = vmatprep.subr.mxu0 0.0
      %2668 = vmatpush1.msra.mxu0 0.0
      %2669 = vmatprep.subr.mxu0 0.0
      %2670 = vmatpush1.msra.mxu0 0.0
      %2671 = vmatprep.subr.mxu0 0.0
      %2672 = vmatpush1.msra.mxu0 0.0
      %2673 = vmatprep.subr.mxu0 0.0
      %2674 = vmatpush1.msra.mxu0 0.0
      %2675 = vmatprep.subr.mxu0 0.0
      %2676 = vmatpush1.msra.mxu0 0.0
      %2677 = vmatprep.subr.mxu0 0.0
      %2678 = vmatpush1.msra.mxu0 0.0
      %2679 = vmatprep.subr.mxu0 0.0
      %2680 = vmatpush1.msra.mxu0 0.0
      %2681 = vmatprep.subr.mxu0 0.0
      %2682 = vmatpush1.msra.mxu0 0.0
      %2683 = vmatprep.subr.mxu0 0.0
      %2684 = vmatpush1.msra.mxu0 0.0
      %2685 = vmatprep.subr.mxu0 0.0
      %2686 = vmatpush1.msra.mxu0 0.0
      %2687 = vmatprep.subr.mxu0 0.0
      %2688 = vmatpush1.msra.mxu0 0.0
      %2689 = vmatprep.subr.mxu0 0.0
      %2690 = vmatpush1.msra.mxu0 0.0
      %2691 = vmatprep.mubr.f32.mxu0 0.0
      %2692 = vmatmul.mubr.f32.gmra.mrb[0].mxu0 %v2529
      %v2693 = vpop.f32.mrb[0].mxu0
      %v2694 = vadd.f32 0.0, %v2693
      %v2695 = vpop.f32.mrb[0].mxu0
      %2696 = vmatprep.mubr.f32.mxu0 0.0
      %2697 = vmatmul.mubr.f32.gmra.mrb[0].mxu0 %v2532
      %v2698 = vpop.f32.mrb[0].mxu0
      %v2699 = vadd.f32 0.0, %v2698
      %v2700 = vpop.f32.mrb[0].mxu0
      %2701 = vmatprep.mubr.f32.mxu0 0.0
      %2702 = vmatmul.mubr.f32.gmra.mrb[0].mxu0 %v2535
      %v2703 = vpop.f32.mrb[0].mxu0
      %v2704 = vadd.f32 0.0, %v2703
      %v2705 = vpop.f32.mrb[0].mxu0
      %2706 = vmatprep.mubr.f32.mxu0 0.0
      %2707 = vmatmul.mubr.f32.gmra.mrb[0].mxu0 %v2538
      %v2708 = vpop.f32.mrb[0].mxu0
      %v2709 = vadd.f32 0.0, %v2708
      %v2710 = vpop.f32.mrb[0].mxu0
      %2711 = vmatprep.mubr.f32.mxu0 0.0
      %2712 = vmatmul.mubr.f32.gmra.mrb[0].mxu0 %v2541
      %v2713 = vpop.f32.mrb[0].mxu0
      %v2714 = vadd.f32 0.0, %v2713
      %v2715 = vpop.f32.mrb[0].mxu0
      %2716 = vmatprep.mubr.f32.mxu0 0.0
      %2717 = vmatmul.mubr.f32.gmra.mrb[0].mxu0 %v2544
      %v2718 = vpop.f32.mrb[0].mxu0
      %v2719 = vadd.f32 0.0, %v2718
      %v2720 = vpop.f32.mrb[0].mxu0
      %2721 = vmatprep.mubr.f32.mxu0 0.0
      %2722 = vmatmul.mubr.f32.gmra.mrb[0].mxu0 %v2547
      %v2723 = vpop.f32.mrb[0].mxu0
      %v2724 = vadd.f32 0.0, %v2723
      %v2725 = vpop.f32.mrb[0].mxu0
      %2726 = vmatprep.mubr.f32.mxu0 0.0
      %2727 = vmatmul.mubr.f32.gmra.mrb[0].mxu0 %v2550
      %v2728 = vpop.f32.mrb[0].mxu0
      %v2729 = vadd.f32 0.0, %v2728
      %v2730 = vpop.f32.mrb[0].mxu0
      %2731 = vmatprep.mubr.f32.mxu0 0.0
      %2732 = vmatmul.mubr.f32.gmra.mrb[0].mxu0 %v2553
      %v2733 = vpop.f32.mrb[0].mxu0
      %v2734 = vadd.f32 0.0, %v2733
      %v2735 = vpop.f32.mrb[0].mxu0
      %2736 = vmatprep.mubr.f32.mxu0 0.0
      %2737 = vmatmul.mubr.f32.gmra.mrb[0].mxu0 %v2556
      %v2738 = vpop.f32.mrb[0].mxu0
      %v2739 = vadd.f32 0.0, %v2738
      %v2740 = vpop.f32.mrb[0].mxu0
      %2741 = vmatprep.mubr.f32.mxu0 0.0
      %2742 = vmatmul.mubr.f32.gmra.mrb[0].mxu0 %v2559
      %v2743 = vpop.f32.mrb[0].mxu0
      %v2744 = vadd.f32 0.0, %v2743
      %v2745 = vpop.f32.mrb[0].mxu0
      %2746 = vmatprep.mubr.f32.mxu0 0.0
      %2747 = vmatmul.mubr.f32.gmra.mrb[0].mxu0 %v2562
      %v2748 = vpop.f32.mrb[0].mxu0
      %v2749 = vadd.f32 0.0, %v2748
      %v2750 = vpop.f32.mrb[0].mxu0
      %2751 = vmatprep.mubr.f32.mxu0 0.0
      %2752 = vmatmul.mubr.f32.gmra.mrb[0].mxu0 %v2565
      %v2753 = vpop.f32.mrb[0].mxu0
      %v2754 = vadd.f32 0.0, %v2753
      %v2755 = vpop.f32.mrb[0].mxu0
      %2756 = vmatprep.mubr.f32.mxu0 0.0
      %2757 = vmatmul.mubr.f32.gmra.mrb[0].mxu0 %v2568
      %v2758 = vpop.f32.mrb[0].mxu0
      %v2759 = vadd.f32 0.0, %v2758
      %v2760 = vpop.f32.mrb[0].mxu0
      %2761 = vmatprep.mubr.f32.mxu0 0.0
      %2762 = vmatmul.mubr.f32.gmra.mrb[0].mxu0 %v2571
      %v2763 = vpop.f32.mrb[0].mxu0
      %v2764 = vadd.f32 0.0, %v2763
      %v2765 = vpop.f32.mrb[0].mxu0
      %2766 = vmatprep.mubr.f32.mxu0 0.0
      %2767 = vmatmul.mubr.f32.gmra.mrb[0].mxu0 %v2574
      %v2768 = vpop.f32.mrb[0].mxu0
      %v2769 = vadd.f32 0.0, %v2768
      %v2770 = vpop.f32.mrb[0].mxu0
      %2771 = vmatprep.mubr.f32.mxu0 0.0
      %2772 = vmatmul.mubr.f32.gmra.mrb[0].mxu0 %v2577
      %v2773 = vpop.f32.mrb[0].mxu0
      %v2774 = vadd.f32 0.0, %v2773
      %v2775 = vpop.f32.mrb[0].mxu0
      %2776 = vmatprep.mubr.f32.mxu0 0.0
      %2777 = vmatmul.mubr.f32.gmra.mrb[0].mxu0 %v2580
      %v2778 = vpop.f32.mrb[0].mxu0
      %v2779 = vadd.f32 0.0, %v2778
      %v2780 = vpop.f32.mrb[0].mxu0
      %2781 = vmatprep.mubr.f32.mxu0 0.0
      %2782 = vmatmul.mubr.f32.gmra.mrb[0].mxu0 %v2583
      %v2783 = vpop.f32.mrb[0].mxu0
      %v2784 = vadd.f32 0.0, %v2783
      %v2785 = vpop.f32.mrb[0].mxu0
      %2786 = vmatprep.mubr.f32.mxu0 0.0
      %2787 = vmatmul.mubr.f32.gmra.mrb[0].mxu0 %v2586
      %v2788 = vpop.f32.mrb[0].mxu0
      %v2789 = vadd.f32 0.0, %v2788
      %v2790 = vpop.f32.mrb[0].mxu0
      %2791 = vmatprep.mubr.f32.mxu0 0.0
      %2792 = vmatmul.mubr.f32.gmra.mrb[0].mxu0 %v2589
      %v2793 = vpop.f32.mrb[0].mxu0
      %v2794 = vadd.f32 0.0, %v2793
      %v2795 = vpop.f32.mrb[0].mxu0
      %2796 = vmatprep.mubr.f32.mxu0 0.0
      %2797 = vmatmul.mubr.f32.gmra.mrb[0].mxu0 %v2592
      %v2798 = vpop.f32.mrb[0].mxu0
      %v2799 = vadd.f32 0.0, %v2798
      %v2800 = vpop.f32.mrb[0].mxu0
      %2801 = vmatprep.mubr.f32.mxu0 0.0
      %2802 = vmatmul.mubr.f32.gmra.mrb[0].mxu0 %v2595
      %v2803 = vpop.f32.mrb[0].mxu0
      %v2804 = vadd.f32 0.0, %v2803
      %v2805 = vpop.f32.mrb[0].mxu0
      %2806 = vmatprep.mubr.f32.mxu0 0.0
      %2807 = vmatmul.mubr.f32.gmra.mrb[0].mxu0 %v2598
      %v2808 = vpop.f32.mrb[0].mxu0
      %v2809 = vadd.f32 0.0, %v2808
      %v2810 = vpop.f32.mrb[0].mxu0
      %2811 = vmatprep.mubr.f32.mxu0 0.0
      %2812 = vmatmul.mubr.f32.gmra.mrb[0].mxu0 %v2601
      %v2813 = vpop.f32.mrb[0].mxu0
      %v2814 = vadd.f32 0.0, %v2813
      %v2815 = vpop.f32.mrb[0].mxu0
      %2816 = vmatprep.mubr.f32.mxu0 0.0
      %2817 = vmatmul.mubr.f32.gmra.mrb[0].mxu0 %v2604
      %v2818 = vpop.f32.mrb[0].mxu0
      %v2819 = vadd.f32 0.0, %v2818
      %v2820 = vpop.f32.mrb[0].mxu0
      %2821 = vmatprep.mubr.f32.mxu0 0.0
      %2822 = vmatmul.mubr.f32.gmra.mrb[0].mxu0 %v2607
      %v2823 = vpop.f32.mrb[0].mxu0
      %v2824 = vadd.f32 0.0, %v2823
      %v2825 = vpop.f32.mrb[0].mxu0
      %2826 = vmatprep.mubr.f32.mxu0 0.0
      %2827 = vmatmul.mubr.f32.gmra.mrb[0].mxu0 %v2610
      %v2828 = vpop.f32.mrb[0].mxu0
      %v2829 = vadd.f32 0.0, %v2828
      %v2830 = vpop.f32.mrb[0].mxu0
      %2831 = vmatprep.mubr.f32.mxu0 0.0
      %2832 = vmatmul.mubr.f32.gmra.mrb[0].mxu0 %v2613
      %v2833 = vpop.f32.mrb[0].mxu0
      %v2834 = vadd.f32 0.0, %v2833
      %v2835 = vpop.f32.mrb[0].mxu0
      %2836 = vmatprep.mubr.f32.mxu0 0.0
      %2837 = vmatmul.mubr.f32.gmra.mrb[0].mxu0 %v2616
      %v2838 = vpop.f32.mrb[0].mxu0
      %v2839 = vadd.f32 0.0, %v2838
      %v2840 = vpop.f32.mrb[0].mxu0
      %2841 = vmatprep.mubr.f32.mxu0 0.0
      %2842 = vmatmul.mubr.f32.gmra.mrb[0].mxu0 %v2619
      %v2843 = vpop.f32.mrb[0].mxu0
      %v2844 = vadd.f32 0.0, %v2843
      %v2845 = vpop.f32.mrb[0].mxu0
      %2846 = vmatprep.mubr.f32.mxu0 0.0
      %2847 = vmatmul.mubr.f32.gmra.mrb[0].mxu0 %v2622
      %v2848 = vpop.f32.mrb[0].mxu0
      %v2849 = vadd.f32 0.0, %v2848
      %v2850 = vpop.f32.mrb[0].mxu0
      %2851 = vdwg.mxu0
      %v2852 = vadd.f32 %v2461, %v2694
      %v2853 = vadd.f32 %v2462, %v2699
      %v2854 = vadd.f32 %v2463, %v2704
      %v2855 = vadd.f32 %v2464, %v2709
      %v2856 = vadd.f32 %v2465, %v2714
      %v2857 = vadd.f32 %v2466, %v2719
      %v2858 = vadd.f32 %v2467, %v2724
      %v2859 = vadd.f32 %v2468, %v2729
      %v2860 = vadd.f32 %v2469, %v2734
      %v2861 = vadd.f32 %v2470, %v2739
      %v2862 = vadd.f32 %v2471, %v2744
      %v2863 = vadd.f32 %v2472, %v2749
      %v2864 = vadd.f32 %v2473, %v2754
      %v2865 = vadd.f32 %v2474, %v2759
      %v2866 = vadd.f32 %v2475, %v2764
      %v2867 = vadd.f32 %v2476, %v2769
      %v2868 = vadd.f32 %v2477, %v2774
      %v2869 = vadd.f32 %v2478, %v2779
      %v2870 = vadd.f32 %v2479, %v2784
      %v2871 = vadd.f32 %v2480, %v2789
      %v2872 = vadd.f32 %v2481, %v2794
      %v2873 = vadd.f32 %v2482, %v2799
      %v2874 = vadd.f32 %v2483, %v2804
      %v2875 = vadd.f32 %v2484, %v2809
      %v2876 = vadd.f32 %v2485, %v2814
      %v2877 = vadd.f32 %v2486, %v2819
      %v2878 = vadd.f32 %v2487, %v2824
      %v2879 = vadd.f32 %v2488, %v2829
      %v2880 = vadd.f32 %v2489, %v2834
      %v2881 = vadd.f32 %v2490, %v2839
      %v2882 = vadd.f32 %v2491, %v2844
      %v2883 = vadd.f32 %v2492, %v2849
      %v2884 = vld [vmem:[%s2493 + $0x1] sm:$0xff]
      %v2885 = vld [vmem:[%s2493 + $0x9] sm:$0xff]
      %v2886 = vld [vmem:[%s2493 + $0x19] sm:$0xff]
      %v2887 = vld [vmem:[%s2493 + $0x21] sm:$0xff]
      %v2888 = vld [vmem:[%s2493 + $0x31] sm:$0xff]
      %v2889 = vld [vmem:[%s2493 + $0x39] sm:$0xff]
      %v2890 = vld [vmem:[%s2493 + $0x49] sm:$0xff]
      %v2891 = vld [vmem:[%s2493 + $0x51] sm:$0xff]
      %v2892 = vld [vmem:[%s2493 + $0x61] sm:$0xff]
      %v2893 = vld [vmem:[%s2493 + $0x69] sm:$0xff]
      %v2894 = vld [vmem:[%s2493 + $0x79] sm:$0xff]
      %v2895 = vld [vmem:[%s2493 + $0x81] sm:$0xff]
      %v2896 = vld [vmem:[%s2493 + $0x91] sm:$0xff]
      %v2897 = vld [vmem:[%s2493 + $0x99] sm:$0xff]
      %v2898 = vld [vmem:[%s2493 + $0xa9] sm:$0xff]
      %v2899 = vld [vmem:[%s2493 + $0xb1] sm:$0xff]
      %v2900 = vld [vmem:[%s2493 + $0xc1] sm:$0xff]
      %v2901 = vld [vmem:[%s2493 + $0xc9] sm:$0xff]
      %v2902 = vld [vmem:[%s2493 + $0xd9] sm:$0xff]
      %v2903 = vld [vmem:[%s2493 + $0xe1] sm:$0xff]
      %v2904 = vld [vmem:[%s2493 + $0xf1] sm:$0xff]
      %v2905 = vld [vmem:[%s2493 + $0xf9] sm:$0xff]
      %v2906 = vld [vmem:[%s2493 + $0x109] sm:$0xff]
      %v2907 = vld [vmem:[%s2493 + $0x111] sm:$0xff]
      %v2908 = vld [vmem:[%s2493 + $0x121] sm:$0xff]
      %v2909 = vld [vmem:[%s2493 + $0x129] sm:$0xff]
      %v2910 = vld [vmem:[%s2493 + $0x139] sm:$0xff]
      %v2911 = vld [vmem:[%s2493 + $0x141] sm:$0xff]
      %v2912 = vld [vmem:[%s2493 + $0x151] sm:$0xff]
      %v2913 = vld [vmem:[%s2493 + $0x159] sm:$0xff]
      %v2914 = vld [vmem:[%s2493 + $0x169] sm:$0xff]
      %v2915 = vld [vmem:[%s2493 + $0x171] sm:$0xff]
      %s2916 = scalar_lea.vmem %s1, 28
      %v2917 = vld [vmem:[%s2916] sm:$0xf]
      %v2919 = vsel %vm282, %v2884, 0
      %v2922 = vsel %vm282, %v2885, 0
      %v2925 = vsel %vm282, %v2886, 0
      %v2928 = vsel %vm282, %v2887, 0
      %v2931 = vsel %vm282, %v2888, 0
      %v2934 = vsel %vm282, %v2889, 0
      %v2937 = vsel %vm282, %v2890, 0
      %v2940 = vsel %vm282, %v2891, 0
      %v2943 = vsel %vm282, %v2892, 0
      %v2946 = vsel %vm282, %v2893, 0
      %v2949 = vsel %vm282, %v2894, 0
      %v2952 = vsel %vm282, %v2895, 0
      %v2955 = vsel %vm282, %v2896, 0
      %v2958 = vsel %vm282, %v2897, 0
      %v2961 = vsel %vm282, %v2898, 0
      %v2964 = vsel %vm282, %v2899, 0
      %v2967 = vsel %vm282, %v2900, 0
      %v2970 = vsel %vm282, %v2901, 0
      %v2973 = vsel %vm282, %v2902, 0
      %v2976 = vsel %vm282, %v2903, 0
      %v2979 = vsel %vm282, %v2904, 0
      %v2982 = vsel %vm282, %v2905, 0
      %v2985 = vsel %vm282, %v2906, 0
      %v2988 = vsel %vm282, %v2907, 0
      %v2991 = vsel %vm282, %v2908, 0
      %v2994 = vsel %vm282, %v2909, 0
      %v2997 = vsel %vm282, %v2910, 0
      %v3000 = vsel %vm282, %v2911, 0
      %v3003 = vsel %vm282, %v2912, 0
      %v3006 = vsel %vm282, %v2913, 0
      %v3009 = vsel %vm282, %v2914, 0
      %v3012 = vsel %vm282, %v2915, 0
      %v3015 = vsel %vm379, %v2917, 0
      %3017 = vmatprep.subr.mxu0 0.0
      %3018 = vmatpush1.msra.mxu0 %v3015
      %3019 = vmatprep.subr.mxu0 0.0
      %3020 = vmatpush1.msra.mxu0 0.0
      %3021 = vmatprep.subr.mxu0 0.0
      %3022 = vmatpush1.msra.mxu0 0.0
      %3023 = vmatprep.subr.mxu0 0.0
      %3024 = vmatpush1.msra.mxu0 0.0
      %3025 = vmatprep.subr.mxu0 0.0
      %3026 = vmatpush1.msra.mxu0 0.0
      %3027 = vmatprep.subr.mxu0 0.0
      %3028 = vmatpush1.msra.mxu0 0.0
      %3029 = vmatprep.subr.mxu0 0.0
      %3030 = vmatpush1.msra.mxu0 0.0
      %3031 = vmatprep.subr.mxu0 0.0
      %3032 = vmatpush1.msra.mxu0 0.0
      %3033 = vmatprep.subr.mxu0 0.0
      %3034 = vmatpush1.msra.mxu0 0.0
      %3035 = vmatprep.subr.mxu0 0.0
      %3036 = vmatpush1.msra.mxu0 0.0
      %3037 = vmatprep.subr.mxu0 0.0
      %3038 = vmatpush1.msra.mxu0 0.0
      %3039 = vmatprep.subr.mxu0 0.0
      %3040 = vmatpush1.msra.mxu0 0.0
      %3041 = vmatprep.subr.mxu0 0.0
      %3042 = vmatpush1.msra.mxu0 0.0
      %3043 = vmatprep.subr.mxu0 0.0
      %3044 = vmatpush1.msra.mxu0 0.0
      %3045 = vmatprep.subr.mxu0 0.0
      %3046 = vmatpush1.msra.mxu0 0.0
      %3047 = vmatprep.subr.mxu0 0.0
      %3048 = vmatpush1.msra.mxu0 0.0
      %3049 = vmatprep.subr.mxu0 0.0
      %3050 = vmatpush1.msra.mxu0 0.0
      %3051 = vmatprep.subr.mxu0 0.0
      %3052 = vmatpush1.msra.mxu0 0.0
      %3053 = vmatprep.subr.mxu0 0.0
      %3054 = vmatpush1.msra.mxu0 0.0
      %3055 = vmatprep.subr.mxu0 0.0
      %3056 = vmatpush1.msra.mxu0 0.0
      %3057 = vmatprep.subr.mxu0 0.0
      %3058 = vmatpush1.msra.mxu0 0.0
      %3059 = vmatprep.subr.mxu0 0.0
      %3060 = vmatpush1.msra.mxu0 0.0
      %3061 = vmatprep.subr.mxu0 0.0
      %3062 = vmatpush1.msra.mxu0 0.0
      %3063 = vmatprep.subr.mxu0 0.0
      %3064 = vmatpush1.msra.mxu0 0.0
      %3065 = vmatprep.subr.mxu0 0.0
      %3066 = vmatpush1.msra.mxu0 0.0
      %3067 = vmatprep.subr.mxu0 0.0
      %3068 = vmatpush1.msra.mxu0 0.0
      %3069 = vmatprep.subr.mxu0 0.0
      %3070 = vmatpush1.msra.mxu0 0.0
      %3071 = vmatprep.subr.mxu0 0.0
      %3072 = vmatpush1.msra.mxu0 0.0
      %3073 = vmatprep.subr.mxu0 0.0
      %3074 = vmatpush1.msra.mxu0 0.0
      %3075 = vmatprep.subr.mxu0 0.0
      %3076 = vmatpush1.msra.mxu0 0.0
      %3077 = vmatprep.subr.mxu0 0.0
      %3078 = vmatpush1.msra.mxu0 0.0
      %3079 = vmatprep.subr.mxu0 0.0
      %3080 = vmatpush1.msra.mxu0 0.0
      %3081 = vmatprep.mubr.f32.mxu0 0.0
      %3082 = vmatmul.mubr.f32.gmra.mrb[0].mxu0 %v2919
      %v3083 = vpop.f32.mrb[0].mxu0
      %v3084 = vadd.f32 0.0, %v3083
      %v3085 = vpop.f32.mrb[0].mxu0
      %3086 = vmatprep.mubr.f32.mxu0 0.0
      %3087 = vmatmul.mubr.f32.gmra.mrb[0].mxu0 %v2922
      %v3088 = vpop.f32.mrb[0].mxu0
      %v3089 = vadd.f32 0.0, %v3088
      %v3090 = vpop.f32.mrb[0].mxu0
      %3091 = vmatprep.mubr.f32.mxu0 0.0
      %3092 = vmatmul.mubr.f32.gmra.mrb[0].mxu0 %v2925
      %v3093 = vpop.f32.mrb[0].mxu0
      %v3094 = vadd.f32 0.0, %v3093
      %v3095 = vpop.f32.mrb[0].mxu0
      %3096 = vmatprep.mubr.f32.mxu0 0.0
      %3097 = vmatmul.mubr.f32.gmra.mrb[0].mxu0 %v2928
      %v3098 = vpop.f32.mrb[0].mxu0
      %v3099 = vadd.f32 0.0, %v3098
      %v3100 = vpop.f32.mrb[0].mxu0
      %3101 = vmatprep.mubr.f32.mxu0 0.0
      %3102 = vmatmul.mubr.f32.gmra.mrb[0].mxu0 %v2931
      %v3103 = vpop.f32.mrb[0].mxu0
      %v3104 = vadd.f32 0.0, %v3103
      %v3105 = vpop.f32.mrb[0].mxu0
      %3106 = vmatprep.mubr.f32.mxu0 0.0
      %3107 = vmatmul.mubr.f32.gmra.mrb[0].mxu0 %v2934
      %v3108 = vpop.f32.mrb[0].mxu0
      %v3109 = vadd.f32 0.0, %v3108
      %v3110 = vpop.f32.mrb[0].mxu0
      %3111 = vmatprep.mubr.f32.mxu0 0.0
      %3112 = vmatmul.mubr.f32.gmra.mrb[0].mxu0 %v2937
      %v3113 = vpop.f32.mrb[0].mxu0
      %v3114 = vadd.f32 0.0, %v3113
      %v3115 = vpop.f32.mrb[0].mxu0
      %3116 = vmatprep.mubr.f32.mxu0 0.0
      %3117 = vmatmul.mubr.f32.gmra.mrb[0].mxu0 %v2940
      %v3118 = vpop.f32.mrb[0].mxu0
      %v3119 = vadd.f32 0.0, %v3118
      %v3120 = vpop.f32.mrb[0].mxu0
      %3121 = vmatprep.mubr.f32.mxu0 0.0
      %3122 = vmatmul.mubr.f32.gmra.mrb[0].mxu0 %v2943
      %v3123 = vpop.f32.mrb[0].mxu0
      %v3124 = vadd.f32 0.0, %v3123
      %v3125 = vpop.f32.mrb[0].mxu0
      %3126 = vmatprep.mubr.f32.mxu0 0.0
      %3127 = vmatmul.mubr.f32.gmra.mrb[0].mxu0 %v2946
      %v3128 = vpop.f32.mrb[0].mxu0
      %v3129 = vadd.f32 0.0, %v3128
      %v3130 = vpop.f32.mrb[0].mxu0
      %3131 = vmatprep.mubr.f32.mxu0 0.0
      %3132 = vmatmul.mubr.f32.gmra.mrb[0].mxu0 %v2949
      %v3133 = vpop.f32.mrb[0].mxu0
      %v3134 = vadd.f32 0.0, %v3133
      %v3135 = vpop.f32.mrb[0].mxu0
      %3136 = vmatprep.mubr.f32.mxu0 0.0
      %3137 = vmatmul.mubr.f32.gmra.mrb[0].mxu0 %v2952
      %v3138 = vpop.f32.mrb[0].mxu0
      %v3139 = vadd.f32 0.0, %v3138
      %v3140 = vpop.f32.mrb[0].mxu0
      %3141 = vmatprep.mubr.f32.mxu0 0.0
      %3142 = vmatmul.mubr.f32.gmra.mrb[0].mxu0 %v2955
      %v3143 = vpop.f32.mrb[0].mxu0
      %v3144 = vadd.f32 0.0, %v3143
      %v3145 = vpop.f32.mrb[0].mxu0
      %3146 = vmatprep.mubr.f32.mxu0 0.0
      %3147 = vmatmul.mubr.f32.gmra.mrb[0].mxu0 %v2958
      %v3148 = vpop.f32.mrb[0].mxu0
      %v3149 = vadd.f32 0.0, %v3148
      %v3150 = vpop.f32.mrb[0].mxu0
      %3151 = vmatprep.mubr.f32.mxu0 0.0
      %3152 = vmatmul.mubr.f32.gmra.mrb[0].mxu0 %v2961
      %v3153 = vpop.f32.mrb[0].mxu0
      %v3154 = vadd.f32 0.0, %v3153
      %v3155 = vpop.f32.mrb[0].mxu0
      %3156 = vmatprep.mubr.f32.mxu0 0.0
      %3157 = vmatmul.mubr.f32.gmra.mrb[0].mxu0 %v2964
      %v3158 = vpop.f32.mrb[0].mxu0
      %v3159 = vadd.f32 0.0, %v3158
      %v3160 = vpop.f32.mrb[0].mxu0
      %3161 = vmatprep.mubr.f32.mxu0 0.0
      %3162 = vmatmul.mubr.f32.gmra.mrb[0].mxu0 %v2967
      %v3163 = vpop.f32.mrb[0].mxu0
      %v3164 = vadd.f32 0.0, %v3163
      %v3165 = vpop.f32.mrb[0].mxu0
      %3166 = vmatprep.mubr.f32.mxu0 0.0
      %3167 = vmatmul.mubr.f32.gmra.mrb[0].mxu0 %v2970
      %v3168 = vpop.f32.mrb[0].mxu0
      %v3169 = vadd.f32 0.0, %v3168
      %v3170 = vpop.f32.mrb[0].mxu0
      %3171 = vmatprep.mubr.f32.mxu0 0.0
      %3172 = vmatmul.mubr.f32.gmra.mrb[0].mxu0 %v2973
      %v3173 = vpop.f32.mrb[0].mxu0
      %v3174 = vadd.f32 0.0, %v3173
      %v3175 = vpop.f32.mrb[0].mxu0
      %3176 = vmatprep.mubr.f32.mxu0 0.0
      %3177 = vmatmul.mubr.f32.gmra.mrb[0].mxu0 %v2976
      %v3178 = vpop.f32.mrb[0].mxu0
      %v3179 = vadd.f32 0.0, %v3178
      %v3180 = vpop.f32.mrb[0].mxu0
      %3181 = vmatprep.mubr.f32.mxu0 0.0
      %3182 = vmatmul.mubr.f32.gmra.mrb[0].mxu0 %v2979
      %v3183 = vpop.f32.mrb[0].mxu0
      %v3184 = vadd.f32 0.0, %v3183
      %v3185 = vpop.f32.mrb[0].mxu0
      %3186 = vmatprep.mubr.f32.mxu0 0.0
      %3187 = vmatmul.mubr.f32.gmra.mrb[0].mxu0 %v2982
      %v3188 = vpop.f32.mrb[0].mxu0
      %v3189 = vadd.f32 0.0, %v3188
      %v3190 = vpop.f32.mrb[0].mxu0
      %3191 = vmatprep.mubr.f32.mxu0 0.0
      %3192 = vmatmul.mubr.f32.gmra.mrb[0].mxu0 %v2985
      %v3193 = vpop.f32.mrb[0].mxu0
      %v3194 = vadd.f32 0.0, %v3193
      %v3195 = vpop.f32.mrb[0].mxu0
      %3196 = vmatprep.mubr.f32.mxu0 0.0
      %3197 = vmatmul.mubr.f32.gmra.mrb[0].mxu0 %v2988
      %v3198 = vpop.f32.mrb[0].mxu0
      %v3199 = vadd.f32 0.0, %v3198
      %v3200 = vpop.f32.mrb[0].mxu0
      %3201 = vmatprep.mubr.f32.mxu0 0.0
      %3202 = vmatmul.mubr.f32.gmra.mrb[0].mxu0 %v2991
      %v3203 = vpop.f32.mrb[0].mxu0
      %v3204 = vadd.f32 0.0, %v3203
      %v3205 = vpop.f32.mrb[0].mxu0
      %3206 = vmatprep.mubr.f32.mxu0 0.0
      %3207 = vmatmul.mubr.f32.gmra.mrb[0].mxu0 %v2994
      %v3208 = vpop.f32.mrb[0].mxu0
      %v3209 = vadd.f32 0.0, %v3208
      %v3210 = vpop.f32.mrb[0].mxu0
      %3211 = vmatprep.mubr.f32.mxu0 0.0
      %3212 = vmatmul.mubr.f32.gmra.mrb[0].mxu0 %v2997
      %v3213 = vpop.f32.mrb[0].mxu0
      %v3214 = vadd.f32 0.0, %v3213
      %v3215 = vpop.f32.mrb[0].mxu0
      %3216 = vmatprep.mubr.f32.mxu0 0.0
      %3217 = vmatmul.mubr.f32.gmra.mrb[0].mxu0 %v3000
      %v3218 = vpop.f32.mrb[0].mxu0
      %v3219 = vadd.f32 0.0, %v3218
      %v3220 = vpop.f32.mrb[0].mxu0
      %3221 = vmatprep.mubr.f32.mxu0 0.0
      %3222 = vmatmul.mubr.f32.gmra.mrb[0].mxu0 %v3003
      %v3223 = vpop.f32.mrb[0].mxu0
      %v3224 = vadd.f32 0.0, %v3223
      %v3225 = vpop.f32.mrb[0].mxu0
      %3226 = vmatprep.mubr.f32.mxu0 0.0
      %3227 = vmatmul.mubr.f32.gmra.mrb[0].mxu0 %v3006
      %v3228 = vpop.f32.mrb[0].mxu0
      %v3229 = vadd.f32 0.0, %v3228
      %v3230 = vpop.f32.mrb[0].mxu0
      %3231 = vmatprep.mubr.f32.mxu0 0.0
      %3232 = vmatmul.mubr.f32.gmra.mrb[0].mxu0 %v3009
      %v3233 = vpop.f32.mrb[0].mxu0
      %v3234 = vadd.f32 0.0, %v3233
      %v3235 = vpop.f32.mrb[0].mxu0
      %3236 = vmatprep.mubr.f32.mxu0 0.0
      %3237 = vmatmul.mubr.f32.gmra.mrb[0].mxu0 %v3012
      %v3238 = vpop.f32.mrb[0].mxu0
      %v3239 = vadd.f32 0.0, %v3238
      %v3240 = vpop.f32.mrb[0].mxu0
      %3241 = vdwg.mxu0
      %v3242 = vadd.f32 %v2852, %v3084
      %v3243 = vadd.f32 %v2853, %v3089
      %v3244 = vadd.f32 %v2854, %v3094
      %v3245 = vadd.f32 %v2855, %v3099
      %v3246 = vadd.f32 %v2856, %v3104
      %v3247 = vadd.f32 %v2857, %v3109
      %v3248 = vadd.f32 %v2858, %v3114
      %v3249 = vadd.f32 %v2859, %v3119
      %v3250 = vadd.f32 %v2860, %v3124
      %v3251 = vadd.f32 %v2861, %v3129
      %v3252 = vadd.f32 %v2862, %v3134
      %v3253 = vadd.f32 %v2863, %v3139
      %v3254 = vadd.f32 %v2864, %v3144
      %v3255 = vadd.f32 %v2865, %v3149
      %v3256 = vadd.f32 %v2866, %v3154
      %v3257 = vadd.f32 %v2867, %v3159
      %v3258 = vadd.f32 %v2868, %v3164
      %v3259 = vadd.f32 %v2869, %v3169
      %v3260 = vadd.f32 %v2870, %v3174
      %v3261 = vadd.f32 %v2871, %v3179
      %v3262 = vadd.f32 %v2872, %v3184
      %v3263 = vadd.f32 %v2873, %v3189
      %v3264 = vadd.f32 %v2874, %v3194
      %v3265 = vadd.f32 %v2875, %v3199
      %v3266 = vadd.f32 %v2876, %v3204
      %v3267 = vadd.f32 %v2877, %v3209
      %v3268 = vadd.f32 %v2878, %v3214
      %v3269 = vadd.f32 %v2879, %v3219
      %v3270 = vadd.f32 %v2880, %v3224
      %v3271 = vadd.f32 %v2881, %v3229
      %v3272 = vadd.f32 %v2882, %v3234
      %v3273 = vadd.f32 %v2883, %v3239
      %v3274 = vld [vmem:[%s2493 + $0x2] sm:$0xff]
      %v3275 = vld [vmem:[%s2493 + $0xa] sm:$0xff]
      %v3276 = vld [vmem:[%s2493 + $0x1a] sm:$0xff]
      %v3277 = vld [vmem:[%s2493 + $0x22] sm:$0xff]
      %v3278 = vld [vmem:[%s2493 + $0x32] sm:$0xff]
      %v3279 = vld [vmem:[%s2493 + $0x3a] sm:$0xff]
      %v3280 = vld [vmem:[%s2493 + $0x4a] sm:$0xff]
      %v3281 = vld [vmem:[%s2493 + $0x52] sm:$0xff]
      %v3282 = vld [vmem:[%s2493 + $0x62] sm:$0xff]
      %v3283 = vld [vmem:[%s2493 + $0x6a] sm:$0xff]
      %v3284 = vld [vmem:[%s2493 + $0x7a] sm:$0xff]
      %v3285 = vld [vmem:[%s2493 + $0x82] sm:$0xff]
      %v3286 = vld [vmem:[%s2493 + $0x92] sm:$0xff]
      %v3287 = vld [vmem:[%s2493 + $0x9a] sm:$0xff]
      %v3288 = vld [vmem:[%s2493 + $0xaa] sm:$0xff]
      %v3289 = vld [vmem:[%s2493 + $0xb2] sm:$0xff]
      %v3290 = vld [vmem:[%s2493 + $0xc2] sm:$0xff]
      %v3291 = vld [vmem:[%s2493 + $0xca] sm:$0xff]
      %v3292 = vld [vmem:[%s2493 + $0xda] sm:$0xff]
      %v3293 = vld [vmem:[%s2493 + $0xe2] sm:$0xff]
      %v3294 = vld [vmem:[%s2493 + $0xf2] sm:$0xff]
      %v3295 = vld [vmem:[%s2493 + $0xfa] sm:$0xff]
      %v3296 = vld [vmem:[%s2493 + $0x10a] sm:$0xff]
      %v3297 = vld [vmem:[%s2493 + $0x112] sm:$0xff]
      %v3298 = vld [vmem:[%s2493 + $0x122] sm:$0xff]
      %v3299 = vld [vmem:[%s2493 + $0x12a] sm:$0xff]
      %v3300 = vld [vmem:[%s2493 + $0x13a] sm:$0xff]
      %v3301 = vld [vmem:[%s2493 + $0x142] sm:$0xff]
      %v3302 = vld [vmem:[%s2493 + $0x152] sm:$0xff]
      %v3303 = vld [vmem:[%s2493 + $0x15a] sm:$0xff]
      %v3304 = vld [vmem:[%s2493 + $0x16a] sm:$0xff]
      %v3305 = vld [vmem:[%s2493 + $0x172] sm:$0xff]
      %s3306 = scalar_lea.vmem %s1, 32
      %v3307 = vld [vmem:[%s3306] sm:$0xf]
      %v3309 = vsel %vm282, %v3274, 0
      %v3312 = vsel %vm282, %v3275, 0
      %v3315 = vsel %vm282, %v3276, 0
      %v3318 = vsel %vm282, %v3277, 0
      %v3321 = vsel %vm282, %v3278, 0
      %v3324 = vsel %vm282, %v3279, 0
      %v3327 = vsel %vm282, %v3280, 0
      %v3330 = vsel %vm282, %v3281, 0
      %v3333 = vsel %vm282, %v3282, 0
      %v3336 = vsel %vm282, %v3283, 0
      %v3339 = vsel %vm282, %v3284, 0
      %v3342 = vsel %vm282, %v3285, 0
      %v3345 = vsel %vm282, %v3286, 0
      %v3348 = vsel %vm282, %v3287, 0
      %v3351 = vsel %vm282, %v3288, 0
      %v3354 = vsel %vm282, %v3289, 0
      %v3357 = vsel %vm282, %v3290, 0
      %v3360 = vsel %vm282, %v3291, 0
      %v3363 = vsel %vm282, %v3292, 0
      %v3366 = vsel %vm282, %v3293, 0
      %v3369 = vsel %vm282, %v3294, 0
      %v3372 = vsel %vm282, %v3295, 0
      %v3375 = vsel %vm282, %v3296, 0
      %v3378 = vsel %vm282, %v3297, 0
      %v3381 = vsel %vm282, %v3298, 0
      %v3384 = vsel %vm282, %v3299, 0
      %v3387 = vsel %vm282, %v3300, 0
      %v3390 = vsel %vm282, %v3301, 0
      %v3393 = vsel %vm282, %v3302, 0
      %v3396 = vsel %vm282, %v3303, 0
      %v3399 = vsel %vm282, %v3304, 0
      %v3402 = vsel %vm282, %v3305, 0
      %v3405 = vsel %vm379, %v3307, 0
      %3407 = vmatprep.subr.mxu0 0.0
      %3408 = vmatpush1.msra.mxu0 %v3405
      %3409 = vmatprep.subr.mxu0 0.0
      %3410 = vmatpush1.msra.mxu0 0.0
      %3411 = vmatprep.subr.mxu0 0.0
      %3412 = vmatpush1.msra.mxu0 0.0
      %3413 = vmatprep.subr.mxu0 0.0
      %3414 = vmatpush1.msra.mxu0 0.0
      %3415 = vmatprep.subr.mxu0 0.0
      %3416 = vmatpush1.msra.mxu0 0.0
      %3417 = vmatprep.subr.mxu0 0.0
      %3418 = vmatpush1.msra.mxu0 0.0
      %3419 = vmatprep.subr.mxu0 0.0
      %3420 = vmatpush1.msra.mxu0 0.0
      %3421 = vmatprep.subr.mxu0 0.0
      %3422 = vmatpush1.msra.mxu0 0.0
      %3423 = vmatprep.subr.mxu0 0.0
      %3424 = vmatpush1.msra.mxu0 0.0
      %3425 = vmatprep.subr.mxu0 0.0
      %3426 = vmatpush1.msra.mxu0 0.0
      %3427 = vmatprep.subr.mxu0 0.0
      %3428 = vmatpush1.msra.mxu0 0.0
      %3429 = vmatprep.subr.mxu0 0.0
      %3430 = vmatpush1.msra.mxu0 0.0
      %3431 = vmatprep.subr.mxu0 0.0
      %3432 = vmatpush1.msra.mxu0 0.0
      %3433 = vmatprep.subr.mxu0 0.0
      %3434 = vmatpush1.msra.mxu0 0.0
      %3435 = vmatprep.subr.mxu0 0.0
      %3436 = vmatpush1.msra.mxu0 0.0
      %3437 = vmatprep.subr.mxu0 0.0
      %3438 = vmatpush1.msra.mxu0 0.0
      %3439 = vmatprep.subr.mxu0 0.0
      %3440 = vmatpush1.msra.mxu0 0.0
      %3441 = vmatprep.subr.mxu0 0.0
      %3442 = vmatpush1.msra.mxu0 0.0
      %3443 = vmatprep.subr.mxu0 0.0
      %3444 = vmatpush1.msra.mxu0 0.0
      %3445 = vmatprep.subr.mxu0 0.0
      %3446 = vmatpush1.msra.mxu0 0.0
      %3447 = vmatprep.subr.mxu0 0.0
      %3448 = vmatpush1.msra.mxu0 0.0
      %3449 = vmatprep.subr.mxu0 0.0
      %3450 = vmatpush1.msra.mxu0 0.0
      %3451 = vmatprep.subr.mxu0 0.0
      %3452 = vmatpush1.msra.mxu0 0.0
      %3453 = vmatprep.subr.mxu0 0.0
      %3454 = vmatpush1.msra.mxu0 0.0
      %3455 = vmatprep.subr.mxu0 0.0
      %3456 = vmatpush1.msra.mxu0 0.0
      %3457 = vmatprep.subr.mxu0 0.0
      %3458 = vmatpush1.msra.mxu0 0.0
      %3459 = vmatprep.subr.mxu0 0.0
      %3460 = vmatpush1.msra.mxu0 0.0
      %3461 = vmatprep.subr.mxu0 0.0
      %3462 = vmatpush1.msra.mxu0 0.0
      %3463 = vmatprep.subr.mxu0 0.0
      %3464 = vmatpush1.msra.mxu0 0.0
      %3465 = vmatprep.subr.mxu0 0.0
      %3466 = vmatpush1.msra.mxu0 0.0
      %3467 = vmatprep.subr.mxu0 0.0
      %3468 = vmatpush1.msra.mxu0 0.0
      %3469 = vmatprep.subr.mxu0 0.0
      %3470 = vmatpush1.msra.mxu0 0.0
      %3471 = vmatprep.mubr.f32.mxu0 0.0
      %3472 = vmatmul.mubr.f32.gmra.mrb[0].mxu0 %v3309
      %v3473 = vpop.f32.mrb[0].mxu0
      %v3474 = vadd.f32 0.0, %v3473
      %v3475 = vpop.f32.mrb[0].mxu0
      %3476 = vmatprep.mubr.f32.mxu0 0.0
      %3477 = vmatmul.mubr.f32.gmra.mrb[0].mxu0 %v3312
      %v3478 = vpop.f32.mrb[0].mxu0
      %v3479 = vadd.f32 0.0, %v3478
      %v3480 = vpop.f32.mrb[0].mxu0
      %3481 = vmatprep.mubr.f32.mxu0 0.0
      %3482 = vmatmul.mubr.f32.gmra.mrb[0].mxu0 %v3315
      %v3483 = vpop.f32.mrb[0].mxu0
      %v3484 = vadd.f32 0.0, %v3483
      %v3485 = vpop.f32.mrb[0].mxu0
      %3486 = vmatprep.mubr.f32.mxu0 0.0
      %3487 = vmatmul.mubr.f32.gmra.mrb[0].mxu0 %v3318
      %v3488 = vpop.f32.mrb[0].mxu0
      %v3489 = vadd.f32 0.0, %v3488
      %v3490 = vpop.f32.mrb[0].mxu0
      %3491 = vmatprep.mubr.f32.mxu0 0.0
      %3492 = vmatmul.mubr.f32.gmra.mrb[0].mxu0 %v3321
      %v3493 = vpop.f32.mrb[0].mxu0
      %v3494 = vadd.f32 0.0, %v3493
      %v3495 = vpop.f32.mrb[0].mxu0
      %3496 = vmatprep.mubr.f32.mxu0 0.0
      %3497 = vmatmul.mubr.f32.gmra.mrb[0].mxu0 %v3324
      %v3498 = vpop.f32.mrb[0].mxu0
      %v3499 = vadd.f32 0.0, %v3498
      %v3500 = vpop.f32.mrb[0].mxu0
      %3501 = vmatprep.mubr.f32.mxu0 0.0
      %3502 = vmatmul.mubr.f32.gmra.mrb[0].mxu0 %v3327
      %v3503 = vpop.f32.mrb[0].mxu0
      %v3504 = vadd.f32 0.0, %v3503
      %v3505 = vpop.f32.mrb[0].mxu0
      %3506 = vmatprep.mubr.f32.mxu0 0.0
      %3507 = vmatmul.mubr.f32.gmra.mrb[0].mxu0 %v3330
      %v3508 = vpop.f32.mrb[0].mxu0
      %v3509 = vadd.f32 0.0, %v3508
      %v3510 = vpop.f32.mrb[0].mxu0
      %3511 = vmatprep.mubr.f32.mxu0 0.0
      %3512 = vmatmul.mubr.f32.gmra.mrb[0].mxu0 %v3333
      %v3513 = vpop.f32.mrb[0].mxu0
      %v3514 = vadd.f32 0.0, %v3513
      %v3515 = vpop.f32.mrb[0].mxu0
      %3516 = vmatprep.mubr.f32.mxu0 0.0
      %3517 = vmatmul.mubr.f32.gmra.mrb[0].mxu0 %v3336
      %v3518 = vpop.f32.mrb[0].mxu0
      %v3519 = vadd.f32 0.0, %v3518
      %v3520 = vpop.f32.mrb[0].mxu0
      %3521 = vmatprep.mubr.f32.mxu0 0.0
      %3522 = vmatmul.mubr.f32.gmra.mrb[0].mxu0 %v3339
      %v3523 = vpop.f32.mrb[0].mxu0
      %v3524 = vadd.f32 0.0, %v3523
      %v3525 = vpop.f32.mrb[0].mxu0
      %3526 = vmatprep.mubr.f32.mxu0 0.0
      %3527 = vmatmul.mubr.f32.gmra.mrb[0].mxu0 %v3342
      %v3528 = vpop.f32.mrb[0].mxu0
      %v3529 = vadd.f32 0.0, %v3528
      %v3530 = vpop.f32.mrb[0].mxu0
      %3531 = vmatprep.mubr.f32.mxu0 0.0
      %3532 = vmatmul.mubr.f32.gmra.mrb[0].mxu0 %v3345
      %v3533 = vpop.f32.mrb[0].mxu0
      %v3534 = vadd.f32 0.0, %v3533
      %v3535 = vpop.f32.mrb[0].mxu0
      %3536 = vmatprep.mubr.f32.mxu0 0.0
      %3537 = vmatmul.mubr.f32.gmra.mrb[0].mxu0 %v3348
      %v3538 = vpop.f32.mrb[0].mxu0
      %v3539 = vadd.f32 0.0, %v3538
      %v3540 = vpop.f32.mrb[0].mxu0
      %3541 = vmatprep.mubr.f32.mxu0 0.0
      %3542 = vmatmul.mubr.f32.gmra.mrb[0].mxu0 %v3351
      %v3543 = vpop.f32.mrb[0].mxu0
      %v3544 = vadd.f32 0.0, %v3543
      %v3545 = vpop.f32.mrb[0].mxu0
      %3546 = vmatprep.mubr.f32.mxu0 0.0
      %3547 = vmatmul.mubr.f32.gmra.mrb[0].mxu0 %v3354
      %v3548 = vpop.f32.mrb[0].mxu0
      %v3549 = vadd.f32 0.0, %v3548
      %v3550 = vpop.f32.mrb[0].mxu0
      %3551 = vmatprep.mubr.f32.mxu0 0.0
      %3552 = vmatmul.mubr.f32.gmra.mrb[0].mxu0 %v3357
      %v3553 = vpop.f32.mrb[0].mxu0
      %v3554 = vadd.f32 0.0, %v3553
      %v3555 = vpop.f32.mrb[0].mxu0
      %3556 = vmatprep.mubr.f32.mxu0 0.0
      %3557 = vmatmul.mubr.f32.gmra.mrb[0].mxu0 %v3360
      %v3558 = vpop.f32.mrb[0].mxu0
      %v3559 = vadd.f32 0.0, %v3558
      %v3560 = vpop.f32.mrb[0].mxu0
      %3561 = vmatprep.mubr.f32.mxu0 0.0
      %3562 = vmatmul.mubr.f32.gmra.mrb[0].mxu0 %v3363
      %v3563 = vpop.f32.mrb[0].mxu0
      %v3564 = vadd.f32 0.0, %v3563
      %v3565 = vpop.f32.mrb[0].mxu0
      %3566 = vmatprep.mubr.f32.mxu0 0.0
      %3567 = vmatmul.mubr.f32.gmra.mrb[0].mxu0 %v3366
      %v3568 = vpop.f32.mrb[0].mxu0
      %v3569 = vadd.f32 0.0, %v3568
      %v3570 = vpop.f32.mrb[0].mxu0
      %3571 = vmatprep.mubr.f32.mxu0 0.0
      %3572 = vmatmul.mubr.f32.gmra.mrb[0].mxu0 %v3369
      %v3573 = vpop.f32.mrb[0].mxu0
      %v3574 = vadd.f32 0.0, %v3573
      %v3575 = vpop.f32.mrb[0].mxu0
      %3576 = vmatprep.mubr.f32.mxu0 0.0
      %3577 = vmatmul.mubr.f32.gmra.mrb[0].mxu0 %v3372
      %v3578 = vpop.f32.mrb[0].mxu0
      %v3579 = vadd.f32 0.0, %v3578
      %v3580 = vpop.f32.mrb[0].mxu0
      %3581 = vmatprep.mubr.f32.mxu0 0.0
      %3582 = vmatmul.mubr.f32.gmra.mrb[0].mxu0 %v3375
      %v3583 = vpop.f32.mrb[0].mxu0
      %v3584 = vadd.f32 0.0, %v3583
      %v3585 = vpop.f32.mrb[0].mxu0
      %3586 = vmatprep.mubr.f32.mxu0 0.0
      %3587 = vmatmul.mubr.f32.gmra.mrb[0].mxu0 %v3378
      %v3588 = vpop.f32.mrb[0].mxu0
      %v3589 = vadd.f32 0.0, %v3588
      %v3590 = vpop.f32.mrb[0].mxu0
      %3591 = vmatprep.mubr.f32.mxu0 0.0
      %3592 = vmatmul.mubr.f32.gmra.mrb[0].mxu0 %v3381
      %v3593 = vpop.f32.mrb[0].mxu0
      %v3594 = vadd.f32 0.0, %v3593
      %v3595 = vpop.f32.mrb[0].mxu0
      %3596 = vmatprep.mubr.f32.mxu0 0.0
      %3597 = vmatmul.mubr.f32.gmra.mrb[0].mxu0 %v3384
      %v3598 = vpop.f32.mrb[0].mxu0
      %v3599 = vadd.f32 0.0, %v3598
      %v3600 = vpop.f32.mrb[0].mxu0
      %3601 = vmatprep.mubr.f32.mxu0 0.0
      %3602 = vmatmul.mubr.f32.gmra.mrb[0].mxu0 %v3387
      %v3603 = vpop.f32.mrb[0].mxu0
      %v3604 = vadd.f32 0.0, %v3603
      %v3605 = vpop.f32.mrb[0].mxu0
      %3606 = vmatprep.mubr.f32.mxu0 0.0
      %3607 = vmatmul.mubr.f32.gmra.mrb[0].mxu0 %v3390
      %v3608 = vpop.f32.mrb[0].mxu0
      %v3609 = vadd.f32 0.0, %v3608
      %v3610 = vpop.f32.mrb[0].mxu0
      %3611 = vmatprep.mubr.f32.mxu0 0.0
      %3612 = vmatmul.mubr.f32.gmra.mrb[0].mxu0 %v3393
      %v3613 = vpop.f32.mrb[0].mxu0
      %v3614 = vadd.f32 0.0, %v3613
      %v3615 = vpop.f32.mrb[0].mxu0
      %3616 = vmatprep.mubr.f32.mxu0 0.0
      %3617 = vmatmul.mubr.f32.gmra.mrb[0].mxu0 %v3396
      %v3618 = vpop.f32.mrb[0].mxu0
      %v3619 = vadd.f32 0.0, %v3618
      %v3620 = vpop.f32.mrb[0].mxu0
      %3621 = vmatprep.mubr.f32.mxu0 0.0
      %3622 = vmatmul.mubr.f32.gmra.mrb[0].mxu0 %v3399
      %v3623 = vpop.f32.mrb[0].mxu0
      %v3624 = vadd.f32 0.0, %v3623
      %v3625 = vpop.f32.mrb[0].mxu0
      %3626 = vmatprep.mubr.f32.mxu0 0.0
      %3627 = vmatmul.mubr.f32.gmra.mrb[0].mxu0 %v3402
      %v3628 = vpop.f32.mrb[0].mxu0
      %v3629 = vadd.f32 0.0, %v3628
      %v3630 = vpop.f32.mrb[0].mxu0
      %3631 = vdwg.mxu0
      %v3632 = vadd.f32 %v3242, %v3474
      %v3633 = vadd.f32 %v3243, %v3479
      %v3634 = vadd.f32 %v3244, %v3484
      %v3635 = vadd.f32 %v3245, %v3489
      %v3636 = vadd.f32 %v3246, %v3494
      %v3637 = vadd.f32 %v3247, %v3499
      %v3638 = vadd.f32 %v3248, %v3504
      %v3639 = vadd.f32 %v3249, %v3509
      %v3640 = vadd.f32 %v3250, %v3514
      %v3641 = vadd.f32 %v3251, %v3519
      %v3642 = vadd.f32 %v3252, %v3524
      %v3643 = vadd.f32 %v3253, %v3529
      %v3644 = vadd.f32 %v3254, %v3534
      %v3645 = vadd.f32 %v3255, %v3539
      %v3646 = vadd.f32 %v3256, %v3544
      %v3647 = vadd.f32 %v3257, %v3549
      %v3648 = vadd.f32 %v3258, %v3554
      %v3649 = vadd.f32 %v3259, %v3559
      %v3650 = vadd.f32 %v3260, %v3564
      %v3651 = vadd.f32 %v3261, %v3569
      %v3652 = vadd.f32 %v3262, %v3574
      %v3653 = vadd.f32 %v3263, %v3579
      %v3654 = vadd.f32 %v3264, %v3584
      %v3655 = vadd.f32 %v3265, %v3589
      %v3656 = vadd.f32 %v3266, %v3594
      %v3657 = vadd.f32 %v3267, %v3599
      %v3658 = vadd.f32 %v3268, %v3604
      %v3659 = vadd.f32 %v3269, %v3609
      %v3660 = vadd.f32 %v3270, %v3614
      %v3661 = vadd.f32 %v3271, %v3619
      %v3662 = vadd.f32 %v3272, %v3624
      %v3663 = vadd.f32 %v3273, %v3629
      %3664 = vxpose.xlu0.b32.start [1/16] %v3632, 128
      %3665 = vxpose.xlu0.b32.cont [2/16] %v3633, 128
      %3666 = vxpose.xlu0.b32.cont [3/16] %v3634, 128
      %3667 = vxpose.xlu0.b32.cont [4/16] %v3635, 128
      %3668 = vxpose.xlu0.b32.cont [5/16] %v3636, 128
      %3669 = vxpose.xlu0.b32.cont [6/16] %v3637, 128
      %3670 = vxpose.xlu0.b32.cont [7/16] %v3638, 128
      %3671 = vxpose.xlu0.b32.cont [8/16] %v3639, 128
      %3672 = vxpose.xlu0.b32.cont [9/16] %v3640, 128
      %3673 = vxpose.xlu0.b32.cont [10/16] %v3641, 128
      %3674 = vxpose.xlu0.b32.cont [11/16] %v3642, 128
      %3675 = vxpose.xlu0.b32.cont [12/16] %v3643, 128
      %3676 = vxpose.xlu0.b32.cont [13/16] %v3644, 128
      %3677 = vxpose.xlu0.b32.cont [14/16] %v3645, 128
      %3678 = vxpose.xlu0.b32.cont [15/16] %v3646, 128
      %3679 = vxpose.xlu0.b32.end [16/16] %v3647, 128
      %v3680 = vpop.trf.xlu0
      %v3681 = vpop.trf.xlu0
      %v3682 = vpop.trf.xlu0
      %v3683 = vpop.trf.xlu0
      %v3684 = vpop.trf.xlu0
      %v3685 = vpop.trf.xlu0
      %v3686 = vpop.trf.xlu0
      %v3687 = vpop.trf.xlu0
      %v3688 = vpop.trf.xlu0
      %v3689 = vpop.trf.xlu0
      %v3690 = vpop.trf.xlu0
      %v3691 = vpop.trf.xlu0
      %v3692 = vpop.trf.xlu0
      %v3693 = vpop.trf.xlu0
      %v3694 = vpop.trf.xlu0
      %v3695 = vpop.trf.xlu0
      %3696 = vxpose.xlu0.b32.start [1/16] %v3648, 128
      %3697 = vxpose.xlu0.b32.cont [2/16] %v3649, 128
      %3698 = vxpose.xlu0.b32.cont [3/16] %v3650, 128
      %3699 = vxpose.xlu0.b32.cont [4/16] %v3651, 128
      %3700 = vxpose.xlu0.b32.cont [5/16] %v3652, 128
      %3701 = vxpose.xlu0.b32.cont [6/16] %v3653, 128
      %3702 = vxpose.xlu0.b32.cont [7/16] %v3654, 128
      %3703 = vxpose.xlu0.b32.cont [8/16] %v3655, 128
      %3704 = vxpose.xlu0.b32.cont [9/16] %v3656, 128
      %3705 = vxpose.xlu0.b32.cont [10/16] %v3657, 128
      %3706 = vxpose.xlu0.b32.cont [11/16] %v3658, 128
      %3707 = vxpose.xlu0.b32.cont [12/16] %v3659, 128
      %3708 = vxpose.xlu0.b32.cont [13/16] %v3660, 128
      %3709 = vxpose.xlu0.b32.cont [14/16] %v3661, 128
      %3710 = vxpose.xlu0.b32.cont [15/16] %v3662, 128
      %3711 = vxpose.xlu0.b32.end [16/16] %v3663, 128
      %v3712 = vpop.trf.xlu0
      %v3713 = vpop.trf.xlu0
      %v3714 = vpop.trf.xlu0
      %v3715 = vpop.trf.xlu0
      %v3716 = vpop.trf.xlu0
      %v3717 = vpop.trf.xlu0
      %v3718 = vpop.trf.xlu0
      %v3719 = vpop.trf.xlu0
      %v3720 = vpop.trf.xlu0
      %v3721 = vpop.trf.xlu0
      %v3722 = vpop.trf.xlu0
      %v3723 = vpop.trf.xlu0
      %v3724 = vpop.trf.xlu0
      %v3725 = vpop.trf.xlu0
      %v3726 = vpop.trf.xlu0
      %v3727 = vpop.trf.xlu0
      %3728 = vst [vmem:[%s208] sm:$0xff] %v3680
      %3729 = vst [vmem:[%s208 + $0x8] sm:$0xff] %v3712
      %vm3730 = vcmask 64512
      %v3731 = vsel %vm3730, %v3632, 0.0
      %v3732 = vsel %vm3730, %v3633, 0.0
      %v3733 = vadd.f32 %v3731, %v3732
      %v3734 = vsel %vm3730, %v3634, 0.0
      %v3735 = vadd.f32 %v3733, %v3734
      %v3736 = vsel %vm3730, %v3635, 0.0
      %v3737 = vadd.f32 %v3735, %v3736
      %v3738 = vsel %vm3730, %v3636, 0.0
      %v3739 = vadd.f32 %v3737, %v3738
      %v3740 = vsel %vm3730, %v3637, 0.0
      %v3741 = vadd.f32 %v3739, %v3740
      %v3742 = vsel %vm3730, %v3638, 0.0
      %v3743 = vadd.f32 %v3741, %v3742
      %v3744 = vsel %vm3730, %v3639, 0.0
      %v3745 = vadd.f32 %v3743, %v3744
      %v3746 = vsel %vm3730, %v3640, 0.0
      %v3747 = vadd.f32 %v3745, %v3746
      %v3748 = vsel %vm3730, %v3641, 0.0
      %v3749 = vadd.f32 %v3747, %v3748
      %v3750 = vsel %vm3730, %v3642, 0.0
      %v3751 = vadd.f32 %v3749, %v3750
      %v3752 = vsel %vm3730, %v3643, 0.0
      %v3753 = vadd.f32 %v3751, %v3752
      %v3754 = vsel %vm3730, %v3644, 0.0
      %v3755 = vadd.f32 %v3753, %v3754
      %v3756 = vsel %vm3730, %v3645, 0.0
      %v3757 = vadd.f32 %v3755, %v3756
      %v3758 = vsel %vm3730, %v3646, 0.0
      %v3759 = vadd.f32 %v3757, %v3758
      %v3760 = vsel %vm3730, %v3647, 0.0
      %v3761 = vadd.f32 %v3759, %v3760
      %v3762 = vsel %vm3730, %v3648, 0.0
      %v3763 = vadd.f32 %v3761, %v3762
      %v3764 = vsel %vm3730, %v3649, 0.0
      %v3765 = vadd.f32 %v3763, %v3764
      %v3766 = vsel %vm3730, %v3650, 0.0
      %v3767 = vadd.f32 %v3765, %v3766
      %v3768 = vsel %vm3730, %v3651, 0.0
      %v3769 = vadd.f32 %v3767, %v3768
      %v3770 = vsel %vm3730, %v3652, 0.0
      %v3771 = vadd.f32 %v3769, %v3770
      %v3772 = vsel %vm3730, %v3653, 0.0
      %v3773 = vadd.f32 %v3771, %v3772
      %v3774 = vsel %vm3730, %v3654, 0.0
      %v3775 = vadd.f32 %v3773, %v3774
      %v3776 = vsel %vm3730, %v3655, 0.0
      %v3777 = vadd.f32 %v3775, %v3776
      %v3778 = vsel %vm3730, %v3656, 0.0
      %v3779 = vadd.f32 %v3777, %v3778
      %v3780 = vsel %vm3730, %v3657, 0.0
      %v3781 = vadd.f32 %v3779, %v3780
      %v3782 = vsel %vm3730, %v3658, 0.0
      %v3783 = vadd.f32 %v3781, %v3782
      %v3784 = vsel %vm3730, %v3659, 0.0
      %v3785 = vadd.f32 %v3783, %v3784
      %v3786 = vsel %vm3730, %v3660, 0.0
      %v3787 = vadd.f32 %v3785, %v3786
      %v3788 = vsel %vm3730, %v3661, 0.0
      %v3789 = vadd.f32 %v3787, %v3788
      %v3790 = vsel %vm3730, %v3662, 0.0
      %v3791 = vadd.f32 %v3789, %v3790
      %v3792 = vsel %vm3730, %v3663, 0.0
      %v3793 = vadd.f32 %v3791, %v3792
      %v3794 = vrot.slane %v3793, 4
      %v3795 = vadd.f32 %v3793, %v3794
      %v3796 = vrot.slane %v3795, 2
      %v3797 = vadd.f32 %v3795, %v3796
      %v3798 = vrot.slane %v3797, 1
      %v3799 = vadd.f32 %v3797, %v3798
      %v3800 = vmul.f32 %v3799, 0.00390625
      %v3801 = vsub.f32 %v3632, %v3800
      %v3802 = vsub.f32 %v3633, %v3800
      %v3803 = vsub.f32 %v3634, %v3800
      %v3804 = vsub.f32 %v3635, %v3800
      %v3805 = vsub.f32 %v3636, %v3800
      %v3806 = vsub.f32 %v3637, %v3800
      %v3807 = vsub.f32 %v3638, %v3800
      %v3808 = vsub.f32 %v3639, %v3800
      %v3809 = vsub.f32 %v3640, %v3800
      %v3810 = vsub.f32 %v3641, %v3800
      %v3811 = vsub.f32 %v3642, %v3800
      %v3812 = vsub.f32 %v3643, %v3800
      %v3813 = vsub.f32 %v3644, %v3800
      %v3814 = vsub.f32 %v3645, %v3800
      %v3815 = vsub.f32 %v3646, %v3800
      %v3816 = vsub.f32 %v3647, %v3800
      %v3817 = vsub.f32 %v3648, %v3800
      %v3818 = vsub.f32 %v3649, %v3800
      %v3819 = vsub.f32 %v3650, %v3800
      %v3820 = vsub.f32 %v3651, %v3800
      %v3821 = vsub.f32 %v3652, %v3800
      %v3822 = vsub.f32 %v3653, %v3800
      %v3823 = vsub.f32 %v3654, %v3800
      %v3824 = vsub.f32 %v3655, %v3800
      %v3825 = vsub.f32 %v3656, %v3800
      %v3826 = vsub.f32 %v3657, %v3800
      %v3827 = vsub.f32 %v3658, %v3800
      %v3828 = vsub.f32 %v3659, %v3800
      %v3829 = vsub.f32 %v3660, %v3800
      %v3830 = vsub.f32 %v3661, %v3800
      %v3831 = vsub.f32 %v3662, %v3800
      %v3832 = vsub.f32 %v3663, %v3800
      %v3833 = vmul.f32 %v3801, %v3801
      %v3834 = vmul.f32 %v3802, %v3802
      %v3835 = vmul.f32 %v3803, %v3803
      %v3836 = vmul.f32 %v3804, %v3804
      %v3837 = vmul.f32 %v3805, %v3805
      %v3838 = vmul.f32 %v3806, %v3806
      %v3839 = vmul.f32 %v3807, %v3807
      %v3840 = vmul.f32 %v3808, %v3808
      %v3841 = vmul.f32 %v3809, %v3809
      %v3842 = vmul.f32 %v3810, %v3810
      %v3843 = vmul.f32 %v3811, %v3811
      %v3844 = vmul.f32 %v3812, %v3812
      %v3845 = vmul.f32 %v3813, %v3813
      %v3846 = vmul.f32 %v3814, %v3814
      %v3847 = vmul.f32 %v3815, %v3815
      %v3848 = vmul.f32 %v3816, %v3816
      %v3849 = vmul.f32 %v3817, %v3817
      %v3850 = vmul.f32 %v3818, %v3818
      %v3851 = vmul.f32 %v3819, %v3819
      %v3852 = vmul.f32 %v3820, %v3820
      %v3853 = vmul.f32 %v3821, %v3821
      %v3854 = vmul.f32 %v3822, %v3822
      %v3855 = vmul.f32 %v3823, %v3823
      %v3856 = vmul.f32 %v3824, %v3824
      %v3857 = vmul.f32 %v3825, %v3825
      %v3858 = vmul.f32 %v3826, %v3826
      %v3859 = vmul.f32 %v3827, %v3827
      %v3860 = vmul.f32 %v3828, %v3828
      %v3861 = vmul.f32 %v3829, %v3829
      %v3862 = vmul.f32 %v3830, %v3830
      %v3863 = vmul.f32 %v3831, %v3831
      %v3864 = vmul.f32 %v3832, %v3832
      %v3865 = vsel %vm3730, %v3833, 0.0
      %v3866 = vsel %vm3730, %v3834, 0.0
      %v3867 = vadd.f32 %v3865, %v3866
      %v3868 = vsel %vm3730, %v3835, 0.0
      %v3869 = vadd.f32 %v3867, %v3868
      %v3870 = vsel %vm3730, %v3836, 0.0
      %v3871 = vadd.f32 %v3869, %v3870
      %v3872 = vsel %vm3730, %v3837, 0.0
      %v3873 = vadd.f32 %v3871, %v3872
      %v3874 = vsel %vm3730, %v3838, 0.0
      %v3875 = vadd.f32 %v3873, %v3874
      %v3876 = vsel %vm3730, %v3839, 0.0
      %v3877 = vadd.f32 %v3875, %v3876
      %v3878 = vsel %vm3730, %v3840, 0.0
      %v3879 = vadd.f32 %v3877, %v3878
      %v3880 = vsel %vm3730, %v3841, 0.0
      %v3881 = vadd.f32 %v3879, %v3880
      %v3882 = vsel %vm3730, %v3842, 0.0
      %v3883 = vadd.f32 %v3881, %v3882
      %v3884 = vsel %vm3730, %v3843, 0.0
      %v3885 = vadd.f32 %v3883, %v3884
      %v3886 = vsel %vm3730, %v3844, 0.0
      %v3887 = vadd.f32 %v3885, %v3886
      %v3888 = vsel %vm3730, %v3845, 0.0
      %v3889 = vadd.f32 %v3887, %v3888
      %v3890 = vsel %vm3730, %v3846, 0.0
      %v3891 = vadd.f32 %v3889, %v3890
      %v3892 = vsel %vm3730, %v3847, 0.0
      %v3893 = vadd.f32 %v3891, %v3892
      %v3894 = vsel %vm3730, %v3848, 0.0
      %v3895 = vadd.f32 %v3893, %v3894
      %v3896 = vsel %vm3730, %v3849, 0.0
      %v3897 = vadd.f32 %v3895, %v3896
      %v3898 = vsel %vm3730, %v3850, 0.0
      %v3899 = vadd.f32 %v3897, %v3898
      %v3900 = vsel %vm3730, %v3851, 0.0
      %v3901 = vadd.f32 %v3899, %v3900
      %v3902 = vsel %vm3730, %v3852, 0.0
      %v3903 = vadd.f32 %v3901, %v3902
      %v3904 = vsel %vm3730, %v3853, 0.0
      %v3905 = vadd.f32 %v3903, %v3904
      %v3906 = vsel %vm3730, %v3854, 0.0
      %v3907 = vadd.f32 %v3905, %v3906
      %v3908 = vsel %vm3730, %v3855, 0.0
      %v3909 = vadd.f32 %v3907, %v3908
      %v3910 = vsel %vm3730, %v3856, 0.0
      %v3911 = vadd.f32 %v3909, %v3910
      %v3912 = vsel %vm3730, %v3857, 0.0
      %v3913 = vadd.f32 %v3911, %v3912
      %v3914 = vsel %vm3730, %v3858, 0.0
      %v3915 = vadd.f32 %v3913, %v3914
      %v3916 = vsel %vm3730, %v3859, 0.0
      %v3917 = vadd.f32 %v3915, %v3916
      %v3918 = vsel %vm3730, %v3860, 0.0
      %v3919 = vadd.f32 %v3917, %v3918
      %v3920 = vsel %vm3730, %v3861, 0.0
      %v3921 = vadd.f32 %v3919, %v3920
      %v3922 = vsel %vm3730, %v3862, 0.0
      %v3923 = vadd.f32 %v3921, %v3922
      %v3924 = vsel %vm3730, %v3863, 0.0
      %v3925 = vadd.f32 %v3923, %v3924
      %v3926 = vsel %vm3730, %v3864, 0.0
      %v3927 = vadd.f32 %v3925, %v3926
      %v3928 = vrot.slane %v3927, 4
      %v3929 = vadd.f32 %v3927, %v3928
      %v3930 = vrot.slane %v3929, 2
      %v3931 = vadd.f32 %v3929, %v3930
      %v3932 = vrot.slane %v3931, 1
      %v3933 = vadd.f32 %v3931, %v3932
      %vm3934 = vcmask 57344
      %3935 = vst.msk [vmem:[%s211] sm:$0x1] %vm3934, %v3800
      %3936 = vst.msk [vmem:[%s214] sm:$0x1] %vm3934, %v3933
      %p3937 = scmp.lt.s32.totalorder %s16, 1
      %s3938 = scalar_select %p3937, %s16, 1
      %s3939 = smul.addr %s3938, 2
      %s3940 = smul.addr %s3939, 8
      %s3941 = scalar_lea.vmem %s2, %s3940
      %p3942 = scmp.lt.s32.totalorder %s16, 1
      %s3943 = scalar_select %p3942, %s16, 1
      %s3944 = scalar_lea.vmem %s3, %s3943
      %p3945 = scmp.lt.s32.totalorder %s16, 1
      %s3946 = scalar_select %p3945, %s16, 1
      %s3947 = scalar_lea.vmem %s4, %s3946
      // Predicated region
      $region29: #{conv_module_forward.2} parent=27 // pred_check
        %p3948 = pneg %p81
      $region30: #{conv_module_forward.2} parent=27 // pred_check_branch
        %3950 = sbr.rel (%p3948) target = $region32
      $region31: #{conv_module_forward.2} parent=27 // pred_region
        _
      $region32: #{conv_module_forward.2} parent=27 // pred_fallthru
        _
      // Predicated region
      $region33: #{conv_module_forward.2} parent=27 // pred_check
        %p3951 = pneg %p107
      $region34: #{conv_module_forward.2} parent=27 // pred_check_branch
        %3953 = sbr.rel (%p3951) target = $region36
      $region35: #{conv_module_forward.2} parent=27 // pred_region
        _
      $region36: #{conv_module_forward.2} parent=27 // pred_fallthru
        _
      // Predicated region
      $region37: #{conv_module_forward.2} parent=27 // pred_check
        %p3954 = pneg %p133
      $region38: #{conv_module_forward.2} parent=27 // pred_check_branch
        %3956 = sbr.rel (%p3954) target = $region40
      $region39: #{conv_module_forward.2} parent=27 // pred_region
        _
      $region40: #{conv_module_forward.2} parent=27 // pred_fallthru
        _
    $region28: #{conv_module_forward.2} parent=5 // pred_fallthru
      _
    %p3957 = scmp.le.s32.totalorder 2, %s11
    // Predicated region
    $region41: #{conv_module_forward.2} parent=5 // pred_check
      %p3958 = pneg %p3957
    $region42: #{conv_module_forward.2} parent=5 // pred_check_branch
      %3960 = sbr.rel (%p3958) target = $region44
    $region43: #{conv_module_forward.2} parent=5 // pred_region
      %s3961 = ssub.s32 %s11, 2
      // Predicated region
      $region45: #{conv_module_forward.2} parent=43 // pred_check
        %p3962 = pneg %p87
      $region46: #{conv_module_forward.2} parent=43 // pred_check_branch
        %3964 = sbr.rel (%p3962) target = $region48
      $region47: #{conv_module_forward.2} parent=43 // pred_region
        %p3965 = scmp.lt.s32.totalorder %s17, 1
        %s3966 = scalar_select %p3965, %s17, 1
        %s3967 = smul.addr %s3966, 2
        %s3968 = smul.addr %s3967, 8
        %s3969 = scalar_lea.vmem %s2, %s3968
      $region48: #{conv_module_forward.2} parent=43 // pred_fallthru
        _
      // Predicated region
      $region49: #{conv_module_forward.2} parent=43 // pred_check
        %p3970 = pneg %p113
      $region50: #{conv_module_forward.2} parent=43 // pred_check_branch
        %3972 = sbr.rel (%p3970) target = $region52
      $region51: #{conv_module_forward.2} parent=43 // pred_region
        %p3973 = scmp.lt.s32.totalorder %s17, 1
        %s3974 = scalar_select %p3973, %s17, 1
        %s3975 = scalar_lea.vmem %s3, %s3974
      $region52: #{conv_module_forward.2} parent=43 // pred_fallthru
        _
      // Predicated region
      $region53: #{conv_module_forward.2} parent=43 // pred_check
        %p3976 = pneg %p139
      $region54: #{conv_module_forward.2} parent=43 // pred_check_branch
        %3978 = sbr.rel (%p3976) target = $region56
      $region55: #{conv_module_forward.2} parent=43 // pred_region
        %p3979 = scmp.lt.s32.totalorder %s17, 1
        %s3980 = scalar_select %p3979, %s17, 1
        %s3981 = scalar_lea.vmem %s4, %s3980
      $region56: #{conv_module_forward.2} parent=43 // pred_fallthru
        _
    $region44: #{conv_module_forward.2} parent=5 // pred_fallthru
      _
  $region6: #{conv_module_forward.2} parent=0 // loop_footer
    %s15 = sadd.s32 1, %s11
  $region7: #{conv_module_forward.2} parent=0 // loop_footer_branch
    %10 = sbr.rel target = $region3
  $region8: #{conv_module_forward.2} parent=0 // loop_exit
    _

</llo_original>
